<compile_context>
chip_gen: v7x
topology: tpu7x:2x2x1
jax: 0.10.0
libtpu: 0.0.40
codegen_flags: <defaults>
</compile_context>

<pallas_src>
import functools

import jax
import jax.numpy as jnp
from jax.experimental import pallas as pl
from jax.experimental.pallas import tpu as pltpu

# bf16 MXU operands (f32 accumulate + f32 epilogue).  jnp.float32 => exact f32 matmuls.
MXU_DTYPE = jnp.bfloat16


# -----------------------------------------------------------------------------
# Fused block kernel:
#   conv3x3(folded) -> +bias -> relu -> conv3x3(folded) -> +bias -> +res -> relu
# -----------------------------------------------------------------------------
def _make_block_kernel(H, W, cin, planes, lpad):
    def kernel(xpad_ref, w1_ref, b1_ref, w2_ref, b2_ref, out_ref, hpad_ref):
        # ---- conv1: nine shifted-window MXU dots (in-VMEM im2col) + bias + ReLU ----
        acc = jnp.zeros((H * W, planes), jnp.float32)
        for k in range(9):
            ky, kx = divmod(k, 3)
            win = xpad_ref[ky:ky + H, kx:kx + W, :].reshape(H * W, cin)
            acc = acc + jnp.dot(win.astype(MXU_DTYPE), w1_ref[k],
                                preferred_element_type=jnp.float32)
        h = jnp.maximum(acc + b1_ref[...], 0.0)

        # ---- zero-padded intermediate kept in a VMEM scratch ----
        # Interior starts at column `lpad` (multiple of 8) so the store is
        # sublane-aligned; the row dim is the un-tiled major dim (any offset is fine).
        hpad_ref[...] = jnp.zeros_like(hpad_ref)
        hpad_ref[1:H + 1, lpad:lpad + W, :] = h.reshape(H, W, planes)

        # ---- conv2 + identity shortcut + ReLU (epilogue in f32) ----
        acc2 = jnp.zeros((H * W, planes), jnp.float32)
        for k in range(9):
            ky, kx = divmod(k, 3)
            win = hpad_ref[ky:ky + H, lpad - 1 + kx:lpad - 1 + kx + W, :]
            win = win.reshape(H * W, planes)
            acc2 = acc2 + jnp.dot(win.astype(MXU_DTYPE), w2_ref[k],
                                  preferred_element_type=jnp.float32)
        res = xpad_ref[1:H + 1, 1:W + 1, :].reshape(H * W, cin)   # identity shortcut
        out = jnp.maximum(acc2 + b2_ref[...] + res, 0.0)
        # NOTE: planes < 128 makes this a masked store, but with the whole block fused
        # into one kernel the store traffic is a negligible fraction of the work.
        out_ref[...] = out.reshape(H, W, planes)

    return kernel


def _block_pallas_call(xpad, w1, b1, w2, b2):
    N, Hp, Wp, cin = xpad.shape
    H, W = Hp - 2, Wp - 2
    planes = w1.shape[-1]
    lpad = 8                     # sublane-aligned left margin of the scratch interior
    pw = lpad + W + 8            # >= 1 guaranteed zero column right of the interior

    kernel = _make_block_kernel(H, W, cin, planes, lpad)
    return pl.pallas_call(
        kernel,
        out_shape=jax.ShapeDtypeStruct((N, H, W, planes), jnp.float32),
        grid=(N,),
        in_specs=[
            pl.BlockSpec((None, Hp, Wp, cin), lambda n: (n, 0, 0, 0)),
            pl.BlockSpec((9, cin, planes), lambda n: (0, 0, 0)),
            pl.BlockSpec((1, planes), lambda n: (0, 0)),
            pl.BlockSpec((9, planes, planes), lambda n: (0, 0, 0)),
            pl.BlockSpec((1, planes), lambda n: (0, 0)),
        ],
        out_specs=pl.BlockSpec((None, H, W, planes), lambda n: (n, 0, 0, 0)),
        scratch_shapes=[pltpu.VMEM((Hp, pw, planes), jnp.float32)],
        compiler_params=pltpu.CompilerParams(dimension_semantics=("parallel",)),
    )(xpad, w1, b1, w2, b2)


# -----------------------------------------------------------------------------
# Plain-JAX glue: BN folding and basis/coeff weight folding (exact, eval-mode BN)
# -----------------------------------------------------------------------------
def _bn_fold(bn, eps=1e-5):
    scale = bn["gamma"] / jnp.sqrt(bn["var"] + eps)
    bias = bn["beta"] - bn["mean"] * scale
    return scale, bias


def _w3x3_to_mat(w):  # torch [Cout, Cin, 3, 3] -> [9*Cin, Cout], (ky, kx, cin)-major rows
    cout, cin = w.shape[0], w.shape[1]
    return jnp.transpose(w, (2, 3, 1, 0)).reshape(9 * cin, cout)


def _fold_conv_chain(w_basis, w_shared, bn_basis, w_coeff, bn_out):
    """Fold  [conv3x3(basis) ++ conv3x3(shared)] -> BN -> conv1x1(coeff) -> BN
    into one effective 3x3 conv:  w_eff [9, Cin, planes], b_eff [planes]."""
    cin = w_basis.shape[1]
    planes = w_coeff.shape[0]
    w_cat = jnp.concatenate([w_basis, w_shared], axis=0)            # [R, Cin, 3, 3]
    a = _w3x3_to_mat(w_cat)                                         # [9*Cin, R]
    s_a, b_a = _bn_fold(bn_basis)                                   # [R]
    c = w_coeff.reshape(planes, -1).T                               # [R, planes]
    s_o, b_o = _bn_fold(bn_out)                                     # [planes]
    w_eff = ((a * s_a[None, :]) @ c) * s_o[None, :]                 # [9*Cin, planes]
    b_eff = (b_a @ c) * s_o + b_o                                   # [planes]
    return w_eff.reshape(9, cin, planes), b_eff


def _fold_params(params, skip):
    w1, b1 = _fold_conv_chain(params["basis_conv1_w"], params["shared_basis_1_w"],
                              params["basis_bn1"], params["coeff_conv1_w"], params["bn1"])
    if skip:
        w2, b2 = _fold_conv_chain(params["basis_conv2_w"], params["shared_basis_2_w"],
                                  params["basis_bn2"], params["coeff_conv2_skip_w"],
                                  params["bn2_skip"])
    else:
        w2, b2 = _fold_conv_chain(params["basis_conv2_w"], params["shared_basis_2_w"],
                                  params["basis_bn2"], params["coeff_conv2_w"],
                                  params["bn2"])
    return (w1.astype(MXU_DTYPE), b1.reshape(1, -1),
            w2.astype(MXU_DTYPE), b2.reshape(1, -1))


@functools.partial(jax.jit, static_argnames=("skip",))
def basic_block_double_shared_forward(params, x_nchw, skip=False):
    """Forward pass of BasicBlock_DoubleShared.  x_nchw: [N, Cin, H, W] (PyTorch layout)."""
    x = jnp.transpose(x_nchw, (0, 2, 3, 1)).astype(jnp.float32)     # NHWC
    _, _, _, cin = x.shape
    planes = params["coeff_conv1_w"].shape[0]
    assert cin == planes, "only the stride=1 identity shortcut is implemented"
    w1, b1, w2, b2 = _fold_params(params, skip)
    xpad = jnp.pad(x, ((0, 0), (1, 1), (1, 1), (0, 0)))
    out_nhwc = _block_pallas_call(xpad, w1, b1, w2, b2)
    return jnp.transpose(out_nhwc, (0, 3, 1, 2))                    # back to NCHW


# -----------------------------------------------------------------------------
# Deterministic parameter init mirroring the module's __init__ (PyTorch Conv2d default)
# -----------------------------------------------------------------------------
def _conv_weight(key, cout, cin, k):
    # PyTorch Conv2d default: kaiming_uniform(a=sqrt(5)) == U(-1/sqrt(fan_in), 1/sqrt(fan_in))
    bound = 1.0 / float(cin * k * k) ** 0.5
    return jax.random.uniform(key, (cout, cin, k, k), jnp.float32, -bound, bound)


def _bn_params(c):
    return dict(gamma=jnp.ones((c,), jnp.float32), beta=jnp.zeros((c,), jnp.float32),
                mean=jnp.zeros((c,), jnp.float32), var=jnp.ones((c,), jnp.float32))


def init_params(key, in_planes, planes, unique_rank, shared_rank_1, shared_rank_2,
                skippable=True):
    ks = jax.random.split(key, 7)
    r1 = unique_rank + shared_rank_1
    r2 = unique_rank + shared_rank_2
    p = {
        "basis_conv1_w": _conv_weight(ks[0], unique_rank, in_planes, 3),
        "shared_basis_1_w": _conv_weight(ks[1], shared_rank_1, in_planes, 3),
        "basis_bn1": _bn_params(r1),
        "coeff_conv1_w": _conv_weight(ks[2], planes, r1, 1),
        "bn1": _bn_params(planes),
        "basis_conv2_w": _conv_weight(ks[3], unique_rank, planes, 3),
        "shared_basis_2_w": _conv_weight(ks[4], shared_rank_2, planes, 3),
        "basis_bn2": _bn_params(r2),
        "coeff_conv2_w": _conv_weight(ks[5], planes, r2, 1),
        "bn2": _bn_params(planes),
    }
    if skippable:
        p["coeff_conv2_skip_w"] = _conv_weight(ks[6], planes, r2, 1)
        p["bn2_skip"] = _bn_params(planes)
    return p


# -----------------------------------------------------------------------------
# Plain-JAX mirror of the fused kernel math (same folded weights / cast points),
# used only as a lightweight in-script self-check.
# -----------------------------------------------------------------------------
def _reference_block(xpad, w1, b1, w2, b2):
    n, hp, wp, cin = xpad.shape
    h_, w_ = hp - 2, wp - 2
    planes = w1.shape[-1]

    def conv3x3(xp, w9, bias):
        c = xp.shape[-1]
        acc = jnp.zeros((n * h_ * w_, w9.shape[-1]), jnp.float32)
        for k in range(9):
            ky, kx = divmod(k, 3)
            win = xp[:, ky:ky + h_, kx:kx + w_, :].reshape(n * h_ * w_, c)
            acc = acc + jnp.dot(win.astype(w9.dtype), w9[k],
                                preferred_element_type=jnp.float32)
        return acc + bias

    h = jnp.maximum(conv3x3(xpad, w1, b1), 0.0).reshape(n, h_, w_, planes)
    hpad = jnp.pad(h, ((0, 0), (1, 1), (1, 1), (0, 0)))
    res = xpad[:, 1:h_ + 1, 1:w_ + 1, :].reshape(n * h_ * w_, cin)
    out = jnp.maximum(conv3x3(hpad, w2, b2) + res, 0.0)
    return out.reshape(n, h_, w_, planes)


# -----------------------------------------------------------------------------
# Main
# -----------------------------------------------------------------------------
if __name__ == "__main__":
    key = jax.random.PRNGKey(0)
    pkey, xkey = jax.random.split(key)

    # Small, module-consistent sizes: in_planes == planes (identity shortcut),
    # total_rank = unique_rank + shared_rank.
    n, planes, h, w = 2, 32, 16, 16
    unique_rank, shared_rank = 8, 24

    params = init_params(pkey, planes, planes, unique_rank, shared_rank, shared_rank)
    x = jax.random.normal(xkey, (n, planes, h, w), dtype=jnp.float32)   # NCHW like PyTorch

    out = basic_block_double_shared_forward(params, x, skip=False)
    jax.block_until_ready(out)
    assert out.shape == (n, planes, h, w) and out.dtype == jnp.float32

    # Self-check against a plain-JAX mirror (same folded weights and cast points, so the
    # only differences are f32 accumulation order -> tight tolerance).
    w1, b1, w2, b2 = _fold_params(params, skip=False)
    x_nhwc = jnp.transpose(x, (0, 2, 3, 1))
    xpad = jnp.pad(x_nhwc, ((0, 0), (1, 1), (1, 1), (0, 0)))
    ref = jnp.transpose(_reference_block(xpad, w1, b1, w2, b2), (0, 3, 1, 2))
    err = float(jnp.max(jnp.abs(out - ref)))
    assert err < 2e-3, f"kernel/reference mismatch: {err}"

    print("KERNEL_OK")
</pallas_src>

<mosaic_0001>
module attributes {stable_mosaic.version = 11 : i64} {
  func.func @kernel(%arg0: i32, %arg1: memref<1x18x18x32xf32, #tpu.memory_space<vmem>>, %arg2: memref<9x32x32xbf16, #tpu.memory_space<vmem>>, %arg3: memref<1x32xf32, #tpu.memory_space<vmem>>, %arg4: memref<9x32x32xbf16, #tpu.memory_space<vmem>>, %arg5: memref<1x32xf32, #tpu.memory_space<vmem>>, %arg6: memref<1x16x16x32xf32, #tpu.memory_space<vmem>>, %arg7: memref<18x32x32xf32, #tpu.memory_space<vmem>>) attributes {dimension_semantics = [#tpu.dimension_semantics<parallel>], iteration_bounds = array<i64: 2>, scalar_prefetch = 0 : i64, scratch_operands = 1 : i64, tpu.core_type = #tpu.core_type<tc>, window_params = [{transform_indices = @transform_0, window_bounds = array<i64: 1, 18, 18, 32>}, {pipeline_mode = #tpu.pipeline_mode<synchronous>, transform_indices = @transform_1, window_bounds = array<i64: 9, 32, 32>}, {pipeline_mode = #tpu.pipeline_mode<synchronous>, transform_indices = @transform_2, window_bounds = array<i64: 1, 32>}, {pipeline_mode = #tpu.pipeline_mode<synchronous>, transform_indices = @transform_3, window_bounds = array<i64: 9, 32, 32>}, {pipeline_mode = #tpu.pipeline_mode<synchronous>, transform_indices = @transform_4, window_bounds = array<i64: 1, 32>}, {transform_indices = @transform_5, window_bounds = array<i64: 1, 16, 16, 32>}]} {
    %cst = arith.constant 0.000000e+00 : f32
    %0 = vector.broadcast %cst : f32 to vector<256x32xf32>
    %c0 = arith.constant 0 : index
    %c0_0 = arith.constant 0 : index
    %c0_1 = arith.constant 0 : index
    %c0_2 = arith.constant 0 : index
    %1 = vector.load %arg1[%c0, %c0_0, %c0_1, %c0_2] : memref<1x18x18x32xf32, #tpu.memory_space<vmem>>, vector<1x16x16x32xf32>
    %2 = vector.shape_cast %1 : vector<1x16x16x32xf32> to vector<16x16x32xf32>
    %3 = vector.shape_cast %2 : vector<16x16x32xf32> to vector<256x32xf32>
    %4 = arith.truncf %3 : vector<256x32xf32> to vector<256x32xbf16>
    %c0_3 = arith.constant 0 : index
    %c0_4 = arith.constant 0 : index
    %c0_5 = arith.constant 0 : index
    %5 = vector.load %arg2[%c0_3, %c0_4, %c0_5] : memref<9x32x32xbf16, #tpu.memory_space<vmem>>, vector<1x32x32xbf16>
    %6 = vector.shape_cast %5 : vector<1x32x32xbf16> to vector<32x32xbf16>
    %cst_6 = arith.constant dense<0.000000e+00> : vector<256x32xf32>
    %7 = tpu.matmul %4, %6, %cst_6 {dimension_numbers = #tpu.dot_dimension_numbers<[1], [0], [0], [1], [0, 0, 1, 1], [], []>} : vector<256x32xbf16>, vector<32x32xbf16>, vector<256x32xf32> -> vector<256x32xf32>
    %8 = arith.addf %0, %7 : vector<256x32xf32>
    %c0_7 = arith.constant 0 : index
    %c0_8 = arith.constant 0 : index
    %c1 = arith.constant 1 : index
    %c0_9 = arith.constant 0 : index
    %9 = vector.load %arg1[%c0_7, %c0_8, %c1, %c0_9] : memref<1x18x18x32xf32, #tpu.memory_space<vmem>>, vector<1x16x16x32xf32>
    %10 = vector.shape_cast %9 : vector<1x16x16x32xf32> to vector<16x16x32xf32>
    %11 = vector.shape_cast %10 : vector<16x16x32xf32> to vector<256x32xf32>
    %12 = arith.truncf %11 : vector<256x32xf32> to vector<256x32xbf16>
    %c1_10 = arith.constant 1 : index
    %c0_11 = arith.constant 0 : index
    %c0_12 = arith.constant 0 : index
    %13 = vector.load %arg2[%c1_10, %c0_11, %c0_12] : memref<9x32x32xbf16, #tpu.memory_space<vmem>>, vector<1x32x32xbf16>
    %14 = vector.shape_cast %13 : vector<1x32x32xbf16> to vector<32x32xbf16>
    %cst_13 = arith.constant dense<0.000000e+00> : vector<256x32xf32>
    %15 = tpu.matmul %12, %14, %cst_13 {dimension_numbers = #tpu.dot_dimension_numbers<[1], [0], [0], [1], [0, 0, 1, 1], [], []>} : vector<256x32xbf16>, vector<32x32xbf16>, vector<256x32xf32> -> vector<256x32xf32>
    %16 = arith.addf %8, %15 : vector<256x32xf32>
    %c0_14 = arith.constant 0 : index
    %c0_15 = arith.constant 0 : index
    %c2 = arith.constant 2 : index
    %c0_16 = arith.constant 0 : index
    %17 = vector.load %arg1[%c0_14, %c0_15, %c2, %c0_16] : memref<1x18x18x32xf32, #tpu.memory_space<vmem>>, vector<1x16x16x32xf32>
    %18 = vector.shape_cast %17 : vector<1x16x16x32xf32> to vector<16x16x32xf32>
    %19 = vector.shape_cast %18 : vector<16x16x32xf32> to vector<256x32xf32>
    %20 = arith.truncf %19 : vector<256x32xf32> to vector<256x32xbf16>
    %c2_17 = arith.constant 2 : index
    %c0_18 = arith.constant 0 : index
    %c0_19 = arith.constant 0 : index
    %21 = vector.load %arg2[%c2_17, %c0_18, %c0_19] : memref<9x32x32xbf16, #tpu.memory_space<vmem>>, vector<1x32x32xbf16>
    %22 = vector.shape_cast %21 : vector<1x32x32xbf16> to vector<32x32xbf16>
    %cst_20 = arith.constant dense<0.000000e+00> : vector<256x32xf32>
    %23 = tpu.matmul %20, %22, %cst_20 {dimension_numbers = #tpu.dot_dimension_numbers<[1], [0], [0], [1], [0, 0, 1, 1], [], []>} : vector<256x32xbf16>, vector<32x32xbf16>, vector<256x32xf32> -> vector<256x32xf32>
    %24 = arith.addf %16, %23 : vector<256x32xf32>
    %c0_21 = arith.constant 0 : index
    %c1_22 = arith.constant 1 : index
    %c0_23 = arith.constant 0 : index
    %c0_24 = arith.constant 0 : index
    %25 = vector.load %arg1[%c0_21, %c1_22, %c0_23, %c0_24] : memref<1x18x18x32xf32, #tpu.memory_space<vmem>>, vector<1x16x16x32xf32>
    %26 = vector.shape_cast %25 : vector<1x16x16x32xf32> to vector<16x16x32xf32>
    %27 = vector.shape_cast %26 : vector<16x16x32xf32> to vector<256x32xf32>
    %28 = arith.truncf %27 : vector<256x32xf32> to vector<256x32xbf16>
    %c3 = arith.constant 3 : index
    %c0_25 = arith.constant 0 : index
    %c0_26 = arith.constant 0 : index
    %29 = vector.load %arg2[%c3, %c0_25, %c0_26] : memref<9x32x32xbf16, #tpu.memory_space<vmem>>, vector<1x32x32xbf16>
    %30 = vector.shape_cast %29 : vector<1x32x32xbf16> to vector<32x32xbf16>
    %cst_27 = arith.constant dense<0.000000e+00> : vector<256x32xf32>
    %31 = tpu.matmul %28, %30, %cst_27 {dimension_numbers = #tpu.dot_dimension_numbers<[1], [0], [0], [1], [0, 0, 1, 1], [], []>} : vector<256x32xbf16>, vector<32x32xbf16>, vector<256x32xf32> -> vector<256x32xf32>
    %32 = arith.addf %24, %31 : vector<256x32xf32>
    %c0_28 = arith.constant 0 : index
    %c1_29 = arith.constant 1 : index
    %c1_30 = arith.constant 1 : index
    %c0_31 = arith.constant 0 : index
    %33 = vector.load %arg1[%c0_28, %c1_29, %c1_30, %c0_31] : memref<1x18x18x32xf32, #tpu.memory_space<vmem>>, vector<1x16x16x32xf32>
    %34 = vector.shape_cast %33 : vector<1x16x16x32xf32> to vector<16x16x32xf32>
    %35 = vector.shape_cast %34 : vector<16x16x32xf32> to vector<256x32xf32>
    %36 = arith.truncf %35 : vector<256x32xf32> to vector<256x32xbf16>
    %c4 = arith.constant 4 : index
    %c0_32 = arith.constant 0 : index
    %c0_33 = arith.constant 0 : index
    %37 = vector.load %arg2[%c4, %c0_32, %c0_33] : memref<9x32x32xbf16, #tpu.memory_space<vmem>>, vector<1x32x32xbf16>
    %38 = vector.shape_cast %37 : vector<1x32x32xbf16> to vector<32x32xbf16>
    %cst_34 = arith.constant dense<0.000000e+00> : vector<256x32xf32>
    %39 = tpu.matmul %36, %38, %cst_34 {dimension_numbers = #tpu.dot_dimension_numbers<[1], [0], [0], [1], [0, 0, 1, 1], [], []>} : vector<256x32xbf16>, vector<32x32xbf16>, vector<256x32xf32> -> vector<256x32xf32>
    %40 = arith.addf %32, %39 : vector<256x32xf32>
    %c0_35 = arith.constant 0 : index
    %c1_36 = arith.constant 1 : index
    %c2_37 = arith.constant 2 : index
    %c0_38 = arith.constant 0 : index
    %41 = vector.load %arg1[%c0_35, %c1_36, %c2_37, %c0_38] : memref<1x18x18x32xf32, #tpu.memory_space<vmem>>, vector<1x16x16x32xf32>
    %42 = vector.shape_cast %41 : vector<1x16x16x32xf32> to vector<16x16x32xf32>
    %43 = vector.shape_cast %42 : vector<16x16x32xf32> to vector<256x32xf32>
    %44 = arith.truncf %43 : vector<256x32xf32> to vector<256x32xbf16>
    %c5 = arith.constant 5 : index
    %c0_39 = arith.constant 0 : index
    %c0_40 = arith.constant 0 : index
    %45 = vector.load %arg2[%c5, %c0_39, %c0_40] : memref<9x32x32xbf16, #tpu.memory_space<vmem>>, vector<1x32x32xbf16>
    %46 = vector.shape_cast %45 : vector<1x32x32xbf16> to vector<32x32xbf16>
    %cst_41 = arith.constant dense<0.000000e+00> : vector<256x32xf32>
    %47 = tpu.matmul %44, %46, %cst_41 {dimension_numbers = #tpu.dot_dimension_numbers<[1], [0], [0], [1], [0, 0, 1, 1], [], []>} : vector<256x32xbf16>, vector<32x32xbf16>, vector<256x32xf32> -> vector<256x32xf32>
    %48 = arith.addf %40, %47 : vector<256x32xf32>
    %c0_42 = arith.constant 0 : index
    %c2_43 = arith.constant 2 : index
    %c0_44 = arith.constant 0 : index
    %c0_45 = arith.constant 0 : index
    %49 = vector.load %arg1[%c0_42, %c2_43, %c0_44, %c0_45] : memref<1x18x18x32xf32, #tpu.memory_space<vmem>>, vector<1x16x16x32xf32>
    %50 = vector.shape_cast %49 : vector<1x16x16x32xf32> to vector<16x16x32xf32>
    %51 = vector.shape_cast %50 : vector<16x16x32xf32> to vector<256x32xf32>
    %52 = arith.truncf %51 : vector<256x32xf32> to vector<256x32xbf16>
    %c6 = arith.constant 6 : index
    %c0_46 = arith.constant 0 : index
    %c0_47 = arith.constant 0 : index
    %53 = vector.load %arg2[%c6, %c0_46, %c0_47] : memref<9x32x32xbf16, #tpu.memory_space<vmem>>, vector<1x32x32xbf16>
    %54 = vector.shape_cast %53 : vector<1x32x32xbf16> to vector<32x32xbf16>
    %cst_48 = arith.constant dense<0.000000e+00> : vector<256x32xf32>
    %55 = tpu.matmul %52, %54, %cst_48 {dimension_numbers = #tpu.dot_dimension_numbers<[1], [0], [0], [1], [0, 0, 1, 1], [], []>} : vector<256x32xbf16>, vector<32x32xbf16>, vector<256x32xf32> -> vector<256x32xf32>
    %56 = arith.addf %48, %55 : vector<256x32xf32>
    %c0_49 = arith.constant 0 : index
    %c2_50 = arith.constant 2 : index
    %c1_51 = arith.constant 1 : index
    %c0_52 = arith.constant 0 : index
    %57 = vector.load %arg1[%c0_49, %c2_50, %c1_51, %c0_52] : memref<1x18x18x32xf32, #tpu.memory_space<vmem>>, vector<1x16x16x32xf32>
    %58 = vector.shape_cast %57 : vector<1x16x16x32xf32> to vector<16x16x32xf32>
    %59 = vector.shape_cast %58 : vector<16x16x32xf32> to vector<256x32xf32>
    %60 = arith.truncf %59 : vector<256x32xf32> to vector<256x32xbf16>
    %c7 = arith.constant 7 : index
    %c0_53 = arith.constant 0 : index
    %c0_54 = arith.constant 0 : index
    %61 = vector.load %arg2[%c7, %c0_53, %c0_54] : memref<9x32x32xbf16, #tpu.memory_space<vmem>>, vector<1x32x32xbf16>
    %62 = vector.shape_cast %61 : vector<1x32x32xbf16> to vector<32x32xbf16>
    %cst_55 = arith.constant dense<0.000000e+00> : vector<256x32xf32>
    %63 = tpu.matmul %60, %62, %cst_55 {dimension_numbers = #tpu.dot_dimension_numbers<[1], [0], [0], [1], [0, 0, 1, 1], [], []>} : vector<256x32xbf16>, vector<32x32xbf16>, vector<256x32xf32> -> vector<256x32xf32>
    %64 = arith.addf %56, %63 : vector<256x32xf32>
    %c0_56 = arith.constant 0 : index
    %c2_57 = arith.constant 2 : index
    %c2_58 = arith.constant 2 : index
    %c0_59 = arith.constant 0 : index
    %65 = vector.load %arg1[%c0_56, %c2_57, %c2_58, %c0_59] : memref<1x18x18x32xf32, #tpu.memory_space<vmem>>, vector<1x16x16x32xf32>
    %66 = vector.shape_cast %65 : vector<1x16x16x32xf32> to vector<16x16x32xf32>
    %67 = vector.shape_cast %66 : vector<16x16x32xf32> to vector<256x32xf32>
    %68 = arith.truncf %67 : vector<256x32xf32> to vector<256x32xbf16>
    %c8 = arith.constant 8 : index
    %c0_60 = arith.constant 0 : index
    %c0_61 = arith.constant 0 : index
    %69 = vector.load %arg2[%c8, %c0_60, %c0_61] : memref<9x32x32xbf16, #tpu.memory_space<vmem>>, vector<1x32x32xbf16>
    %70 = vector.shape_cast %69 : vector<1x32x32xbf16> to vector<32x32xbf16>
    %cst_62 = arith.constant dense<0.000000e+00> : vector<256x32xf32>
    %71 = tpu.matmul %68, %70, %cst_62 {dimension_numbers = #tpu.dot_dimension_numbers<[1], [0], [0], [1], [0, 0, 1, 1], [], []>} : vector<256x32xbf16>, vector<32x32xbf16>, vector<256x32xf32> -> vector<256x32xf32>
    %72 = arith.addf %64, %71 : vector<256x32xf32>
    %c0_63 = arith.constant 0 : index
    %c0_64 = arith.constant 0 : index
    %73 = vector.load %arg3[%c0_63, %c0_64] : memref<1x32xf32, #tpu.memory_space<vmem>>, vector<1x32xf32>
    %74 = vector.broadcast %73 : vector<1x32xf32> to vector<256x32xf32>
    %75 = arith.addf %72, %74 : vector<256x32xf32>
    %cst_65 = arith.constant 0.000000e+00 : f32
    %76 = vector.broadcast %cst_65 : f32 to vector<256x32xf32>
    %77 = arith.maximumf %75, %76 : vector<256x32xf32>
    %cst_66 = arith.constant 0.000000e+00 : f32
    %78 = vector.broadcast %cst_66 : f32 to vector<18x32x32xf32>
    %c0_67 = arith.constant 0 : index
    %c0_68 = arith.constant 0 : index
    %c0_69 = arith.constant 0 : index
    %79 = vector.load %arg7[%c0_67, %c0_68, %c0_69] : memref<18x32x32xf32, #tpu.memory_space<vmem>>, vector<18x32x32xf32>
    tpu.vector_store %arg7[%c0_67, %c0_68, %c0_69], %78 {strides = array<i32>} : memref<18x32x32xf32, #tpu.memory_space<vmem>>, vector<18x32x32xf32>,
    %80 = vector.shape_cast %77 : vector<256x32xf32> to vector<16x16x32xf32>
    %c1_70 = arith.constant 1 : index
    %c8_71 = arith.constant 8 : index
    %c0_72 = arith.constant 0 : index
    %81 = vector.load %arg7[%c1_70, %c8_71, %c0_72] : memref<18x32x32xf32, #tpu.memory_space<vmem>>, vector<16x16x32xf32>
    tpu.vector_store %arg7[%c1_70, %c8_71, %c0_72], %80 {strides = array<i32>} : memref<18x32x32xf32, #tpu.memory_space<vmem>>, vector<16x16x32xf32>,
    %cst_73 = arith.constant 0.000000e+00 : f32
    %82 = vector.broadcast %cst_73 : f32 to vector<256x32xf32>
    %c0_74 = arith.constant 0 : index
    %c7_75 = arith.constant 7 : index
    %c0_76 = arith.constant 0 : index
    %83 = vector.load %arg7[%c0_74, %c7_75, %c0_76] : memref<18x32x32xf32, #tpu.memory_space<vmem>>, vector<16x16x32xf32>
    %84 = vector.shape_cast %83 : vector<16x16x32xf32> to vector<256x32xf32>
    %85 = arith.truncf %84 : vector<256x32xf32> to vector<256x32xbf16>
    %c0_77 = arith.constant 0 : index
    %c0_78 = arith.constant 0 : index
    %c0_79 = arith.constant 0 : index
    %86 = vector.load %arg4[%c0_77, %c0_78, %c0_79] : memref<9x32x32xbf16, #tpu.memory_space<vmem>>, vector<1x32x32xbf16>
    %87 = vector.shape_cast %86 : vector<1x32x32xbf16> to vector<32x32xbf16>
    %cst_80 = arith.constant dense<0.000000e+00> : vector<256x32xf32>
    %88 = tpu.matmul %85, %87, %cst_80 {dimension_numbers = #tpu.dot_dimension_numbers<[1], [0], [0], [1], [0, 0, 1, 1], [], []>} : vector<256x32xbf16>, vector<32x32xbf16>, vector<256x32xf32> -> vector<256x32xf32>
    %89 = arith.addf %82, %88 : vector<256x32xf32>
    %c0_81 = arith.constant 0 : index
    %c8_82 = arith.constant 8 : index
    %c0_83 = arith.constant 0 : index
    %90 = vector.load %arg7[%c0_81, %c8_82, %c0_83] : memref<18x32x32xf32, #tpu.memory_space<vmem>>, vector<16x16x32xf32>
    %91 = vector.shape_cast %90 : vector<16x16x32xf32> to vector<256x32xf32>
    %92 = arith.truncf %91 : vector<256x32xf32> to vector<256x32xbf16>
    %c1_84 = arith.constant 1 : index
    %c0_85 = arith.constant 0 : index
    %c0_86 = arith.constant 0 : index
    %93 = vector.load %arg4[%c1_84, %c0_85, %c0_86] : memref<9x32x32xbf16, #tpu.memory_space<vmem>>, vector<1x32x32xbf16>
    %94 = vector.shape_cast %93 : vector<1x32x32xbf16> to vector<32x32xbf16>
    %cst_87 = arith.constant dense<0.000000e+00> : vector<256x32xf32>
    %95 = tpu.matmul %92, %94, %cst_87 {dimension_numbers = #tpu.dot_dimension_numbers<[1], [0], [0], [1], [0, 0, 1, 1], [], []>} : vector<256x32xbf16>, vector<32x32xbf16>, vector<256x32xf32> -> vector<256x32xf32>
    %96 = arith.addf %89, %95 : vector<256x32xf32>
    %c0_88 = arith.constant 0 : index
    %c9 = arith.constant 9 : index
    %c0_89 = arith.constant 0 : index
    %97 = vector.load %arg7[%c0_88, %c9, %c0_89] : memref<18x32x32xf32, #tpu.memory_space<vmem>>, vector<16x16x32xf32>
    %98 = vector.shape_cast %97 : vector<16x16x32xf32> to vector<256x32xf32>
    %99 = arith.truncf %98 : vector<256x32xf32> to vector<256x32xbf16>
    %c2_90 = arith.constant 2 : index
    %c0_91 = arith.constant 0 : index
    %c0_92 = arith.constant 0 : index
    %100 = vector.load %arg4[%c2_90, %c0_91, %c0_92] : memref<9x32x32xbf16, #tpu.memory_space<vmem>>, vector<1x32x32xbf16>
    %101 = vector.shape_cast %100 : vector<1x32x32xbf16> to vector<32x32xbf16>
    %cst_93 = arith.constant dense<0.000000e+00> : vector<256x32xf32>
    %102 = tpu.matmul %99, %101, %cst_93 {dimension_numbers = #tpu.dot_dimension_numbers<[1], [0], [0], [1], [0, 0, 1, 1], [], []>} : vector<256x32xbf16>, vector<32x32xbf16>, vector<256x32xf32> -> vector<256x32xf32>
    %103 = arith.addf %96, %102 : vector<256x32xf32>
    %c1_94 = arith.constant 1 : index
    %c7_95 = arith.constant 7 : index
    %c0_96 = arith.constant 0 : index
    %104 = vector.load %arg7[%c1_94, %c7_95, %c0_96] : memref<18x32x32xf32, #tpu.memory_space<vmem>>, vector<16x16x32xf32>
    %105 = vector.shape_cast %104 : vector<16x16x32xf32> to vector<256x32xf32>
    %106 = arith.truncf %105 : vector<256x32xf32> to vector<256x32xbf16>
    %c3_97 = arith.constant 3 : index
    %c0_98 = arith.constant 0 : index
    %c0_99 = arith.constant 0 : index
    %107 = vector.load %arg4[%c3_97, %c0_98, %c0_99] : memref<9x32x32xbf16, #tpu.memory_space<vmem>>, vector<1x32x32xbf16>
    %108 = vector.shape_cast %107 : vector<1x32x32xbf16> to vector<32x32xbf16>
    %cst_100 = arith.constant dense<0.000000e+00> : vector<256x32xf32>
    %109 = tpu.matmul %106, %108, %cst_100 {dimension_numbers = #tpu.dot_dimension_numbers<[1], [0], [0], [1], [0, 0, 1, 1], [], []>} : vector<256x32xbf16>, vector<32x32xbf16>, vector<256x32xf32> -> vector<256x32xf32>
    %110 = arith.addf %103, %109 : vector<256x32xf32>
    %c1_101 = arith.constant 1 : index
    %c8_102 = arith.constant 8 : index
    %c0_103 = arith.constant 0 : index
    %111 = vector.load %arg7[%c1_101, %c8_102, %c0_103] : memref<18x32x32xf32, #tpu.memory_space<vmem>>, vector<16x16x32xf32>
    %112 = vector.shape_cast %111 : vector<16x16x32xf32> to vector<256x32xf32>
    %113 = arith.truncf %112 : vector<256x32xf32> to vector<256x32xbf16>
    %c4_104 = arith.constant 4 : index
    %c0_105 = arith.constant 0 : index
    %c0_106 = arith.constant 0 : index
    %114 = vector.load %arg4[%c4_104, %c0_105, %c0_106] : memref<9x32x32xbf16, #tpu.memory_space<vmem>>, vector<1x32x32xbf16>
    %115 = vector.shape_cast %114 : vector<1x32x32xbf16> to vector<32x32xbf16>
    %cst_107 = arith.constant dense<0.000000e+00> : vector<256x32xf32>
    %116 = tpu.matmul %113, %115, %cst_107 {dimension_numbers = #tpu.dot_dimension_numbers<[1], [0], [0], [1], [0, 0, 1, 1], [], []>} : vector<256x32xbf16>, vector<32x32xbf16>, vector<256x32xf32> -> vector<256x32xf32>
    %117 = arith.addf %110, %116 : vector<256x32xf32>
    %c1_108 = arith.constant 1 : index
    %c9_109 = arith.constant 9 : index
    %c0_110 = arith.constant 0 : index
    %118 = vector.load %arg7[%c1_108, %c9_109, %c0_110] : memref<18x32x32xf32, #tpu.memory_space<vmem>>, vector<16x16x32xf32>
    %119 = vector.shape_cast %118 : vector<16x16x32xf32> to vector<256x32xf32>
    %120 = arith.truncf %119 : vector<256x32xf32> to vector<256x32xbf16>
    %c5_111 = arith.constant 5 : index
    %c0_112 = arith.constant 0 : index
    %c0_113 = arith.constant 0 : index
    %121 = vector.load %arg4[%c5_111, %c0_112, %c0_113] : memref<9x32x32xbf16, #tpu.memory_space<vmem>>, vector<1x32x32xbf16>
    %122 = vector.shape_cast %121 : vector<1x32x32xbf16> to vector<32x32xbf16>
    %cst_114 = arith.constant dense<0.000000e+00> : vector<256x32xf32>
    %123 = tpu.matmul %120, %122, %cst_114 {dimension_numbers = #tpu.dot_dimension_numbers<[1], [0], [0], [1], [0, 0, 1, 1], [], []>} : vector<256x32xbf16>, vector<32x32xbf16>, vector<256x32xf32> -> vector<256x32xf32>
    %124 = arith.addf %117, %123 : vector<256x32xf32>
    %c2_115 = arith.constant 2 : index
    %c7_116 = arith.constant 7 : index
    %c0_117 = arith.constant 0 : index
    %125 = vector.load %arg7[%c2_115, %c7_116, %c0_117] : memref<18x32x32xf32, #tpu.memory_space<vmem>>, vector<16x16x32xf32>
    %126 = vector.shape_cast %125 : vector<16x16x32xf32> to vector<256x32xf32>
    %127 = arith.truncf %126 : vector<256x32xf32> to vector<256x32xbf16>
    %c6_118 = arith.constant 6 : index
    %c0_119 = arith.constant 0 : index
    %c0_120 = arith.constant 0 : index
    %128 = vector.load %arg4[%c6_118, %c0_119, %c0_120] : memref<9x32x32xbf16, #tpu.memory_space<vmem>>, vector<1x32x32xbf16>
    %129 = vector.shape_cast %128 : vector<1x32x32xbf16> to vector<32x32xbf16>
    %cst_121 = arith.constant dense<0.000000e+00> : vector<256x32xf32>
    %130 = tpu.matmul %127, %129, %cst_121 {dimension_numbers = #tpu.dot_dimension_numbers<[1], [0], [0], [1], [0, 0, 1, 1], [], []>} : vector<256x32xbf16>, vector<32x32xbf16>, vector<256x32xf32> -> vector<256x32xf32>
    %131 = arith.addf %124, %130 : vector<256x32xf32>
    %c2_122 = arith.constant 2 : index
    %c8_123 = arith.constant 8 : index
    %c0_124 = arith.constant 0 : index
    %132 = vector.load %arg7[%c2_122, %c8_123, %c0_124] : memref<18x32x32xf32, #tpu.memory_space<vmem>>, vector<16x16x32xf32>
    %133 = vector.shape_cast %132 : vector<16x16x32xf32> to vector<256x32xf32>
    %134 = arith.truncf %133 : vector<256x32xf32> to vector<256x32xbf16>
    %c7_125 = arith.constant 7 : index
    %c0_126 = arith.constant 0 : index
    %c0_127 = arith.constant 0 : index
    %135 = vector.load %arg4[%c7_125, %c0_126, %c0_127] : memref<9x32x32xbf16, #tpu.memory_space<vmem>>, vector<1x32x32xbf16>
    %136 = vector.shape_cast %135 : vector<1x32x32xbf16> to vector<32x32xbf16>
    %cst_128 = arith.constant dense<0.000000e+00> : vector<256x32xf32>
    %137 = tpu.matmul %134, %136, %cst_128 {dimension_numbers = #tpu.dot_dimension_numbers<[1], [0], [0], [1], [0, 0, 1, 1], [], []>} : vector<256x32xbf16>, vector<32x32xbf16>, vector<256x32xf32> -> vector<256x32xf32>
    %138 = arith.addf %131, %137 : vector<256x32xf32>
    %c2_129 = arith.constant 2 : index
    %c9_130 = arith.constant 9 : index
    %c0_131 = arith.constant 0 : index
    %139 = vector.load %arg7[%c2_129, %c9_130, %c0_131] : memref<18x32x32xf32, #tpu.memory_space<vmem>>, vector<16x16x32xf32>
    %140 = vector.shape_cast %139 : vector<16x16x32xf32> to vector<256x32xf32>
    %141 = arith.truncf %140 : vector<256x32xf32> to vector<256x32xbf16>
    %c8_132 = arith.constant 8 : index
    %c0_133 = arith.constant 0 : index
    %c0_134 = arith.constant 0 : index
    %142 = vector.load %arg4[%c8_132, %c0_133, %c0_134] : memref<9x32x32xbf16, #tpu.memory_space<vmem>>, vector<1x32x32xbf16>
    %143 = vector.shape_cast %142 : vector<1x32x32xbf16> to vector<32x32xbf16>
    %cst_135 = arith.constant dense<0.000000e+00> : vector<256x32xf32>
    %144 = tpu.matmul %141, %143, %cst_135 {dimension_numbers = #tpu.dot_dimension_numbers<[1], [0], [0], [1], [0, 0, 1, 1], [], []>} : vector<256x32xbf16>, vector<32x32xbf16>, vector<256x32xf32> -> vector<256x32xf32>
    %145 = arith.addf %138, %144 : vector<256x32xf32>
    %c0_136 = arith.constant 0 : index
    %c1_137 = arith.constant 1 : index
    %c1_138 = arith.constant 1 : index
    %c0_139 = arith.constant 0 : index
    %146 = vector.load %arg1[%c0_136, %c1_137, %c1_138, %c0_139] : memref<1x18x18x32xf32, #tpu.memory_space<vmem>>, vector<1x16x16x32xf32>
    %147 = vector.shape_cast %146 : vector<1x16x16x32xf32> to vector<16x16x32xf32>
    %148 = vector.shape_cast %147 : vector<16x16x32xf32> to vector<256x32xf32>
    %c0_140 = arith.constant 0 : index
    %c0_141 = arith.constant 0 : index
    %149 = vector.load %arg5[%c0_140, %c0_141] : memref<1x32xf32, #tpu.memory_space<vmem>>, vector<1x32xf32>
    %150 = vector.broadcast %149 : vector<1x32xf32> to vector<256x32xf32>
    %151 = arith.addf %145, %150 : vector<256x32xf32>
    %152 = arith.addf %151, %148 : vector<256x32xf32>
    %cst_142 = arith.constant 0.000000e+00 : f32
    %153 = vector.broadcast %cst_142 : f32 to vector<256x32xf32>
    %154 = arith.maximumf %152, %153 : vector<256x32xf32>
    %155 = vector.shape_cast %154 : vector<256x32xf32> to vector<16x16x32xf32>
    %c0_143 = arith.constant 0 : index
    %c0_144 = arith.constant 0 : index
    %c0_145 = arith.constant 0 : index
    %c0_146 = arith.constant 0 : index
    %156 = vector.load %arg6[%c0_143, %c0_144, %c0_145, %c0_146] : memref<1x16x16x32xf32, #tpu.memory_space<vmem>>, vector<1x16x16x32xf32>
    %157 = vector.shape_cast %156 : vector<1x16x16x32xf32> to vector<16x16x32xf32>
    %158 = vector.shape_cast %155 : vector<16x16x32xf32> to vector<1x16x16x32xf32>
    tpu.vector_store %arg6[%c0_143, %c0_144, %c0_145, %c0_146], %158 {strides = array<i32>} : memref<1x16x16x32xf32, #tpu.memory_space<vmem>>, vector<1x16x16x32xf32>,
    return
  }
  func.func @transform_0(%arg0: i32) -> (i32, i32, i32, i32) {
    %c0_i32 = arith.constant 0 : i32
    %c0_i32_0 = arith.constant 0 : i32
    %c0_i32_1 = arith.constant 0 : i32
    %c0_i32_2 = arith.constant 0 : i32
    return %arg0, %c0_i32, %c0_i32_0, %c0_i32_1 : i32, i32, i32, i32
  }
  func.func @transform_1(%arg0: i32) -> (i32, i32, i32) {
    %c0_i32 = arith.constant 0 : i32
    %c0_i32_0 = arith.constant 0 : i32
    %c0_i32_1 = arith.constant 0 : i32
    %c0_i32_2 = arith.constant 0 : i32
    return %c0_i32, %c0_i32_0, %c0_i32_1 : i32, i32, i32
  }
  func.func @transform_2(%arg0: i32) -> (i32, i32) {
    %c0_i32 = arith.constant 0 : i32
    %c0_i32_0 = arith.constant 0 : i32
    %c0_i32_1 = arith.constant 0 : i32
    return %c0_i32, %c0_i32_0 : i32, i32
  }
  func.func @transform_3(%arg0: i32) -> (i32, i32, i32) {
    %c0_i32 = arith.constant 0 : i32
    %c0_i32_0 = arith.constant 0 : i32
    %c0_i32_1 = arith.constant 0 : i32
    %c0_i32_2 = arith.constant 0 : i32
    return %c0_i32, %c0_i32_0, %c0_i32_1 : i32, i32, i32
  }
  func.func @transform_4(%arg0: i32) -> (i32, i32) {
    %c0_i32 = arith.constant 0 : i32
    %c0_i32_0 = arith.constant 0 : i32
    %c0_i32_1 = arith.constant 0 : i32
    return %c0_i32, %c0_i32_0 : i32, i32
  }
  func.func @transform_5(%arg0: i32) -> (i32, i32, i32, i32) {
    %c0_i32 = arith.constant 0 : i32
    %c0_i32_0 = arith.constant 0 : i32
    %c0_i32_1 = arith.constant 0 : i32
    %c0_i32_2 = arith.constant 0 : i32
    return %arg0, %c0_i32, %c0_i32_0, %c0_i32_1 : i32, i32, i32, i32
  }
}

</mosaic_0001>

<llo_original>
// kernel: basic_block_double_shared_forward.1
$region0: #{basic_block_double_shared_forward.1}
  #allocation0 [shape = 'u32[]', space=smem, size = 0x4, offset = 0x4, fixed_abs, tag = 'smem constant byte address 0x4 - core index']
  #allocation1 [shape = 'u32[144,128]{1,0:T(1,128)}', space=vmem, size = 0x12000, scoped, tag = 'internal scratch']
  #allocation2 [shape = 'f32[18,32,32]{2,1,0:T(8,128)}', space=vmem, size = 0x48000, scoped, tag = 'scratch operand']
  %s0 = inlined_call_operand.vmem [shape: f32[2,18,18,32], index: 0, kind: input, shape index: {}]
  %s1 = inlined_call_operand.vmem [shape: bf16[9,32,32], index: 1, kind: input, shape index: {}]
  %s2 = inlined_call_operand.vmem [shape: f32[1,32], index: 2, kind: input, shape index: {}]
  %s3 = inlined_call_operand.vmem [shape: bf16[9,32,32], index: 3, kind: input, shape index: {}]
  %s4 = inlined_call_operand.vmem [shape: f32[1,32], index: 4, kind: input, shape index: {}]
  %s5 = inlined_call_operand.hbm [shape: f32[2,16,16,32], index: 5, kind: output, shape index: {}]
  %s6 = sld [smem:[#allocation0]]
  $region53: #{basic_block_double_shared_forward.1} parent=0
    _
  %s8 = ssub.s32 1, %s6
  %s9 = scalar_select 0, %s8, %s6
  $region1: #{basic_block_double_shared_forward.1} parent=0
    #allocation3 [shape = 'u8[262144]{0}', space=vmem, size = 0x40000, scoped, tag = 'output window, operand 0']
    #allocation4 [shape = 's32[2]{0}', space=sflag, size = 0x8, scoped, tag = 'scoped memory for basic_block_double_shared_forward.1']
    %10 = vsyncpa [#allocation4], 0
    %s11 = scalar_lea.sflag [#allocation4], 1
    %12 = vsyncpa %s11, 0
    loop: start=0, step=1, limit=4
    $region2: #{basic_block_double_shared_forward.1} parent=1 // loop_pre_header
      _
    $region3: #{basic_block_double_shared_forward.1} parent=1 // loop_header
      %s14 = sphi 0, %s18
      %p15 = scmp.ge.s32.totalorder %s14, 4
      %s24 = sphi 0, %s26
      %s27 = sphi 0, %s24
      %s28 = sphi 0, %s27
      %s44 = sphi 0, %s28
      %s48 = sphi 0, %s48
      %s50 = sphi 0, %s48
      %s51 = sphi 0, %s50
      %s65 = sphi 0, %s51
      %s69 = sphi 0, %s69
      %s71 = sphi 0, %s69
      %s72 = sphi 0, %s71
      %s86 = sphi 0, %s72
      %s90 = sphi 0, %s90
      %s92 = sphi 0, %s90
      %s93 = sphi 0, %s92
      %s107 = sphi 0, %s93
      %s111 = sphi 0, %s111
      %s113 = sphi 0, %s111
      %s114 = sphi 0, %s113
      %s128 = sphi 0, %s114
      %s134 = sphi 0, %s136
      %s137 = sphi 0, %s134
      %s138 = sphi 0, %s137
      %s154 = sphi 0, %s138
    $region4: #{basic_block_double_shared_forward.1} parent=1 // loop_header_branch
      %17 = sbr.rel (%p15) target = $region8
    $region5: #{basic_block_double_shared_forward.1} parent=1 // loop_body
      %s19 = ssub.s32 %s14, 1
      %s20 = ssub.s32 %s14, 2
      %s21 = sadd.s32 %s14, 1
      %s22 = ssub.s32 %s14, %s21
      %p23 = scmp.eq.s32.totalorder %s22, 0
      %s25 = sadd.s32 %s24, 1
      %s26 = scalar_select %p23, %s24, %s25
      %p29 = pneg %p23
      %p30 = scmp.eq.s32.totalorder %s14, 1
      %p31 = por %p29, %p30
      %p32 = scmp.ne.s32.totalorder %s24, %s27
      %p33 = scmp.eq.s32.totalorder %s14, 0
      %p34 = por %p32, %p33
      %p35 = scmp.ne.s32.totalorder %s24, %s27
      %p36 = scmp.eq.s32.totalorder %s19, 1
      %p37 = por %p35, %p36
      %p38 = scmp.ne.s32.totalorder %s27, %s28
      %p39 = scmp.eq.s32.totalorder %s19, 0
      %p40 = por %p38, %p39
      %p41 = scmp.ne.s32.totalorder %s27, %s28
      %p42 = scmp.eq.s32.totalorder %s20, 1
      %p43 = por %p41, %p42
      %p45 = scmp.ne.s32.totalorder %s28, %s44
      %p46 = scmp.eq.s32.totalorder %s20, 0
      %p47 = por %p45, %p46
      %s49 = sadd.s32 %s48, 1
      %p52 = scmp.eq.s32.totalorder %s14, 1
      %p53 = scmp.ne.s32.totalorder %s48, %s50
      %p54 = scmp.eq.s32.totalorder %s14, 0
      %p55 = por %p53, %p54
      %p56 = scmp.ne.s32.totalorder %s48, %s50
      %p57 = scmp.eq.s32.totalorder %s19, 1
      %p58 = por %p56, %p57
      %p59 = scmp.ne.s32.totalorder %s50, %s51
      %p60 = scmp.eq.s32.totalorder %s19, 0
      %p61 = por %p59, %p60
      %p62 = scmp.ne.s32.totalorder %s50, %s51
      %p63 = scmp.eq.s32.totalorder %s20, 1
      %p64 = por %p62, %p63
      %p66 = scmp.ne.s32.totalorder %s51, %s65
      %p67 = scmp.eq.s32.totalorder %s20, 0
      %p68 = por %p66, %p67
      %s70 = sadd.s32 %s69, 1
      %p73 = scmp.eq.s32.totalorder %s14, 1
      %p74 = scmp.ne.s32.totalorder %s69, %s71
      %p75 = scmp.eq.s32.totalorder %s14, 0
      %p76 = por %p74, %p75
      %p77 = scmp.ne.s32.totalorder %s69, %s71
      %p78 = scmp.eq.s32.totalorder %s19, 1
      %p79 = por %p77, %p78
      %p80 = scmp.ne.s32.totalorder %s71, %s72
      %p81 = scmp.eq.s32.totalorder %s19, 0
      %p82 = por %p80, %p81
      %p83 = scmp.ne.s32.totalorder %s71, %s72
      %p84 = scmp.eq.s32.totalorder %s20, 1
      %p85 = por %p83, %p84
      %p87 = scmp.ne.s32.totalorder %s72, %s86
      %p88 = scmp.eq.s32.totalorder %s20, 0
      %p89 = por %p87, %p88
      %s91 = sadd.s32 %s90, 1
      %p94 = scmp.eq.s32.totalorder %s14, 1
      %p95 = scmp.ne.s32.totalorder %s90, %s92
      %p96 = scmp.eq.s32.totalorder %s14, 0
      %p97 = por %p95, %p96
      %p98 = scmp.ne.s32.totalorder %s90, %s92
      %p99 = scmp.eq.s32.totalorder %s19, 1
      %p100 = por %p98, %p99
      %p101 = scmp.ne.s32.totalorder %s92, %s93
      %p102 = scmp.eq.s32.totalorder %s19, 0
      %p103 = por %p101, %p102
      %p104 = scmp.ne.s32.totalorder %s92, %s93
      %p105 = scmp.eq.s32.totalorder %s20, 1
      %p106 = por %p104, %p105
      %p108 = scmp.ne.s32.totalorder %s93, %s107
      %p109 = scmp.eq.s32.totalorder %s20, 0
      %p110 = por %p108, %p109
      %s112 = sadd.s32 %s111, 1
      %p115 = scmp.eq.s32.totalorder %s14, 1
      %p116 = scmp.ne.s32.totalorder %s111, %s113
      %p117 = scmp.eq.s32.totalorder %s14, 0
      %p118 = por %p116, %p117
      %p119 = scmp.ne.s32.totalorder %s111, %s113
      %p120 = scmp.eq.s32.totalorder %s19, 1
      %p121 = por %p119, %p120
      %p122 = scmp.ne.s32.totalorder %s113, %s114
      %p123 = scmp.eq.s32.totalorder %s19, 0
      %p124 = por %p122, %p123
      %p125 = scmp.ne.s32.totalorder %s113, %s114
      %p126 = scmp.eq.s32.totalorder %s20, 1
      %p127 = por %p125, %p126
      %p129 = scmp.ne.s32.totalorder %s114, %s128
      %p130 = scmp.eq.s32.totalorder %s20, 0
      %p131 = por %p129, %p130
      %s132 = ssub.s32 %s14, %s21
      %p133 = scmp.eq.s32.totalorder %s132, 0
      %s135 = sadd.s32 %s134, 1
      %s136 = scalar_select %p133, %s134, %s135
      %p139 = pneg %p133
      %p140 = scmp.eq.s32.totalorder %s14, 1
      %p141 = por %p139, %p140
      %p142 = scmp.ne.s32.totalorder %s134, %s137
      %p143 = scmp.eq.s32.totalorder %s14, 0
      %p144 = por %p142, %p143
      %p145 = scmp.ne.s32.totalorder %s134, %s137
      %p146 = scmp.eq.s32.totalorder %s19, 1
      %p147 = por %p145, %p146
      %p148 = scmp.ne.s32.totalorder %s137, %s138
      %p149 = scmp.eq.s32.totalorder %s19, 0
      %p150 = por %p148, %p149
      %p151 = scmp.ne.s32.totalorder %s137, %s138
      %p152 = scmp.eq.s32.totalorder %s20, 1
      %p153 = por %p151, %p152
      %p155 = scmp.ne.s32.totalorder %s138, %s154
      %p156 = scmp.eq.s32.totalorder %s20, 0
      %p157 = por %p155, %p156
      %p158 = scmp.le.s32.totalorder 1, %s14
      %p159 = scmp.lt.s32.totalorder %s14, 3
      %p160 = pnand %p158, %p159
      %p161 = pneg %p160
      // Predicated region
      $region9: #{basic_block_double_shared_forward.1} parent=5 // pred_check
        _
      $region10: #{basic_block_double_shared_forward.1} parent=5 // pred_check_branch
        %163 = sbr.rel (%p160) target = $region12
      $region11: #{basic_block_double_shared_forward.1} parent=5 // pred_region
        %s164 = ssub.s32 %s14, 1
        // Predicated region
        $region13: #{basic_block_double_shared_forward.1} parent=11 // pred_check
          %p165 = pneg %p61
        $region14: #{basic_block_double_shared_forward.1} parent=11 // pred_check_branch
          %167 = sbr.rel (%p165) target = $region16
        $region15: #{basic_block_double_shared_forward.1} parent=11 // pred_region
          _
        $region16: #{basic_block_double_shared_forward.1} parent=11 // pred_fallthru
          _
        // Predicated region
        $region17: #{basic_block_double_shared_forward.1} parent=11 // pred_check
          %p168 = pneg %p82
        $region18: #{basic_block_double_shared_forward.1} parent=11 // pred_check_branch
          %170 = sbr.rel (%p168) target = $region20
        $region19: #{basic_block_double_shared_forward.1} parent=11 // pred_region
          _
        $region20: #{basic_block_double_shared_forward.1} parent=11 // pred_fallthru
          _
        // Predicated region
        $region21: #{basic_block_double_shared_forward.1} parent=11 // pred_check
          %p171 = pneg %p103
        $region22: #{basic_block_double_shared_forward.1} parent=11 // pred_check_branch
          %173 = sbr.rel (%p171) target = $region24
        $region23: #{basic_block_double_shared_forward.1} parent=11 // pred_region
          _
        $region24: #{basic_block_double_shared_forward.1} parent=11 // pred_fallthru
          _
        // Predicated region
        $region25: #{basic_block_double_shared_forward.1} parent=11 // pred_check
          %p174 = pneg %p124
        $region26: #{basic_block_double_shared_forward.1} parent=11 // pred_check_branch
          %176 = sbr.rel (%p174) target = $region28
        $region27: #{basic_block_double_shared_forward.1} parent=11 // pred_region
          _
        $region28: #{basic_block_double_shared_forward.1} parent=11 // pred_fallthru
          _
      $region12: #{basic_block_double_shared_forward.1} parent=5 // pred_fallthru
        _
      %p177 = scmp.lt.s32.totalorder %s14, 2
      // Predicated region
      $region29: #{basic_block_double_shared_forward.1} parent=5 // pred_check
        %p178 = pneg %p177
      $region30: #{basic_block_double_shared_forward.1} parent=5 // pred_check_branch
        %180 = sbr.rel (%p178) target = $region32
      $region31: #{basic_block_double_shared_forward.1} parent=5 // pred_region
        // Predicated region
        $region33: #{basic_block_double_shared_forward.1} parent=31 // pred_check
          %p181 = pneg %p34
        $region34: #{basic_block_double_shared_forward.1} parent=31 // pred_check_branch
          %183 = sbr.rel (%p181) target = $region36
        $region35: #{basic_block_double_shared_forward.1} parent=31 // pred_region
          %p184 = scmp.lt.s32.totalorder %s14, 1
          %s185 = scalar_select %p184, %s14, 1
          %s186 = smul.addr %s185, 54
          %s187 = smul.addr %s186, 8
          %s188 = scalar_lea.vmem %s0, %s187
        $region36: #{basic_block_double_shared_forward.1} parent=31 // pred_fallthru
          _
      $region32: #{basic_block_double_shared_forward.1} parent=5 // pred_fallthru
        _
      %p189 = scmp.le.s32.totalorder 1, %s14
      %p190 = scmp.lt.s32.totalorder %s14, 3
      %p191 = pnand %p189, %p190
      %p192 = pneg %p191
      // Predicated region
      $region37: #{basic_block_double_shared_forward.1} parent=5 // pred_check
        _
      $region38: #{basic_block_double_shared_forward.1} parent=5 // pred_check_branch
        %194 = sbr.rel (%p191) target = $region40
      $region39: #{basic_block_double_shared_forward.1} parent=5 // pred_region
        %s195 = ssub.s32 %s14, 1
        %p196 = scmp.lt.s32.totalorder %s19, 1
        %s197 = scalar_select %p196, %s19, 1
        %s198 = smul.addr %s197, 54
        %s199 = smul.addr %s198, 8
        %s200 = scalar_lea.vmem %s0, %s199
        %p201 = pneg %p40
        %p202 = pneg %p37
        %p203 = pneg %p61
        %p204 = pneg %p58
        %p205 = pneg %p82
        %p206 = pneg %p79
        %p207 = pneg %p103
        %p208 = pneg %p100
        %p209 = pneg %p124
        %p210 = pneg %p121
        %p211 = pneg %p150
        %p212 = pneg %p147
        %s213 = sand.u32 %s137, 1
        %s214 = scalar_lea.sflag [#allocation4], %s213
        %s215 = sand.u32 %s137, 1
        %s216 = smul.addr %s215, 256
        %s217 = scalar_lea.vmem [#allocation3], %s216
        %p218 = scmp.lt.s32.totalorder %s19, 1
        %s219 = scalar_select %p218, %s19, 1
        %s220 = smul.addr %s219, 54
        %s221 = smul.addr %s220, 8
        %s222 = scalar_lea.vmem %s0, %s221
        %v224 = vld [vmem:[%s222] sm:$0xff]
        %v225 = vld [vmem:[%s222 + $0x8] sm:$0xff]
        %v226 = vld [vmem:[%s222 + $0x18] sm:$0xff]
        %v227 = vld [vmem:[%s222 + $0x20] sm:$0xff]
        %v228 = vld [vmem:[%s222 + $0x30] sm:$0xff]
        %v229 = vld [vmem:[%s222 + $0x38] sm:$0xff]
        %v230 = vld [vmem:[%s222 + $0x48] sm:$0xff]
        %v231 = vld [vmem:[%s222 + $0x50] sm:$0xff]
        %v232 = vld [vmem:[%s222 + $0x60] sm:$0xff]
        %v233 = vld [vmem:[%s222 + $0x68] sm:$0xff]
        %v234 = vld [vmem:[%s222 + $0x78] sm:$0xff]
        %v235 = vld [vmem:[%s222 + $0x80] sm:$0xff]
        %v236 = vld [vmem:[%s222 + $0x90] sm:$0xff]
        %v237 = vld [vmem:[%s222 + $0x98] sm:$0xff]
        %v238 = vld [vmem:[%s222 + $0xa8] sm:$0xff]
        %v239 = vld [vmem:[%s222 + $0xb0] sm:$0xff]
        %v240 = vld [vmem:[%s222 + $0xc0] sm:$0xff]
        %v241 = vld [vmem:[%s222 + $0xc8] sm:$0xff]
        %v242 = vld [vmem:[%s222 + $0xd8] sm:$0xff]
        %v243 = vld [vmem:[%s222 + $0xe0] sm:$0xff]
        %v244 = vld [vmem:[%s222 + $0xf0] sm:$0xff]
        %v245 = vld [vmem:[%s222 + $0xf8] sm:$0xff]
        %v246 = vld [vmem:[%s222 + $0x108] sm:$0xff]
        %v247 = vld [vmem:[%s222 + $0x110] sm:$0xff]
        %v248 = vld [vmem:[%s222 + $0x120] sm:$0xff]
        %v249 = vld [vmem:[%s222 + $0x128] sm:$0xff]
        %v250 = vld [vmem:[%s222 + $0x138] sm:$0xff]
        %v251 = vld [vmem:[%s222 + $0x140] sm:$0xff]
        %v252 = vld [vmem:[%s222 + $0x150] sm:$0xff]
        %v253 = vld [vmem:[%s222 + $0x158] sm:$0xff]
        %v254 = vld [vmem:[%s222 + $0x168] sm:$0xff]
        %v255 = vld [vmem:[%s222 + $0x170] sm:$0xff]
        %v256 = vpack.c.bf16 %v225, %v224
        %v257 = vpack.c.bf16 %v227, %v226
        %v258 = vpack.c.bf16 %v229, %v228
        %v259 = vpack.c.bf16 %v231, %v230
        %v260 = vpack.c.bf16 %v233, %v232
        %v261 = vpack.c.bf16 %v235, %v234
        %v262 = vpack.c.bf16 %v237, %v236
        %v263 = vpack.c.bf16 %v239, %v238
        %v264 = vpack.c.bf16 %v241, %v240
        %v265 = vpack.c.bf16 %v243, %v242
        %v266 = vpack.c.bf16 %v245, %v244
        %v267 = vpack.c.bf16 %v247, %v246
        %v268 = vpack.c.bf16 %v249, %v248
        %v269 = vpack.c.bf16 %v251, %v250
        %v270 = vpack.c.bf16 %v253, %v252
        %v271 = vpack.c.bf16 %v255, %v254
        %v272 = vld [vmem:[%s1] sm:$0xf]
        %v273 = vld [vmem:[%s1 + $0x4] sm:$0xf]
        %v274 = vld [vmem:[%s1 + $0x8] sm:$0xf]
        %v275 = vld [vmem:[%s1 + $0xc] sm:$0xf]
        %v276 = vld [vmem:[%s222 + $0x1] sm:$0xff]
        %v277 = vld [vmem:[%s222 + $0x9] sm:$0xff]
        %v278 = vld [vmem:[%s222 + $0x19] sm:$0xff]
        %v279 = vld [vmem:[%s222 + $0x21] sm:$0xff]
        %v280 = vld [vmem:[%s222 + $0x31] sm:$0xff]
        %v281 = vld [vmem:[%s222 + $0x39] sm:$0xff]
        %v282 = vld [vmem:[%s222 + $0x49] sm:$0xff]
        %v283 = vld [vmem:[%s222 + $0x51] sm:$0xff]
        %v284 = vld [vmem:[%s222 + $0x61] sm:$0xff]
        %v285 = vld [vmem:[%s222 + $0x69] sm:$0xff]
        %v286 = vld [vmem:[%s222 + $0x79] sm:$0xff]
        %v287 = vld [vmem:[%s222 + $0x81] sm:$0xff]
        %v288 = vld [vmem:[%s222 + $0x91] sm:$0xff]
        %v289 = vld [vmem:[%s222 + $0x99] sm:$0xff]
        %v290 = vld [vmem:[%s222 + $0xa9] sm:$0xff]
        %v291 = vld [vmem:[%s222 + $0xb1] sm:$0xff]
        %v292 = vld [vmem:[%s222 + $0xc1] sm:$0xff]
        %v293 = vld [vmem:[%s222 + $0xc9] sm:$0xff]
        %v294 = vld [vmem:[%s222 + $0xd9] sm:$0xff]
        %v295 = vld [vmem:[%s222 + $0xe1] sm:$0xff]
        %v296 = vld [vmem:[%s222 + $0xf1] sm:$0xff]
        %v297 = vld [vmem:[%s222 + $0xf9] sm:$0xff]
        %v298 = vld [vmem:[%s222 + $0x109] sm:$0xff]
        %v299 = vld [vmem:[%s222 + $0x111] sm:$0xff]
        %v300 = vld [vmem:[%s222 + $0x121] sm:$0xff]
        %v301 = vld [vmem:[%s222 + $0x129] sm:$0xff]
        %v302 = vld [vmem:[%s222 + $0x139] sm:$0xff]
        %v303 = vld [vmem:[%s222 + $0x141] sm:$0xff]
        %v304 = vld [vmem:[%s222 + $0x151] sm:$0xff]
        %v305 = vld [vmem:[%s222 + $0x159] sm:$0xff]
        %v306 = vld [vmem:[%s222 + $0x169] sm:$0xff]
        %v307 = vld [vmem:[%s222 + $0x171] sm:$0xff]
        %v308 = vpack.c.bf16 %v277, %v276
        %v309 = vpack.c.bf16 %v279, %v278
        %v310 = vpack.c.bf16 %v281, %v280
        %v311 = vpack.c.bf16 %v283, %v282
        %v312 = vpack.c.bf16 %v285, %v284
        %v313 = vpack.c.bf16 %v287, %v286
        %v314 = vpack.c.bf16 %v289, %v288
        %v315 = vpack.c.bf16 %v291, %v290
        %v316 = vpack.c.bf16 %v293, %v292
        %v317 = vpack.c.bf16 %v295, %v294
        %v318 = vpack.c.bf16 %v297, %v296
        %v319 = vpack.c.bf16 %v299, %v298
        %v320 = vpack.c.bf16 %v301, %v300
        %v321 = vpack.c.bf16 %v303, %v302
        %v322 = vpack.c.bf16 %v305, %v304
        %v323 = vpack.c.bf16 %v307, %v306
        %s324 = scalar_lea.vmem %s1, 16
        %v325 = vld [vmem:[%s324] sm:$0xf]
        %v326 = vld [vmem:[%s324 + $0x4] sm:$0xf]
        %v327 = vld [vmem:[%s324 + $0x8] sm:$0xf]
        %v328 = vld [vmem:[%s324 + $0xc] sm:$0xf]
        %v333 = vunpack.c.l.b16 %v325
        %v334 = vunpack.c.l.b16 %v326
        %v335 = vunpack.c.l.b16 %v327
        %v336 = vunpack.c.l.b16 %v328
        %v337 = vpack.c.b16 %v334, %v333
        %v338 = vpack.c.b16 %v336, %v335
        %vm341 = vcmask 261120
        %v343 = vsel %vm341, %v308, 0
        %v346 = vsel %vm341, %v309, 0
        %v349 = vsel %vm341, %v310, 0
        %v352 = vsel %vm341, %v311, 0
        %v355 = vsel %vm341, %v312, 0
        %v358 = vsel %vm341, %v313, 0
        %v361 = vsel %vm341, %v314, 0
        %v364 = vsel %vm341, %v315, 0
        %v367 = vsel %vm341, %v316, 0
        %v370 = vsel %vm341, %v317, 0
        %v373 = vsel %vm341, %v318, 0
        %v376 = vsel %vm341, %v319, 0
        %v379 = vsel %vm341, %v320, 0
        %v382 = vsel %vm341, %v321, 0
        %v385 = vsel %vm341, %v322, 0
        %v388 = vsel %vm341, %v323, 0
        %390 = vmatprep.subr.bf16.mxu0 0
        %391 = vmatpush1.bf16.msra.mxu0 %v337
        %392 = vmatprep.subr.bf16.mxu0 0
        %393 = vmatpush1.bf16.msra.mxu0 %v338
        %394 = vmatprep.subr.bf16.mxu0 0
        %395 = vmatpush1.bf16.msra.mxu0 0
        %396 = vmatprep.subr.bf16.mxu0 0
        %397 = vmatpush1.bf16.msra.mxu0 0
        %398 = vmatprep.subr.bf16.mxu0 0
        %399 = vmatpush1.bf16.msra.mxu0 0
        %400 = vmatprep.subr.bf16.mxu0 0
        %401 = vmatpush1.bf16.msra.mxu0 0
        %402 = vmatprep.subr.bf16.mxu0 0
        %403 = vmatpush1.bf16.msra.mxu0 0
        %404 = vmatprep.subr.bf16.mxu0 0
        %405 = vmatpush1.bf16.msra.mxu0 0
        %406 = vmatprep.subr.bf16.mxu0 0
        %407 = vmatpush1.bf16.msra.mxu0 0
        %408 = vmatprep.subr.bf16.mxu0 0
        %409 = vmatpush1.bf16.msra.mxu0 0
        %410 = vmatprep.subr.bf16.mxu0 0
        %411 = vmatpush1.bf16.msra.mxu0 0
        %412 = vmatprep.subr.bf16.mxu0 0
        %413 = vmatpush1.bf16.msra.mxu0 0
        %414 = vmatprep.subr.bf16.mxu0 0
        %415 = vmatpush1.bf16.msra.mxu0 0
        %416 = vmatprep.subr.bf16.mxu0 0
        %417 = vmatpush1.bf16.msra.mxu0 0
        %418 = vmatprep.subr.bf16.mxu0 0
        %419 = vmatpush1.bf16.msra.mxu0 0
        %420 = vmatprep.subr.bf16.mxu0 0
        %421 = vmatpush1.bf16.msra.mxu0 0
        %422 = vmatprep.mubr.bf16.mxu0 0
        %423 = vmatmul.mubr.bf16.gmra.mrb[0].mxu0 %v343
        %v424 = vpop.f32.mrb[0].mxu0
        %v425 = vadd.f32 0.0, %v424
        %v426 = vpop.f32.mrb[0].mxu0
        %v427 = vpop.f32.mrb[0].mxu0
        %v428 = vadd.f32 0.0, %v427
        %v429 = vpop.f32.mrb[0].mxu0
        %430 = vmatprep.mubr.bf16.mxu0 0
        %431 = vmatmul.mubr.bf16.gmra.mrb[0].mxu0 %v346
        %v432 = vpop.f32.mrb[0].mxu0
        %v433 = vadd.f32 0.0, %v432
        %v434 = vpop.f32.mrb[0].mxu0
        %v435 = vpop.f32.mrb[0].mxu0
        %v436 = vadd.f32 0.0, %v435
        %v437 = vpop.f32.mrb[0].mxu0
        %438 = vmatprep.mubr.bf16.mxu0 0
        %439 = vmatmul.mubr.bf16.gmra.mrb[0].mxu0 %v349
        %v440 = vpop.f32.mrb[0].mxu0
        %v441 = vadd.f32 0.0, %v440
        %v442 = vpop.f32.mrb[0].mxu0
        %v443 = vpop.f32.mrb[0].mxu0
        %v444 = vadd.f32 0.0, %v443
        %v445 = vpop.f32.mrb[0].mxu0
        %446 = vmatprep.mubr.bf16.mxu0 0
        %447 = vmatmul.mubr.bf16.gmra.mrb[0].mxu0 %v352
        %v448 = vpop.f32.mrb[0].mxu0
        %v449 = vadd.f32 0.0, %v448
        %v450 = vpop.f32.mrb[0].mxu0
        %v451 = vpop.f32.mrb[0].mxu0
        %v452 = vadd.f32 0.0, %v451
        %v453 = vpop.f32.mrb[0].mxu0
        %454 = vmatprep.mubr.bf16.mxu0 0
        %455 = vmatmul.mubr.bf16.gmra.mrb[0].mxu0 %v355
        %v456 = vpop.f32.mrb[0].mxu0
        %v457 = vadd.f32 0.0, %v456
        %v458 = vpop.f32.mrb[0].mxu0
        %v459 = vpop.f32.mrb[0].mxu0
        %v460 = vadd.f32 0.0, %v459
        %v461 = vpop.f32.mrb[0].mxu0
        %462 = vmatprep.mubr.bf16.mxu0 0
        %463 = vmatmul.mubr.bf16.gmra.mrb[0].mxu0 %v358
        %v464 = vpop.f32.mrb[0].mxu0
        %v465 = vadd.f32 0.0, %v464
        %v466 = vpop.f32.mrb[0].mxu0
        %v467 = vpop.f32.mrb[0].mxu0
        %v468 = vadd.f32 0.0, %v467
        %v469 = vpop.f32.mrb[0].mxu0
        %470 = vmatprep.mubr.bf16.mxu0 0
        %471 = vmatmul.mubr.bf16.gmra.mrb[0].mxu0 %v361
        %v472 = vpop.f32.mrb[0].mxu0
        %v473 = vadd.f32 0.0, %v472
        %v474 = vpop.f32.mrb[0].mxu0
        %v475 = vpop.f32.mrb[0].mxu0
        %v476 = vadd.f32 0.0, %v475
        %v477 = vpop.f32.mrb[0].mxu0
        %478 = vmatprep.mubr.bf16.mxu0 0
        %479 = vmatmul.mubr.bf16.gmra.mrb[0].mxu0 %v364
        %v480 = vpop.f32.mrb[0].mxu0
        %v481 = vadd.f32 0.0, %v480
        %v482 = vpop.f32.mrb[0].mxu0
        %v483 = vpop.f32.mrb[0].mxu0
        %v484 = vadd.f32 0.0, %v483
        %v485 = vpop.f32.mrb[0].mxu0
        %486 = vmatprep.mubr.bf16.mxu0 0
        %487 = vmatmul.mubr.bf16.gmra.mrb[0].mxu0 %v367
        %v488 = vpop.f32.mrb[0].mxu0
        %v489 = vadd.f32 0.0, %v488
        %v490 = vpop.f32.mrb[0].mxu0
        %v491 = vpop.f32.mrb[0].mxu0
        %v492 = vadd.f32 0.0, %v491
        %v493 = vpop.f32.mrb[0].mxu0
        %494 = vmatprep.mubr.bf16.mxu0 0
        %495 = vmatmul.mubr.bf16.gmra.mrb[0].mxu0 %v370
        %v496 = vpop.f32.mrb[0].mxu0
        %v497 = vadd.f32 0.0, %v496
        %v498 = vpop.f32.mrb[0].mxu0
        %v499 = vpop.f32.mrb[0].mxu0
        %v500 = vadd.f32 0.0, %v499
        %v501 = vpop.f32.mrb[0].mxu0
        %502 = vmatprep.mubr.bf16.mxu0 0
        %503 = vmatmul.mubr.bf16.gmra.mrb[0].mxu0 %v373
        %v504 = vpop.f32.mrb[0].mxu0
        %v505 = vadd.f32 0.0, %v504
        %v506 = vpop.f32.mrb[0].mxu0
        %v507 = vpop.f32.mrb[0].mxu0
        %v508 = vadd.f32 0.0, %v507
        %v509 = vpop.f32.mrb[0].mxu0
        %510 = vmatprep.mubr.bf16.mxu0 0
        %511 = vmatmul.mubr.bf16.gmra.mrb[0].mxu0 %v376
        %v512 = vpop.f32.mrb[0].mxu0
        %v513 = vadd.f32 0.0, %v512
        %v514 = vpop.f32.mrb[0].mxu0
        %v515 = vpop.f32.mrb[0].mxu0
        %v516 = vadd.f32 0.0, %v515
        %v517 = vpop.f32.mrb[0].mxu0
        %518 = vmatprep.mubr.bf16.mxu0 0
        %519 = vmatmul.mubr.bf16.gmra.mrb[0].mxu0 %v379
        %v520 = vpop.f32.mrb[0].mxu0
        %v521 = vadd.f32 0.0, %v520
        %v522 = vpop.f32.mrb[0].mxu0
        %v523 = vpop.f32.mrb[0].mxu0
        %v524 = vadd.f32 0.0, %v523
        %v525 = vpop.f32.mrb[0].mxu0
        %526 = vmatprep.mubr.bf16.mxu0 0
        %527 = vmatmul.mubr.bf16.gmra.mrb[0].mxu0 %v382
        %v528 = vpop.f32.mrb[0].mxu0
        %v529 = vadd.f32 0.0, %v528
        %v530 = vpop.f32.mrb[0].mxu0
        %v531 = vpop.f32.mrb[0].mxu0
        %v532 = vadd.f32 0.0, %v531
        %v533 = vpop.f32.mrb[0].mxu0
        %534 = vmatprep.mubr.bf16.mxu0 0
        %535 = vmatmul.mubr.bf16.gmra.mrb[0].mxu0 %v385
        %v536 = vpop.f32.mrb[0].mxu0
        %v537 = vadd.f32 0.0, %v536
        %v538 = vpop.f32.mrb[0].mxu0
        %v539 = vpop.f32.mrb[0].mxu0
        %v540 = vadd.f32 0.0, %v539
        %v541 = vpop.f32.mrb[0].mxu0
        %542 = vmatprep.mubr.bf16.mxu0 0
        %543 = vmatmul.mubr.bf16.gmra.mrb[0].mxu0 %v388
        %v544 = vpop.f32.mrb[0].mxu0
        %v545 = vadd.f32 0.0, %v544
        %v546 = vpop.f32.mrb[0].mxu0
        %v547 = vpop.f32.mrb[0].mxu0
        %v548 = vadd.f32 0.0, %v547
        %v549 = vpop.f32.mrb[0].mxu0
        %550 = vdwg.mxu0
        %v555 = vunpack.c.l.b16 %v272
        %v556 = vunpack.c.l.b16 %v273
        %v557 = vunpack.c.l.b16 %v274
        %v558 = vunpack.c.l.b16 %v275
        %v559 = vpack.c.b16 %v556, %v555
        %v560 = vpack.c.b16 %v558, %v557
        %v564 = vsel %vm341, %v256, 0
        %v567 = vsel %vm341, %v257, 0
        %v570 = vsel %vm341, %v258, 0
        %v573 = vsel %vm341, %v259, 0
        %v576 = vsel %vm341, %v260, 0
        %v579 = vsel %vm341, %v261, 0
        %v582 = vsel %vm341, %v262, 0
        %v585 = vsel %vm341, %v263, 0
        %v588 = vsel %vm341, %v264, 0
        %v591 = vsel %vm341, %v265, 0
        %v594 = vsel %vm341, %v266, 0
        %v597 = vsel %vm341, %v267, 0
        %v600 = vsel %vm341, %v268, 0
        %v603 = vsel %vm341, %v269, 0
        %v606 = vsel %vm341, %v270, 0
        %v609 = vsel %vm341, %v271, 0
        %611 = vmatprep.subr.bf16.mxu0 0
        %612 = vmatpush1.bf16.msra.mxu0 %v559
        %613 = vmatprep.subr.bf16.mxu0 0
        %614 = vmatpush1.bf16.msra.mxu0 %v560
        %615 = vmatprep.subr.bf16.mxu0 0
        %616 = vmatpush1.bf16.msra.mxu0 0
        %617 = vmatprep.subr.bf16.mxu0 0
        %618 = vmatpush1.bf16.msra.mxu0 0
        %619 = vmatprep.subr.bf16.mxu0 0
        %620 = vmatpush1.bf16.msra.mxu0 0
        %621 = vmatprep.subr.bf16.mxu0 0
        %622 = vmatpush1.bf16.msra.mxu0 0
        %623 = vmatprep.subr.bf16.mxu0 0
        %624 = vmatpush1.bf16.msra.mxu0 0
        %625 = vmatprep.subr.bf16.mxu0 0
        %626 = vmatpush1.bf16.msra.mxu0 0
        %627 = vmatprep.subr.bf16.mxu0 0
        %628 = vmatpush1.bf16.msra.mxu0 0
        %629 = vmatprep.subr.bf16.mxu0 0
        %630 = vmatpush1.bf16.msra.mxu0 0
        %631 = vmatprep.subr.bf16.mxu0 0
        %632 = vmatpush1.bf16.msra.mxu0 0
        %633 = vmatprep.subr.bf16.mxu0 0
        %634 = vmatpush1.bf16.msra.mxu0 0
        %635 = vmatprep.subr.bf16.mxu0 0
        %636 = vmatpush1.bf16.msra.mxu0 0
        %637 = vmatprep.subr.bf16.mxu0 0
        %638 = vmatpush1.bf16.msra.mxu0 0
        %639 = vmatprep.subr.bf16.mxu0 0
        %640 = vmatpush1.bf16.msra.mxu0 0
        %641 = vmatprep.subr.bf16.mxu0 0
        %642 = vmatpush1.bf16.msra.mxu0 0
        %643 = vmatprep.mubr.bf16.mxu0 0
        %644 = vmatmul.mubr.bf16.gmra.mrb[0].mxu0 %v564
        %v645 = vpop.f32.mrb[0].mxu0
        %v646 = vadd.f32 %v425, %v645
        %v647 = vpop.f32.mrb[0].mxu0
        %v648 = vpop.f32.mrb[0].mxu0
        %v649 = vadd.f32 %v428, %v648
        %v650 = vpop.f32.mrb[0].mxu0
        %651 = vmatprep.mubr.bf16.mxu0 0
        %652 = vmatmul.mubr.bf16.gmra.mrb[0].mxu0 %v567
        %v653 = vpop.f32.mrb[0].mxu0
        %v654 = vadd.f32 %v433, %v653
        %v655 = vpop.f32.mrb[0].mxu0
        %v656 = vpop.f32.mrb[0].mxu0
        %v657 = vadd.f32 %v436, %v656
        %v658 = vpop.f32.mrb[0].mxu0
        %659 = vmatprep.mubr.bf16.mxu0 0
        %660 = vmatmul.mubr.bf16.gmra.mrb[0].mxu0 %v570
        %v661 = vpop.f32.mrb[0].mxu0
        %v662 = vadd.f32 %v441, %v661
        %v663 = vpop.f32.mrb[0].mxu0
        %v664 = vpop.f32.mrb[0].mxu0
        %v665 = vadd.f32 %v444, %v664
        %v666 = vpop.f32.mrb[0].mxu0
        %667 = vmatprep.mubr.bf16.mxu0 0
        %668 = vmatmul.mubr.bf16.gmra.mrb[0].mxu0 %v573
        %v669 = vpop.f32.mrb[0].mxu0
        %v670 = vadd.f32 %v449, %v669
        %v671 = vpop.f32.mrb[0].mxu0
        %v672 = vpop.f32.mrb[0].mxu0
        %v673 = vadd.f32 %v452, %v672
        %v674 = vpop.f32.mrb[0].mxu0
        %675 = vmatprep.mubr.bf16.mxu0 0
        %676 = vmatmul.mubr.bf16.gmra.mrb[0].mxu0 %v576
        %v677 = vpop.f32.mrb[0].mxu0
        %v678 = vadd.f32 %v457, %v677
        %v679 = vpop.f32.mrb[0].mxu0
        %v680 = vpop.f32.mrb[0].mxu0
        %v681 = vadd.f32 %v460, %v680
        %v682 = vpop.f32.mrb[0].mxu0
        %683 = vmatprep.mubr.bf16.mxu0 0
        %684 = vmatmul.mubr.bf16.gmra.mrb[0].mxu0 %v579
        %v685 = vpop.f32.mrb[0].mxu0
        %v686 = vadd.f32 %v465, %v685
        %v687 = vpop.f32.mrb[0].mxu0
        %v688 = vpop.f32.mrb[0].mxu0
        %v689 = vadd.f32 %v468, %v688
        %v690 = vpop.f32.mrb[0].mxu0
        %691 = vmatprep.mubr.bf16.mxu0 0
        %692 = vmatmul.mubr.bf16.gmra.mrb[0].mxu0 %v582
        %v693 = vpop.f32.mrb[0].mxu0
        %v694 = vadd.f32 %v473, %v693
        %v695 = vpop.f32.mrb[0].mxu0
        %v696 = vpop.f32.mrb[0].mxu0
        %v697 = vadd.f32 %v476, %v696
        %v698 = vpop.f32.mrb[0].mxu0
        %699 = vmatprep.mubr.bf16.mxu0 0
        %700 = vmatmul.mubr.bf16.gmra.mrb[0].mxu0 %v585
        %v701 = vpop.f32.mrb[0].mxu0
        %v702 = vadd.f32 %v481, %v701
        %v703 = vpop.f32.mrb[0].mxu0
        %v704 = vpop.f32.mrb[0].mxu0
        %v705 = vadd.f32 %v484, %v704
        %v706 = vpop.f32.mrb[0].mxu0
        %707 = vmatprep.mubr.bf16.mxu0 0
        %708 = vmatmul.mubr.bf16.gmra.mrb[0].mxu0 %v588
        %v709 = vpop.f32.mrb[0].mxu0
        %v710 = vadd.f32 %v489, %v709
        %v711 = vpop.f32.mrb[0].mxu0
        %v712 = vpop.f32.mrb[0].mxu0
        %v713 = vadd.f32 %v492, %v712
        %v714 = vpop.f32.mrb[0].mxu0
        %715 = vmatprep.mubr.bf16.mxu0 0
        %716 = vmatmul.mubr.bf16.gmra.mrb[0].mxu0 %v591
        %v717 = vpop.f32.mrb[0].mxu0
        %v718 = vadd.f32 %v497, %v717
        %v719 = vpop.f32.mrb[0].mxu0
        %v720 = vpop.f32.mrb[0].mxu0
        %v721 = vadd.f32 %v500, %v720
        %v722 = vpop.f32.mrb[0].mxu0
        %723 = vmatprep.mubr.bf16.mxu0 0
        %724 = vmatmul.mubr.bf16.gmra.mrb[0].mxu0 %v594
        %v725 = vpop.f32.mrb[0].mxu0
        %v726 = vadd.f32 %v505, %v725
        %v727 = vpop.f32.mrb[0].mxu0
        %v728 = vpop.f32.mrb[0].mxu0
        %v729 = vadd.f32 %v508, %v728
        %v730 = vpop.f32.mrb[0].mxu0
        %731 = vmatprep.mubr.bf16.mxu0 0
        %732 = vmatmul.mubr.bf16.gmra.mrb[0].mxu0 %v597
        %v733 = vpop.f32.mrb[0].mxu0
        %v734 = vadd.f32 %v513, %v733
        %v735 = vpop.f32.mrb[0].mxu0
        %v736 = vpop.f32.mrb[0].mxu0
        %v737 = vadd.f32 %v516, %v736
        %v738 = vpop.f32.mrb[0].mxu0
        %739 = vmatprep.mubr.bf16.mxu0 0
        %740 = vmatmul.mubr.bf16.gmra.mrb[0].mxu0 %v600
        %v741 = vpop.f32.mrb[0].mxu0
        %v742 = vadd.f32 %v521, %v741
        %v743 = vpop.f32.mrb[0].mxu0
        %v744 = vpop.f32.mrb[0].mxu0
        %v745 = vadd.f32 %v524, %v744
        %v746 = vpop.f32.mrb[0].mxu0
        %747 = vmatprep.mubr.bf16.mxu0 0
        %748 = vmatmul.mubr.bf16.gmra.mrb[0].mxu0 %v603
        %v749 = vpop.f32.mrb[0].mxu0
        %v750 = vadd.f32 %v529, %v749
        %v751 = vpop.f32.mrb[0].mxu0
        %v752 = vpop.f32.mrb[0].mxu0
        %v753 = vadd.f32 %v532, %v752
        %v754 = vpop.f32.mrb[0].mxu0
        %755 = vmatprep.mubr.bf16.mxu0 0
        %756 = vmatmul.mubr.bf16.gmra.mrb[0].mxu0 %v606
        %v757 = vpop.f32.mrb[0].mxu0
        %v758 = vadd.f32 %v537, %v757
        %v759 = vpop.f32.mrb[0].mxu0
        %v760 = vpop.f32.mrb[0].mxu0
        %v761 = vadd.f32 %v540, %v760
        %v762 = vpop.f32.mrb[0].mxu0
        %763 = vmatprep.mubr.bf16.mxu0 0
        %764 = vmatmul.mubr.bf16.gmra.mrb[0].mxu0 %v609
        %v765 = vpop.f32.mrb[0].mxu0
        %v766 = vadd.f32 %v545, %v765
        %v767 = vpop.f32.mrb[0].mxu0
        %v768 = vpop.f32.mrb[0].mxu0
        %v769 = vadd.f32 %v548, %v768
        %v770 = vpop.f32.mrb[0].mxu0
        %771 = vdwg.mxu0
        %v772 = vld [vmem:[%s222 + $0x2] sm:$0xff]
        %v773 = vld [vmem:[%s222 + $0xa] sm:$0xff]
        %v774 = vld [vmem:[%s222 + $0x1a] sm:$0xff]
        %v775 = vld [vmem:[%s222 + $0x22] sm:$0xff]
        %v776 = vld [vmem:[%s222 + $0x32] sm:$0xff]
        %v777 = vld [vmem:[%s222 + $0x3a] sm:$0xff]
        %v778 = vld [vmem:[%s222 + $0x4a] sm:$0xff]
        %v779 = vld [vmem:[%s222 + $0x52] sm:$0xff]
        %v780 = vld [vmem:[%s222 + $0x62] sm:$0xff]
        %v781 = vld [vmem:[%s222 + $0x6a] sm:$0xff]
        %v782 = vld [vmem:[%s222 + $0x7a] sm:$0xff]
        %v783 = vld [vmem:[%s222 + $0x82] sm:$0xff]
        %v784 = vld [vmem:[%s222 + $0x92] sm:$0xff]
        %v785 = vld [vmem:[%s222 + $0x9a] sm:$0xff]
        %v786 = vld [vmem:[%s222 + $0xaa] sm:$0xff]
        %v787 = vld [vmem:[%s222 + $0xb2] sm:$0xff]
        %v788 = vld [vmem:[%s222 + $0xc2] sm:$0xff]
        %v789 = vld [vmem:[%s222 + $0xca] sm:$0xff]
        %v790 = vld [vmem:[%s222 + $0xda] sm:$0xff]
        %v791 = vld [vmem:[%s222 + $0xe2] sm:$0xff]
        %v792 = vld [vmem:[%s222 + $0xf2] sm:$0xff]
        %v793 = vld [vmem:[%s222 + $0xfa] sm:$0xff]
        %v794 = vld [vmem:[%s222 + $0x10a] sm:$0xff]
        %v795 = vld [vmem:[%s222 + $0x112] sm:$0xff]
        %v796 = vld [vmem:[%s222 + $0x122] sm:$0xff]
        %v797 = vld [vmem:[%s222 + $0x12a] sm:$0xff]
        %v798 = vld [vmem:[%s222 + $0x13a] sm:$0xff]
        %v799 = vld [vmem:[%s222 + $0x142] sm:$0xff]
        %v800 = vld [vmem:[%s222 + $0x152] sm:$0xff]
        %v801 = vld [vmem:[%s222 + $0x15a] sm:$0xff]
        %v802 = vld [vmem:[%s222 + $0x16a] sm:$0xff]
        %v803 = vld [vmem:[%s222 + $0x172] sm:$0xff]
        %v804 = vpack.c.bf16 %v773, %v772
        %v805 = vpack.c.bf16 %v775, %v774
        %v806 = vpack.c.bf16 %v777, %v776
        %v807 = vpack.c.bf16 %v779, %v778
        %v808 = vpack.c.bf16 %v781, %v780
        %v809 = vpack.c.bf16 %v783, %v782
        %v810 = vpack.c.bf16 %v785, %v784
        %v811 = vpack.c.bf16 %v787, %v786
        %v812 = vpack.c.bf16 %v789, %v788
        %v813 = vpack.c.bf16 %v791, %v790
        %v814 = vpack.c.bf16 %v793, %v792
        %v815 = vpack.c.bf16 %v795, %v794
        %v816 = vpack.c.bf16 %v797, %v796
        %v817 = vpack.c.bf16 %v799, %v798
        %v818 = vpack.c.bf16 %v801, %v800
        %v819 = vpack.c.bf16 %v803, %v802
        %s820 = scalar_lea.vmem %s1, 32
        %v821 = vld [vmem:[%s820] sm:$0xf]
        %v822 = vld [vmem:[%s820 + $0x4] sm:$0xf]
        %v823 = vld [vmem:[%s820 + $0x8] sm:$0xf]
        %v824 = vld [vmem:[%s820 + $0xc] sm:$0xf]
        %v829 = vunpack.c.l.b16 %v821
        %v830 = vunpack.c.l.b16 %v822
        %v831 = vunpack.c.l.b16 %v823
        %v832 = vunpack.c.l.b16 %v824
        %v833 = vpack.c.b16 %v830, %v829
        %v834 = vpack.c.b16 %v832, %v831
        %v838 = vsel %vm341, %v804, 0
        %v841 = vsel %vm341, %v805, 0
        %v844 = vsel %vm341, %v806, 0
        %v847 = vsel %vm341, %v807, 0
        %v850 = vsel %vm341, %v808, 0
        %v853 = vsel %vm341, %v809, 0
        %v856 = vsel %vm341, %v810, 0
        %v859 = vsel %vm341, %v811, 0
        %v862 = vsel %vm341, %v812, 0
        %v865 = vsel %vm341, %v813, 0
        %v868 = vsel %vm341, %v814, 0
        %v871 = vsel %vm341, %v815, 0
        %v874 = vsel %vm341, %v816, 0
        %v877 = vsel %vm341, %v817, 0
        %v880 = vsel %vm341, %v818, 0
        %v883 = vsel %vm341, %v819, 0
        %885 = vmatprep.subr.bf16.mxu0 0
        %886 = vmatpush1.bf16.msra.mxu0 %v833
        %887 = vmatprep.subr.bf16.mxu0 0
        %888 = vmatpush1.bf16.msra.mxu0 %v834
        %889 = vmatprep.subr.bf16.mxu0 0
        %890 = vmatpush1.bf16.msra.mxu0 0
        %891 = vmatprep.subr.bf16.mxu0 0
        %892 = vmatpush1.bf16.msra.mxu0 0
        %893 = vmatprep.subr.bf16.mxu0 0
        %894 = vmatpush1.bf16.msra.mxu0 0
        %895 = vmatprep.subr.bf16.mxu0 0
        %896 = vmatpush1.bf16.msra.mxu0 0
        %897 = vmatprep.subr.bf16.mxu0 0
        %898 = vmatpush1.bf16.msra.mxu0 0
        %899 = vmatprep.subr.bf16.mxu0 0
        %900 = vmatpush1.bf16.msra.mxu0 0
        %901 = vmatprep.subr.bf16.mxu0 0
        %902 = vmatpush1.bf16.msra.mxu0 0
        %903 = vmatprep.subr.bf16.mxu0 0
        %904 = vmatpush1.bf16.msra.mxu0 0
        %905 = vmatprep.subr.bf16.mxu0 0
        %906 = vmatpush1.bf16.msra.mxu0 0
        %907 = vmatprep.subr.bf16.mxu0 0
        %908 = vmatpush1.bf16.msra.mxu0 0
        %909 = vmatprep.subr.bf16.mxu0 0
        %910 = vmatpush1.bf16.msra.mxu0 0
        %911 = vmatprep.subr.bf16.mxu0 0
        %912 = vmatpush1.bf16.msra.mxu0 0
        %913 = vmatprep.subr.bf16.mxu0 0
        %914 = vmatpush1.bf16.msra.mxu0 0
        %915 = vmatprep.subr.bf16.mxu0 0
        %916 = vmatpush1.bf16.msra.mxu0 0
        %917 = vmatprep.mubr.bf16.mxu0 0
        %918 = vmatmul.mubr.bf16.gmra.mrb[0].mxu0 %v838
        %v919 = vpop.f32.mrb[0].mxu0
        %v920 = vadd.f32 0.0, %v919
        %v921 = vpop.f32.mrb[0].mxu0
        %v922 = vpop.f32.mrb[0].mxu0
        %v923 = vadd.f32 0.0, %v922
        %v924 = vpop.f32.mrb[0].mxu0
        %925 = vmatprep.mubr.bf16.mxu0 0
        %926 = vmatmul.mubr.bf16.gmra.mrb[0].mxu0 %v841
        %v927 = vpop.f32.mrb[0].mxu0
        %v928 = vadd.f32 0.0, %v927
        %v929 = vpop.f32.mrb[0].mxu0
        %v930 = vpop.f32.mrb[0].mxu0
        %v931 = vadd.f32 0.0, %v930
        %v932 = vpop.f32.mrb[0].mxu0
        %933 = vmatprep.mubr.bf16.mxu0 0
        %934 = vmatmul.mubr.bf16.gmra.mrb[0].mxu0 %v844
        %v935 = vpop.f32.mrb[0].mxu0
        %v936 = vadd.f32 0.0, %v935
        %v937 = vpop.f32.mrb[0].mxu0
        %v938 = vpop.f32.mrb[0].mxu0
        %v939 = vadd.f32 0.0, %v938
        %v940 = vpop.f32.mrb[0].mxu0
        %941 = vmatprep.mubr.bf16.mxu0 0
        %942 = vmatmul.mubr.bf16.gmra.mrb[0].mxu0 %v847
        %v943 = vpop.f32.mrb[0].mxu0
        %v944 = vadd.f32 0.0, %v943
        %v945 = vpop.f32.mrb[0].mxu0
        %v946 = vpop.f32.mrb[0].mxu0
        %v947 = vadd.f32 0.0, %v946
        %v948 = vpop.f32.mrb[0].mxu0
        %949 = vmatprep.mubr.bf16.mxu0 0
        %950 = vmatmul.mubr.bf16.gmra.mrb[0].mxu0 %v850
        %v951 = vpop.f32.mrb[0].mxu0
        %v952 = vadd.f32 0.0, %v951
        %v953 = vpop.f32.mrb[0].mxu0
        %v954 = vpop.f32.mrb[0].mxu0
        %v955 = vadd.f32 0.0, %v954
        %v956 = vpop.f32.mrb[0].mxu0
        %957 = vmatprep.mubr.bf16.mxu0 0
        %958 = vmatmul.mubr.bf16.gmra.mrb[0].mxu0 %v853
        %v959 = vpop.f32.mrb[0].mxu0
        %v960 = vadd.f32 0.0, %v959
        %v961 = vpop.f32.mrb[0].mxu0
        %v962 = vpop.f32.mrb[0].mxu0
        %v963 = vadd.f32 0.0, %v962
        %v964 = vpop.f32.mrb[0].mxu0
        %965 = vmatprep.mubr.bf16.mxu0 0
        %966 = vmatmul.mubr.bf16.gmra.mrb[0].mxu0 %v856
        %v967 = vpop.f32.mrb[0].mxu0
        %v968 = vadd.f32 0.0, %v967
        %v969 = vpop.f32.mrb[0].mxu0
        %v970 = vpop.f32.mrb[0].mxu0
        %v971 = vadd.f32 0.0, %v970
        %v972 = vpop.f32.mrb[0].mxu0
        %973 = vmatprep.mubr.bf16.mxu0 0
        %974 = vmatmul.mubr.bf16.gmra.mrb[0].mxu0 %v859
        %v975 = vpop.f32.mrb[0].mxu0
        %v976 = vadd.f32 0.0, %v975
        %v977 = vpop.f32.mrb[0].mxu0
        %v978 = vpop.f32.mrb[0].mxu0
        %v979 = vadd.f32 0.0, %v978
        %v980 = vpop.f32.mrb[0].mxu0
        %981 = vmatprep.mubr.bf16.mxu0 0
        %982 = vmatmul.mubr.bf16.gmra.mrb[0].mxu0 %v862
        %v983 = vpop.f32.mrb[0].mxu0
        %v984 = vadd.f32 0.0, %v983
        %v985 = vpop.f32.mrb[0].mxu0
        %v986 = vpop.f32.mrb[0].mxu0
        %v987 = vadd.f32 0.0, %v986
        %v988 = vpop.f32.mrb[0].mxu0
        %989 = vmatprep.mubr.bf16.mxu0 0
        %990 = vmatmul.mubr.bf16.gmra.mrb[0].mxu0 %v865
        %v991 = vpop.f32.mrb[0].mxu0
        %v992 = vadd.f32 0.0, %v991
        %v993 = vpop.f32.mrb[0].mxu0
        %v994 = vpop.f32.mrb[0].mxu0
        %v995 = vadd.f32 0.0, %v994
        %v996 = vpop.f32.mrb[0].mxu0
        %997 = vmatprep.mubr.bf16.mxu0 0
        %998 = vmatmul.mubr.bf16.gmra.mrb[0].mxu0 %v868
        %v999 = vpop.f32.mrb[0].mxu0
        %v1000 = vadd.f32 0.0, %v999
        %v1001 = vpop.f32.mrb[0].mxu0
        %v1002 = vpop.f32.mrb[0].mxu0
        %v1003 = vadd.f32 0.0, %v1002
        %v1004 = vpop.f32.mrb[0].mxu0
        %1005 = vmatprep.mubr.bf16.mxu0 0
        %1006 = vmatmul.mubr.bf16.gmra.mrb[0].mxu0 %v871
        %v1007 = vpop.f32.mrb[0].mxu0
        %v1008 = vadd.f32 0.0, %v1007
        %v1009 = vpop.f32.mrb[0].mxu0
        %v1010 = vpop.f32.mrb[0].mxu0
        %v1011 = vadd.f32 0.0, %v1010
        %v1012 = vpop.f32.mrb[0].mxu0
        %1013 = vmatprep.mubr.bf16.mxu0 0
        %1014 = vmatmul.mubr.bf16.gmra.mrb[0].mxu0 %v874
        %v1015 = vpop.f32.mrb[0].mxu0
        %v1016 = vadd.f32 0.0, %v1015
        %v1017 = vpop.f32.mrb[0].mxu0
        %v1018 = vpop.f32.mrb[0].mxu0
        %v1019 = vadd.f32 0.0, %v1018
        %v1020 = vpop.f32.mrb[0].mxu0
        %1021 = vmatprep.mubr.bf16.mxu0 0
        %1022 = vmatmul.mubr.bf16.gmra.mrb[0].mxu0 %v877
        %v1023 = vpop.f32.mrb[0].mxu0
        %v1024 = vadd.f32 0.0, %v1023
        %v1025 = vpop.f32.mrb[0].mxu0
        %v1026 = vpop.f32.mrb[0].mxu0
        %v1027 = vadd.f32 0.0, %v1026
        %v1028 = vpop.f32.mrb[0].mxu0
        %1029 = vmatprep.mubr.bf16.mxu0 0
        %1030 = vmatmul.mubr.bf16.gmra.mrb[0].mxu0 %v880
        %v1031 = vpop.f32.mrb[0].mxu0
        %v1032 = vadd.f32 0.0, %v1031
        %v1033 = vpop.f32.mrb[0].mxu0
        %v1034 = vpop.f32.mrb[0].mxu0
        %v1035 = vadd.f32 0.0, %v1034
        %v1036 = vpop.f32.mrb[0].mxu0
        %1037 = vmatprep.mubr.bf16.mxu0 0
        %1038 = vmatmul.mubr.bf16.gmra.mrb[0].mxu0 %v883
        %v1039 = vpop.f32.mrb[0].mxu0
        %v1040 = vadd.f32 0.0, %v1039
        %v1041 = vpop.f32.mrb[0].mxu0
        %v1042 = vpop.f32.mrb[0].mxu0
        %v1043 = vadd.f32 0.0, %v1042
        %v1044 = vpop.f32.mrb[0].mxu0
        %1045 = vdwg.mxu0
        %v1046 = vadd.f32 %v646, %v920
        %v1047 = vadd.f32 %v649, %v923
        %v1048 = vadd.f32 %v654, %v928
        %v1049 = vadd.f32 %v657, %v931
        %v1050 = vadd.f32 %v662, %v936
        %v1051 = vadd.f32 %v665, %v939
        %v1052 = vadd.f32 %v670, %v944
        %v1053 = vadd.f32 %v673, %v947
        %v1054 = vadd.f32 %v678, %v952
        %v1055 = vadd.f32 %v681, %v955
        %v1056 = vadd.f32 %v686, %v960
        %v1057 = vadd.f32 %v689, %v963
        %v1058 = vadd.f32 %v694, %v968
        %v1059 = vadd.f32 %v697, %v971
        %v1060 = vadd.f32 %v702, %v976
        %v1061 = vadd.f32 %v705, %v979
        %v1062 = vadd.f32 %v710, %v984
        %v1063 = vadd.f32 %v713, %v987
        %v1064 = vadd.f32 %v718, %v992
        %v1065 = vadd.f32 %v721, %v995
        %v1066 = vadd.f32 %v726, %v1000
        %v1067 = vadd.f32 %v729, %v1003
        %v1068 = vadd.f32 %v734, %v1008
        %v1069 = vadd.f32 %v737, %v1011
        %v1070 = vadd.f32 %v742, %v1016
        %v1071 = vadd.f32 %v745, %v1019
        %v1072 = vadd.f32 %v750, %v1024
        %v1073 = vadd.f32 %v753, %v1027
        %v1074 = vadd.f32 %v758, %v1032
        %v1075 = vadd.f32 %v761, %v1035
        %v1076 = vadd.f32 %v766, %v1040
        %v1077 = vadd.f32 %v769, %v1043
        %s1078 = scalar_lea.vmem %s222, 24
        %v1079 = vld [vmem:[%s1078] sm:$0xff]
        %v1080 = vld [vmem:[%s1078 + $0x8] sm:$0xff]
        %v1081 = vld [vmem:[%s1078 + $0x18] sm:$0xff]
        %v1082 = vld [vmem:[%s1078 + $0x20] sm:$0xff]
        %v1083 = vld [vmem:[%s1078 + $0x30] sm:$0xff]
        %v1084 = vld [vmem:[%s1078 + $0x38] sm:$0xff]
        %v1085 = vld [vmem:[%s1078 + $0x48] sm:$0xff]
        %v1086 = vld [vmem:[%s1078 + $0x50] sm:$0xff]
        %v1087 = vld [vmem:[%s1078 + $0x60] sm:$0xff]
        %v1088 = vld [vmem:[%s1078 + $0x68] sm:$0xff]
        %v1089 = vld [vmem:[%s1078 + $0x78] sm:$0xff]
        %v1090 = vld [vmem:[%s1078 + $0x80] sm:$0xff]
        %v1091 = vld [vmem:[%s1078 + $0x90] sm:$0xff]
        %v1092 = vld [vmem:[%s1078 + $0x98] sm:$0xff]
        %v1093 = vld [vmem:[%s1078 + $0xa8] sm:$0xff]
        %v1094 = vld [vmem:[%s1078 + $0xb0] sm:$0xff]
        %v1095 = vld [vmem:[%s1078 + $0xc0] sm:$0xff]
        %v1096 = vld [vmem:[%s1078 + $0xc8] sm:$0xff]
        %v1097 = vld [vmem:[%s1078 + $0xd8] sm:$0xff]
        %v1098 = vld [vmem:[%s1078 + $0xe0] sm:$0xff]
        %v1099 = vld [vmem:[%s1078 + $0xf0] sm:$0xff]
        %v1100 = vld [vmem:[%s1078 + $0xf8] sm:$0xff]
        %v1101 = vld [vmem:[%s1078 + $0x108] sm:$0xff]
        %v1102 = vld [vmem:[%s1078 + $0x110] sm:$0xff]
        %v1103 = vld [vmem:[%s1078 + $0x120] sm:$0xff]
        %v1104 = vld [vmem:[%s1078 + $0x128] sm:$0xff]
        %v1105 = vld [vmem:[%s1078 + $0x138] sm:$0xff]
        %v1106 = vld [vmem:[%s1078 + $0x140] sm:$0xff]
        %v1107 = vld [vmem:[%s1078 + $0x150] sm:$0xff]
        %v1108 = vld [vmem:[%s1078 + $0x158] sm:$0xff]
        %v1109 = vld [vmem:[%s1078 + $0x168] sm:$0xff]
        %v1110 = vld [vmem:[%s1078 + $0x170] sm:$0xff]
        %v1111 = vpack.c.bf16 %v1080, %v1079
        %v1112 = vpack.c.bf16 %v1082, %v1081
        %v1113 = vpack.c.bf16 %v1084, %v1083
        %v1114 = vpack.c.bf16 %v1086, %v1085
        %v1115 = vpack.c.bf16 %v1088, %v1087
        %v1116 = vpack.c.bf16 %v1090, %v1089
        %v1117 = vpack.c.bf16 %v1092, %v1091
        %v1118 = vpack.c.bf16 %v1094, %v1093
        %v1119 = vpack.c.bf16 %v1096, %v1095
        %v1120 = vpack.c.bf16 %v1098, %v1097
        %v1121 = vpack.c.bf16 %v1100, %v1099
        %v1122 = vpack.c.bf16 %v1102, %v1101
        %v1123 = vpack.c.bf16 %v1104, %v1103
        %v1124 = vpack.c.bf16 %v1106, %v1105
        %v1125 = vpack.c.bf16 %v1108, %v1107
        %v1126 = vpack.c.bf16 %v1110, %v1109
        %s1127 = scalar_lea.vmem %s1, 48
        %v1128 = vld [vmem:[%s1127] sm:$0xf]
        %v1129 = vld [vmem:[%s1127 + $0x4] sm:$0xf]
        %v1130 = vld [vmem:[%s1127 + $0x8] sm:$0xf]
        %v1131 = vld [vmem:[%s1127 + $0xc] sm:$0xf]
        %v1136 = vunpack.c.l.b16 %v1128
        %v1137 = vunpack.c.l.b16 %v1129
        %v1138 = vunpack.c.l.b16 %v1130
        %v1139 = vunpack.c.l.b16 %v1131
        %v1140 = vpack.c.b16 %v1137, %v1136
        %v1141 = vpack.c.b16 %v1139, %v1138
        %v1145 = vsel %vm341, %v1111, 0
        %v1148 = vsel %vm341, %v1112, 0
        %v1151 = vsel %vm341, %v1113, 0
        %v1154 = vsel %vm341, %v1114, 0
        %v1157 = vsel %vm341, %v1115, 0
        %v1160 = vsel %vm341, %v1116, 0
        %v1163 = vsel %vm341, %v1117, 0
        %v1166 = vsel %vm341, %v1118, 0
        %v1169 = vsel %vm341, %v1119, 0
        %v1172 = vsel %vm341, %v1120, 0
        %v1175 = vsel %vm341, %v1121, 0
        %v1178 = vsel %vm341, %v1122, 0
        %v1181 = vsel %vm341, %v1123, 0
        %v1184 = vsel %vm341, %v1124, 0
        %v1187 = vsel %vm341, %v1125, 0
        %v1190 = vsel %vm341, %v1126, 0
        %1192 = vmatprep.subr.bf16.mxu0 0
        %1193 = vmatpush1.bf16.msra.mxu0 %v1140
        %1194 = vmatprep.subr.bf16.mxu0 0
        %1195 = vmatpush1.bf16.msra.mxu0 %v1141
        %1196 = vmatprep.subr.bf16.mxu0 0
        %1197 = vmatpush1.bf16.msra.mxu0 0
        %1198 = vmatprep.subr.bf16.mxu0 0
        %1199 = vmatpush1.bf16.msra.mxu0 0
        %1200 = vmatprep.subr.bf16.mxu0 0
        %1201 = vmatpush1.bf16.msra.mxu0 0
        %1202 = vmatprep.subr.bf16.mxu0 0
        %1203 = vmatpush1.bf16.msra.mxu0 0
        %1204 = vmatprep.subr.bf16.mxu0 0
        %1205 = vmatpush1.bf16.msra.mxu0 0
        %1206 = vmatprep.subr.bf16.mxu0 0
        %1207 = vmatpush1.bf16.msra.mxu0 0
        %1208 = vmatprep.subr.bf16.mxu0 0
        %1209 = vmatpush1.bf16.msra.mxu0 0
        %1210 = vmatprep.subr.bf16.mxu0 0
        %1211 = vmatpush1.bf16.msra.mxu0 0
        %1212 = vmatprep.subr.bf16.mxu0 0
        %1213 = vmatpush1.bf16.msra.mxu0 0
        %1214 = vmatprep.subr.bf16.mxu0 0
        %1215 = vmatpush1.bf16.msra.mxu0 0
        %1216 = vmatprep.subr.bf16.mxu0 0
        %1217 = vmatpush1.bf16.msra.mxu0 0
        %1218 = vmatprep.subr.bf16.mxu0 0
        %1219 = vmatpush1.bf16.msra.mxu0 0
        %1220 = vmatprep.subr.bf16.mxu0 0
        %1221 = vmatpush1.bf16.msra.mxu0 0
        %1222 = vmatprep.subr.bf16.mxu0 0
        %1223 = vmatpush1.bf16.msra.mxu0 0
        %1224 = vmatprep.mubr.bf16.mxu0 0
        %1225 = vmatmul.mubr.bf16.gmra.mrb[0].mxu0 %v1145
        %v1226 = vpop.f32.mrb[0].mxu0
        %v1227 = vadd.f32 0.0, %v1226
        %v1228 = vpop.f32.mrb[0].mxu0
        %v1229 = vpop.f32.mrb[0].mxu0
        %v1230 = vadd.f32 0.0, %v1229
        %v1231 = vpop.f32.mrb[0].mxu0
        %1232 = vmatprep.mubr.bf16.mxu0 0
        %1233 = vmatmul.mubr.bf16.gmra.mrb[0].mxu0 %v1148
        %v1234 = vpop.f32.mrb[0].mxu0
        %v1235 = vadd.f32 0.0, %v1234
        %v1236 = vpop.f32.mrb[0].mxu0
        %v1237 = vpop.f32.mrb[0].mxu0
        %v1238 = vadd.f32 0.0, %v1237
        %v1239 = vpop.f32.mrb[0].mxu0
        %1240 = vmatprep.mubr.bf16.mxu0 0
        %1241 = vmatmul.mubr.bf16.gmra.mrb[0].mxu0 %v1151
        %v1242 = vpop.f32.mrb[0].mxu0
        %v1243 = vadd.f32 0.0, %v1242
        %v1244 = vpop.f32.mrb[0].mxu0
        %v1245 = vpop.f32.mrb[0].mxu0
        %v1246 = vadd.f32 0.0, %v1245
        %v1247 = vpop.f32.mrb[0].mxu0
        %1248 = vmatprep.mubr.bf16.mxu0 0
        %1249 = vmatmul.mubr.bf16.gmra.mrb[0].mxu0 %v1154
        %v1250 = vpop.f32.mrb[0].mxu0
        %v1251 = vadd.f32 0.0, %v1250
        %v1252 = vpop.f32.mrb[0].mxu0
        %v1253 = vpop.f32.mrb[0].mxu0
        %v1254 = vadd.f32 0.0, %v1253
        %v1255 = vpop.f32.mrb[0].mxu0
        %1256 = vmatprep.mubr.bf16.mxu0 0
        %1257 = vmatmul.mubr.bf16.gmra.mrb[0].mxu0 %v1157
        %v1258 = vpop.f32.mrb[0].mxu0
        %v1259 = vadd.f32 0.0, %v1258
        %v1260 = vpop.f32.mrb[0].mxu0
        %v1261 = vpop.f32.mrb[0].mxu0
        %v1262 = vadd.f32 0.0, %v1261
        %v1263 = vpop.f32.mrb[0].mxu0
        %1264 = vmatprep.mubr.bf16.mxu0 0
        %1265 = vmatmul.mubr.bf16.gmra.mrb[0].mxu0 %v1160
        %v1266 = vpop.f32.mrb[0].mxu0
        %v1267 = vadd.f32 0.0, %v1266
        %v1268 = vpop.f32.mrb[0].mxu0
        %v1269 = vpop.f32.mrb[0].mxu0
        %v1270 = vadd.f32 0.0, %v1269
        %v1271 = vpop.f32.mrb[0].mxu0
        %1272 = vmatprep.mubr.bf16.mxu0 0
        %1273 = vmatmul.mubr.bf16.gmra.mrb[0].mxu0 %v1163
        %v1274 = vpop.f32.mrb[0].mxu0
        %v1275 = vadd.f32 0.0, %v1274
        %v1276 = vpop.f32.mrb[0].mxu0
        %v1277 = vpop.f32.mrb[0].mxu0
        %v1278 = vadd.f32 0.0, %v1277
        %v1279 = vpop.f32.mrb[0].mxu0
        %1280 = vmatprep.mubr.bf16.mxu0 0
        %1281 = vmatmul.mubr.bf16.gmra.mrb[0].mxu0 %v1166
        %v1282 = vpop.f32.mrb[0].mxu0
        %v1283 = vadd.f32 0.0, %v1282
        %v1284 = vpop.f32.mrb[0].mxu0
        %v1285 = vpop.f32.mrb[0].mxu0
        %v1286 = vadd.f32 0.0, %v1285
        %v1287 = vpop.f32.mrb[0].mxu0
        %1288 = vmatprep.mubr.bf16.mxu0 0
        %1289 = vmatmul.mubr.bf16.gmra.mrb[0].mxu0 %v1169
        %v1290 = vpop.f32.mrb[0].mxu0
        %v1291 = vadd.f32 0.0, %v1290
        %v1292 = vpop.f32.mrb[0].mxu0
        %v1293 = vpop.f32.mrb[0].mxu0
        %v1294 = vadd.f32 0.0, %v1293
        %v1295 = vpop.f32.mrb[0].mxu0
        %1296 = vmatprep.mubr.bf16.mxu0 0
        %1297 = vmatmul.mubr.bf16.gmra.mrb[0].mxu0 %v1172
        %v1298 = vpop.f32.mrb[0].mxu0
        %v1299 = vadd.f32 0.0, %v1298
        %v1300 = vpop.f32.mrb[0].mxu0
        %v1301 = vpop.f32.mrb[0].mxu0
        %v1302 = vadd.f32 0.0, %v1301
        %v1303 = vpop.f32.mrb[0].mxu0
        %1304 = vmatprep.mubr.bf16.mxu0 0
        %1305 = vmatmul.mubr.bf16.gmra.mrb[0].mxu0 %v1175
        %v1306 = vpop.f32.mrb[0].mxu0
        %v1307 = vadd.f32 0.0, %v1306
        %v1308 = vpop.f32.mrb[0].mxu0
        %v1309 = vpop.f32.mrb[0].mxu0
        %v1310 = vadd.f32 0.0, %v1309
        %v1311 = vpop.f32.mrb[0].mxu0
        %1312 = vmatprep.mubr.bf16.mxu0 0
        %1313 = vmatmul.mubr.bf16.gmra.mrb[0].mxu0 %v1178
        %v1314 = vpop.f32.mrb[0].mxu0
        %v1315 = vadd.f32 0.0, %v1314
        %v1316 = vpop.f32.mrb[0].mxu0
        %v1317 = vpop.f32.mrb[0].mxu0
        %v1318 = vadd.f32 0.0, %v1317
        %v1319 = vpop.f32.mrb[0].mxu0
        %1320 = vmatprep.mubr.bf16.mxu0 0
        %1321 = vmatmul.mubr.bf16.gmra.mrb[0].mxu0 %v1181
        %v1322 = vpop.f32.mrb[0].mxu0
        %v1323 = vadd.f32 0.0, %v1322
        %v1324 = vpop.f32.mrb[0].mxu0
        %v1325 = vpop.f32.mrb[0].mxu0
        %v1326 = vadd.f32 0.0, %v1325
        %v1327 = vpop.f32.mrb[0].mxu0
        %1328 = vmatprep.mubr.bf16.mxu0 0
        %1329 = vmatmul.mubr.bf16.gmra.mrb[0].mxu0 %v1184
        %v1330 = vpop.f32.mrb[0].mxu0
        %v1331 = vadd.f32 0.0, %v1330
        %v1332 = vpop.f32.mrb[0].mxu0
        %v1333 = vpop.f32.mrb[0].mxu0
        %v1334 = vadd.f32 0.0, %v1333
        %v1335 = vpop.f32.mrb[0].mxu0
        %1336 = vmatprep.mubr.bf16.mxu0 0
        %1337 = vmatmul.mubr.bf16.gmra.mrb[0].mxu0 %v1187
        %v1338 = vpop.f32.mrb[0].mxu0
        %v1339 = vadd.f32 0.0, %v1338
        %v1340 = vpop.f32.mrb[0].mxu0
        %v1341 = vpop.f32.mrb[0].mxu0
        %v1342 = vadd.f32 0.0, %v1341
        %v1343 = vpop.f32.mrb[0].mxu0
        %1344 = vmatprep.mubr.bf16.mxu0 0
        %1345 = vmatmul.mubr.bf16.gmra.mrb[0].mxu0 %v1190
        %v1346 = vpop.f32.mrb[0].mxu0
        %v1347 = vadd.f32 0.0, %v1346
        %v1348 = vpop.f32.mrb[0].mxu0
        %v1349 = vpop.f32.mrb[0].mxu0
        %v1350 = vadd.f32 0.0, %v1349
        %v1351 = vpop.f32.mrb[0].mxu0
        %1352 = vdwg.mxu0
        %v1353 = vadd.f32 %v1046, %v1227
        %v1354 = vadd.f32 %v1047, %v1230
        %v1355 = vadd.f32 %v1048, %v1235
        %v1356 = vadd.f32 %v1049, %v1238
        %v1357 = vadd.f32 %v1050, %v1243
        %v1358 = vadd.f32 %v1051, %v1246
        %v1359 = vadd.f32 %v1052, %v1251
        %v1360 = vadd.f32 %v1053, %v1254
        %v1361 = vadd.f32 %v1054, %v1259
        %v1362 = vadd.f32 %v1055, %v1262
        %v1363 = vadd.f32 %v1056, %v1267
        %v1364 = vadd.f32 %v1057, %v1270
        %v1365 = vadd.f32 %v1058, %v1275
        %v1366 = vadd.f32 %v1059, %v1278
        %v1367 = vadd.f32 %v1060, %v1283
        %v1368 = vadd.f32 %v1061, %v1286
        %v1369 = vadd.f32 %v1062, %v1291
        %v1370 = vadd.f32 %v1063, %v1294
        %v1371 = vadd.f32 %v1064, %v1299
        %v1372 = vadd.f32 %v1065, %v1302
        %v1373 = vadd.f32 %v1066, %v1307
        %v1374 = vadd.f32 %v1067, %v1310
        %v1375 = vadd.f32 %v1068, %v1315
        %v1376 = vadd.f32 %v1069, %v1318
        %v1377 = vadd.f32 %v1070, %v1323
        %v1378 = vadd.f32 %v1071, %v1326
        %v1379 = vadd.f32 %v1072, %v1331
        %v1380 = vadd.f32 %v1073, %v1334
        %v1381 = vadd.f32 %v1074, %v1339
        %v1382 = vadd.f32 %v1075, %v1342
        %v1383 = vadd.f32 %v1076, %v1347
        %v1384 = vadd.f32 %v1077, %v1350
        %v1385 = vld [vmem:[%s1078 + $0x1] sm:$0xff]
        %v1386 = vld [vmem:[%s1078 + $0x9] sm:$0xff]
        %v1387 = vld [vmem:[%s1078 + $0x19] sm:$0xff]
        %v1388 = vld [vmem:[%s1078 + $0x21] sm:$0xff]
        %v1389 = vld [vmem:[%s1078 + $0x31] sm:$0xff]
        %v1390 = vld [vmem:[%s1078 + $0x39] sm:$0xff]
        %v1391 = vld [vmem:[%s1078 + $0x49] sm:$0xff]
        %v1392 = vld [vmem:[%s1078 + $0x51] sm:$0xff]
        %v1393 = vld [vmem:[%s1078 + $0x61] sm:$0xff]
        %v1394 = vld [vmem:[%s1078 + $0x69] sm:$0xff]
        %v1395 = vld [vmem:[%s1078 + $0x79] sm:$0xff]
        %v1396 = vld [vmem:[%s1078 + $0x81] sm:$0xff]
        %v1397 = vld [vmem:[%s1078 + $0x91] sm:$0xff]
        %v1398 = vld [vmem:[%s1078 + $0x99] sm:$0xff]
        %v1399 = vld [vmem:[%s1078 + $0xa9] sm:$0xff]
        %v1400 = vld [vmem:[%s1078 + $0xb1] sm:$0xff]
        %v1401 = vld [vmem:[%s1078 + $0xc1] sm:$0xff]
        %v1402 = vld [vmem:[%s1078 + $0xc9] sm:$0xff]
        %v1403 = vld [vmem:[%s1078 + $0xd9] sm:$0xff]
        %v1404 = vld [vmem:[%s1078 + $0xe1] sm:$0xff]
        %v1405 = vld [vmem:[%s1078 + $0xf1] sm:$0xff]
        %v1406 = vld [vmem:[%s1078 + $0xf9] sm:$0xff]
        %v1407 = vld [vmem:[%s1078 + $0x109] sm:$0xff]
        %v1408 = vld [vmem:[%s1078 + $0x111] sm:$0xff]
        %v1409 = vld [vmem:[%s1078 + $0x121] sm:$0xff]
        %v1410 = vld [vmem:[%s1078 + $0x129] sm:$0xff]
        %v1411 = vld [vmem:[%s1078 + $0x139] sm:$0xff]
        %v1412 = vld [vmem:[%s1078 + $0x141] sm:$0xff]
        %v1413 = vld [vmem:[%s1078 + $0x151] sm:$0xff]
        %v1414 = vld [vmem:[%s1078 + $0x159] sm:$0xff]
        %v1415 = vld [vmem:[%s1078 + $0x169] sm:$0xff]
        %v1416 = vld [vmem:[%s1078 + $0x171] sm:$0xff]
        %v1417 = vpack.c.bf16 %v1386, %v1385
        %v1418 = vpack.c.bf16 %v1388, %v1387
        %v1419 = vpack.c.bf16 %v1390, %v1389
        %v1420 = vpack.c.bf16 %v1392, %v1391
        %v1421 = vpack.c.bf16 %v1394, %v1393
        %v1422 = vpack.c.bf16 %v1396, %v1395
        %v1423 = vpack.c.bf16 %v1398, %v1397
        %v1424 = vpack.c.bf16 %v1400, %v1399
        %v1425 = vpack.c.bf16 %v1402, %v1401
        %v1426 = vpack.c.bf16 %v1404, %v1403
        %v1427 = vpack.c.bf16 %v1406, %v1405
        %v1428 = vpack.c.bf16 %v1408, %v1407
        %v1429 = vpack.c.bf16 %v1410, %v1409
        %v1430 = vpack.c.bf16 %v1412, %v1411
        %v1431 = vpack.c.bf16 %v1414, %v1413
        %v1432 = vpack.c.bf16 %v1416, %v1415
        %s1433 = scalar_lea.vmem %s1, 64
        %v1434 = vld [vmem:[%s1433] sm:$0xf]
        %v1435 = vld [vmem:[%s1433 + $0x4] sm:$0xf]
        %v1436 = vld [vmem:[%s1433 + $0x8] sm:$0xf]
        %v1437 = vld [vmem:[%s1433 + $0xc] sm:$0xf]
        %v1442 = vunpack.c.l.b16 %v1434
        %v1443 = vunpack.c.l.b16 %v1435
        %v1444 = vunpack.c.l.b16 %v1436
        %v1445 = vunpack.c.l.b16 %v1437
        %v1446 = vpack.c.b16 %v1443, %v1442
        %v1447 = vpack.c.b16 %v1445, %v1444
        %v1451 = vsel %vm341, %v1417, 0
        %v1454 = vsel %vm341, %v1418, 0
        %v1457 = vsel %vm341, %v1419, 0
        %v1460 = vsel %vm341, %v1420, 0
        %v1463 = vsel %vm341, %v1421, 0
        %v1466 = vsel %vm341, %v1422, 0
        %v1469 = vsel %vm341, %v1423, 0
        %v1472 = vsel %vm341, %v1424, 0
        %v1475 = vsel %vm341, %v1425, 0
        %v1478 = vsel %vm341, %v1426, 0
        %v1481 = vsel %vm341, %v1427, 0
        %v1484 = vsel %vm341, %v1428, 0
        %v1487 = vsel %vm341, %v1429, 0
        %v1490 = vsel %vm341, %v1430, 0
        %v1493 = vsel %vm341, %v1431, 0
        %v1496 = vsel %vm341, %v1432, 0
        %1498 = vmatprep.subr.bf16.mxu0 0
        %1499 = vmatpush1.bf16.msra.mxu0 %v1446
        %1500 = vmatprep.subr.bf16.mxu0 0
        %1501 = vmatpush1.bf16.msra.mxu0 %v1447
        %1502 = vmatprep.subr.bf16.mxu0 0
        %1503 = vmatpush1.bf16.msra.mxu0 0
        %1504 = vmatprep.subr.bf16.mxu0 0
        %1505 = vmatpush1.bf16.msra.mxu0 0
        %1506 = vmatprep.subr.bf16.mxu0 0
        %1507 = vmatpush1.bf16.msra.mxu0 0
        %1508 = vmatprep.subr.bf16.mxu0 0
        %1509 = vmatpush1.bf16.msra.mxu0 0
        %1510 = vmatprep.subr.bf16.mxu0 0
        %1511 = vmatpush1.bf16.msra.mxu0 0
        %1512 = vmatprep.subr.bf16.mxu0 0
        %1513 = vmatpush1.bf16.msra.mxu0 0
        %1514 = vmatprep.subr.bf16.mxu0 0
        %1515 = vmatpush1.bf16.msra.mxu0 0
        %1516 = vmatprep.subr.bf16.mxu0 0
        %1517 = vmatpush1.bf16.msra.mxu0 0
        %1518 = vmatprep.subr.bf16.mxu0 0
        %1519 = vmatpush1.bf16.msra.mxu0 0
        %1520 = vmatprep.subr.bf16.mxu0 0
        %1521 = vmatpush1.bf16.msra.mxu0 0
        %1522 = vmatprep.subr.bf16.mxu0 0
        %1523 = vmatpush1.bf16.msra.mxu0 0
        %1524 = vmatprep.subr.bf16.mxu0 0
        %1525 = vmatpush1.bf16.msra.mxu0 0
        %1526 = vmatprep.subr.bf16.mxu0 0
        %1527 = vmatpush1.bf16.msra.mxu0 0
        %1528 = vmatprep.subr.bf16.mxu0 0
        %1529 = vmatpush1.bf16.msra.mxu0 0
        %1530 = vmatprep.mubr.bf16.mxu0 0
        %1531 = vmatmul.mubr.bf16.gmra.mrb[0].mxu0 %v1451
        %v1532 = vpop.f32.mrb[0].mxu0
        %v1533 = vadd.f32 0.0, %v1532
        %v1534 = vpop.f32.mrb[0].mxu0
        %v1535 = vpop.f32.mrb[0].mxu0
        %v1536 = vadd.f32 0.0, %v1535
        %v1537 = vpop.f32.mrb[0].mxu0
        %1538 = vmatprep.mubr.bf16.mxu0 0
        %1539 = vmatmul.mubr.bf16.gmra.mrb[0].mxu0 %v1454
        %v1540 = vpop.f32.mrb[0].mxu0
        %v1541 = vadd.f32 0.0, %v1540
        %v1542 = vpop.f32.mrb[0].mxu0
        %v1543 = vpop.f32.mrb[0].mxu0
        %v1544 = vadd.f32 0.0, %v1543
        %v1545 = vpop.f32.mrb[0].mxu0
        %1546 = vmatprep.mubr.bf16.mxu0 0
        %1547 = vmatmul.mubr.bf16.gmra.mrb[0].mxu0 %v1457
        %v1548 = vpop.f32.mrb[0].mxu0
        %v1549 = vadd.f32 0.0, %v1548
        %v1550 = vpop.f32.mrb[0].mxu0
        %v1551 = vpop.f32.mrb[0].mxu0
        %v1552 = vadd.f32 0.0, %v1551
        %v1553 = vpop.f32.mrb[0].mxu0
        %1554 = vmatprep.mubr.bf16.mxu0 0
        %1555 = vmatmul.mubr.bf16.gmra.mrb[0].mxu0 %v1460
        %v1556 = vpop.f32.mrb[0].mxu0
        %v1557 = vadd.f32 0.0, %v1556
        %v1558 = vpop.f32.mrb[0].mxu0
        %v1559 = vpop.f32.mrb[0].mxu0
        %v1560 = vadd.f32 0.0, %v1559
        %v1561 = vpop.f32.mrb[0].mxu0
        %1562 = vmatprep.mubr.bf16.mxu0 0
        %1563 = vmatmul.mubr.bf16.gmra.mrb[0].mxu0 %v1463
        %v1564 = vpop.f32.mrb[0].mxu0
        %v1565 = vadd.f32 0.0, %v1564
        %v1566 = vpop.f32.mrb[0].mxu0
        %v1567 = vpop.f32.mrb[0].mxu0
        %v1568 = vadd.f32 0.0, %v1567
        %v1569 = vpop.f32.mrb[0].mxu0
        %1570 = vmatprep.mubr.bf16.mxu0 0
        %1571 = vmatmul.mubr.bf16.gmra.mrb[0].mxu0 %v1466
        %v1572 = vpop.f32.mrb[0].mxu0
        %v1573 = vadd.f32 0.0, %v1572
        %v1574 = vpop.f32.mrb[0].mxu0
        %v1575 = vpop.f32.mrb[0].mxu0
        %v1576 = vadd.f32 0.0, %v1575
        %v1577 = vpop.f32.mrb[0].mxu0
        %1578 = vmatprep.mubr.bf16.mxu0 0
        %1579 = vmatmul.mubr.bf16.gmra.mrb[0].mxu0 %v1469
        %v1580 = vpop.f32.mrb[0].mxu0
        %v1581 = vadd.f32 0.0, %v1580
        %v1582 = vpop.f32.mrb[0].mxu0
        %v1583 = vpop.f32.mrb[0].mxu0
        %v1584 = vadd.f32 0.0, %v1583
        %v1585 = vpop.f32.mrb[0].mxu0
        %1586 = vmatprep.mubr.bf16.mxu0 0
        %1587 = vmatmul.mubr.bf16.gmra.mrb[0].mxu0 %v1472
        %v1588 = vpop.f32.mrb[0].mxu0
        %v1589 = vadd.f32 0.0, %v1588
        %v1590 = vpop.f32.mrb[0].mxu0
        %v1591 = vpop.f32.mrb[0].mxu0
        %v1592 = vadd.f32 0.0, %v1591
        %v1593 = vpop.f32.mrb[0].mxu0
        %1594 = vmatprep.mubr.bf16.mxu0 0
        %1595 = vmatmul.mubr.bf16.gmra.mrb[0].mxu0 %v1475
        %v1596 = vpop.f32.mrb[0].mxu0
        %v1597 = vadd.f32 0.0, %v1596
        %v1598 = vpop.f32.mrb[0].mxu0
        %v1599 = vpop.f32.mrb[0].mxu0
        %v1600 = vadd.f32 0.0, %v1599
        %v1601 = vpop.f32.mrb[0].mxu0
        %1602 = vmatprep.mubr.bf16.mxu0 0
        %1603 = vmatmul.mubr.bf16.gmra.mrb[0].mxu0 %v1478
        %v1604 = vpop.f32.mrb[0].mxu0
        %v1605 = vadd.f32 0.0, %v1604
        %v1606 = vpop.f32.mrb[0].mxu0
        %v1607 = vpop.f32.mrb[0].mxu0
        %v1608 = vadd.f32 0.0, %v1607
        %v1609 = vpop.f32.mrb[0].mxu0
        %1610 = vmatprep.mubr.bf16.mxu0 0
        %1611 = vmatmul.mubr.bf16.gmra.mrb[0].mxu0 %v1481
        %v1612 = vpop.f32.mrb[0].mxu0
        %v1613 = vadd.f32 0.0, %v1612
        %v1614 = vpop.f32.mrb[0].mxu0
        %v1615 = vpop.f32.mrb[0].mxu0
        %v1616 = vadd.f32 0.0, %v1615
        %v1617 = vpop.f32.mrb[0].mxu0
        %1618 = vmatprep.mubr.bf16.mxu0 0
        %1619 = vmatmul.mubr.bf16.gmra.mrb[0].mxu0 %v1484
        %v1620 = vpop.f32.mrb[0].mxu0
        %v1621 = vadd.f32 0.0, %v1620
        %v1622 = vpop.f32.mrb[0].mxu0
        %v1623 = vpop.f32.mrb[0].mxu0
        %v1624 = vadd.f32 0.0, %v1623
        %v1625 = vpop.f32.mrb[0].mxu0
        %1626 = vmatprep.mubr.bf16.mxu0 0
        %1627 = vmatmul.mubr.bf16.gmra.mrb[0].mxu0 %v1487
        %v1628 = vpop.f32.mrb[0].mxu0
        %v1629 = vadd.f32 0.0, %v1628
        %v1630 = vpop.f32.mrb[0].mxu0
        %v1631 = vpop.f32.mrb[0].mxu0
        %v1632 = vadd.f32 0.0, %v1631
        %v1633 = vpop.f32.mrb[0].mxu0
        %1634 = vmatprep.mubr.bf16.mxu0 0
        %1635 = vmatmul.mubr.bf16.gmra.mrb[0].mxu0 %v1490
        %v1636 = vpop.f32.mrb[0].mxu0
        %v1637 = vadd.f32 0.0, %v1636
        %v1638 = vpop.f32.mrb[0].mxu0
        %v1639 = vpop.f32.mrb[0].mxu0
        %v1640 = vadd.f32 0.0, %v1639
        %v1641 = vpop.f32.mrb[0].mxu0
        %1642 = vmatprep.mubr.bf16.mxu0 0
        %1643 = vmatmul.mubr.bf16.gmra.mrb[0].mxu0 %v1493
        %v1644 = vpop.f32.mrb[0].mxu0
        %v1645 = vadd.f32 0.0, %v1644
        %v1646 = vpop.f32.mrb[0].mxu0
        %v1647 = vpop.f32.mrb[0].mxu0
        %v1648 = vadd.f32 0.0, %v1647
        %v1649 = vpop.f32.mrb[0].mxu0
        %1650 = vmatprep.mubr.bf16.mxu0 0
        %1651 = vmatmul.mubr.bf16.gmra.mrb[0].mxu0 %v1496
        %v1652 = vpop.f32.mrb[0].mxu0
        %v1653 = vadd.f32 0.0, %v1652
        %v1654 = vpop.f32.mrb[0].mxu0
        %v1655 = vpop.f32.mrb[0].mxu0
        %v1656 = vadd.f32 0.0, %v1655
        %v1657 = vpop.f32.mrb[0].mxu0
        %1658 = vdwg.mxu0
        %v1659 = vadd.f32 %v1353, %v1533
        %v1660 = vadd.f32 %v1354, %v1536
        %v1661 = vadd.f32 %v1355, %v1541
        %v1662 = vadd.f32 %v1356, %v1544
        %v1663 = vadd.f32 %v1357, %v1549
        %v1664 = vadd.f32 %v1358, %v1552
        %v1665 = vadd.f32 %v1359, %v1557
        %v1666 = vadd.f32 %v1360, %v1560
        %v1667 = vadd.f32 %v1361, %v1565
        %v1668 = vadd.f32 %v1362, %v1568
        %v1669 = vadd.f32 %v1363, %v1573
        %v1670 = vadd.f32 %v1364, %v1576
        %v1671 = vadd.f32 %v1365, %v1581
        %v1672 = vadd.f32 %v1366, %v1584
        %v1673 = vadd.f32 %v1367, %v1589
        %v1674 = vadd.f32 %v1368, %v1592
        %v1675 = vadd.f32 %v1369, %v1597
        %v1676 = vadd.f32 %v1370, %v1600
        %v1677 = vadd.f32 %v1371, %v1605
        %v1678 = vadd.f32 %v1372, %v1608
        %v1679 = vadd.f32 %v1373, %v1613
        %v1680 = vadd.f32 %v1374, %v1616
        %v1681 = vadd.f32 %v1375, %v1621
        %v1682 = vadd.f32 %v1376, %v1624
        %v1683 = vadd.f32 %v1377, %v1629
        %v1684 = vadd.f32 %v1378, %v1632
        %v1685 = vadd.f32 %v1379, %v1637
        %v1686 = vadd.f32 %v1380, %v1640
        %v1687 = vadd.f32 %v1381, %v1645
        %v1688 = vadd.f32 %v1382, %v1648
        %v1689 = vadd.f32 %v1383, %v1653
        %v1690 = vadd.f32 %v1384, %v1656
        %v1691 = vld [vmem:[%s1078 + $0x2] sm:$0xff]
        %v1692 = vld [vmem:[%s1078 + $0xa] sm:$0xff]
        %v1693 = vld [vmem:[%s1078 + $0x1a] sm:$0xff]
        %v1694 = vld [vmem:[%s1078 + $0x22] sm:$0xff]
        %v1695 = vld [vmem:[%s1078 + $0x32] sm:$0xff]
        %v1696 = vld [vmem:[%s1078 + $0x3a] sm:$0xff]
        %v1697 = vld [vmem:[%s1078 + $0x4a] sm:$0xff]
        %v1698 = vld [vmem:[%s1078 + $0x52] sm:$0xff]
        %v1699 = vld [vmem:[%s1078 + $0x62] sm:$0xff]
        %v1700 = vld [vmem:[%s1078 + $0x6a] sm:$0xff]
        %v1701 = vld [vmem:[%s1078 + $0x7a] sm:$0xff]
        %v1702 = vld [vmem:[%s1078 + $0x82] sm:$0xff]
        %v1703 = vld [vmem:[%s1078 + $0x92] sm:$0xff]
        %v1704 = vld [vmem:[%s1078 + $0x9a] sm:$0xff]
        %v1705 = vld [vmem:[%s1078 + $0xaa] sm:$0xff]
        %v1706 = vld [vmem:[%s1078 + $0xb2] sm:$0xff]
        %v1707 = vld [vmem:[%s1078 + $0xc2] sm:$0xff]
        %v1708 = vld [vmem:[%s1078 + $0xca] sm:$0xff]
        %v1709 = vld [vmem:[%s1078 + $0xda] sm:$0xff]
        %v1710 = vld [vmem:[%s1078 + $0xe2] sm:$0xff]
        %v1711 = vld [vmem:[%s1078 + $0xf2] sm:$0xff]
        %v1712 = vld [vmem:[%s1078 + $0xfa] sm:$0xff]
        %v1713 = vld [vmem:[%s1078 + $0x10a] sm:$0xff]
        %v1714 = vld [vmem:[%s1078 + $0x112] sm:$0xff]
        %v1715 = vld [vmem:[%s1078 + $0x122] sm:$0xff]
        %v1716 = vld [vmem:[%s1078 + $0x12a] sm:$0xff]
        %v1717 = vld [vmem:[%s1078 + $0x13a] sm:$0xff]
        %v1718 = vld [vmem:[%s1078 + $0x142] sm:$0xff]
        %v1719 = vld [vmem:[%s1078 + $0x152] sm:$0xff]
        %v1720 = vld [vmem:[%s1078 + $0x15a] sm:$0xff]
        %v1721 = vld [vmem:[%s1078 + $0x16a] sm:$0xff]
        %v1722 = vld [vmem:[%s1078 + $0x172] sm:$0xff]
        %v1723 = vpack.c.bf16 %v1692, %v1691
        %v1724 = vpack.c.bf16 %v1694, %v1693
        %v1725 = vpack.c.bf16 %v1696, %v1695
        %v1726 = vpack.c.bf16 %v1698, %v1697
        %v1727 = vpack.c.bf16 %v1700, %v1699
        %v1728 = vpack.c.bf16 %v1702, %v1701
        %v1729 = vpack.c.bf16 %v1704, %v1703
        %v1730 = vpack.c.bf16 %v1706, %v1705
        %v1731 = vpack.c.bf16 %v1708, %v1707
        %v1732 = vpack.c.bf16 %v1710, %v1709
        %v1733 = vpack.c.bf16 %v1712, %v1711
        %v1734 = vpack.c.bf16 %v1714, %v1713
        %v1735 = vpack.c.bf16 %v1716, %v1715
        %v1736 = vpack.c.bf16 %v1718, %v1717
        %v1737 = vpack.c.bf16 %v1720, %v1719
        %v1738 = vpack.c.bf16 %v1722, %v1721
        %s1739 = scalar_lea.vmem %s1, 80
        %v1740 = vld [vmem:[%s1739] sm:$0xf]
        %v1741 = vld [vmem:[%s1739 + $0x4] sm:$0xf]
        %v1742 = vld [vmem:[%s1739 + $0x8] sm:$0xf]
        %v1743 = vld [vmem:[%s1739 + $0xc] sm:$0xf]
        %v1748 = vunpack.c.l.b16 %v1740
        %v1749 = vunpack.c.l.b16 %v1741
        %v1750 = vunpack.c.l.b16 %v1742
        %v1751 = vunpack.c.l.b16 %v1743
        %v1752 = vpack.c.b16 %v1749, %v1748
        %v1753 = vpack.c.b16 %v1751, %v1750
        %v1757 = vsel %vm341, %v1723, 0
        %v1760 = vsel %vm341, %v1724, 0
        %v1763 = vsel %vm341, %v1725, 0
        %v1766 = vsel %vm341, %v1726, 0
        %v1769 = vsel %vm341, %v1727, 0
        %v1772 = vsel %vm341, %v1728, 0
        %v1775 = vsel %vm341, %v1729, 0
        %v1778 = vsel %vm341, %v1730, 0
        %v1781 = vsel %vm341, %v1731, 0
        %v1784 = vsel %vm341, %v1732, 0
        %v1787 = vsel %vm341, %v1733, 0
        %v1790 = vsel %vm341, %v1734, 0
        %v1793 = vsel %vm341, %v1735, 0
        %v1796 = vsel %vm341, %v1736, 0
        %v1799 = vsel %vm341, %v1737, 0
        %v1802 = vsel %vm341, %v1738, 0
        %1804 = vmatprep.subr.bf16.mxu0 0
        %1805 = vmatpush1.bf16.msra.mxu0 %v1752
        %1806 = vmatprep.subr.bf16.mxu0 0
        %1807 = vmatpush1.bf16.msra.mxu0 %v1753
        %1808 = vmatprep.subr.bf16.mxu0 0
        %1809 = vmatpush1.bf16.msra.mxu0 0
        %1810 = vmatprep.subr.bf16.mxu0 0
        %1811 = vmatpush1.bf16.msra.mxu0 0
        %1812 = vmatprep.subr.bf16.mxu0 0
        %1813 = vmatpush1.bf16.msra.mxu0 0
        %1814 = vmatprep.subr.bf16.mxu0 0
        %1815 = vmatpush1.bf16.msra.mxu0 0
        %1816 = vmatprep.subr.bf16.mxu0 0
        %1817 = vmatpush1.bf16.msra.mxu0 0
        %1818 = vmatprep.subr.bf16.mxu0 0
        %1819 = vmatpush1.bf16.msra.mxu0 0
        %1820 = vmatprep.subr.bf16.mxu0 0
        %1821 = vmatpush1.bf16.msra.mxu0 0
        %1822 = vmatprep.subr.bf16.mxu0 0
        %1823 = vmatpush1.bf16.msra.mxu0 0
        %1824 = vmatprep.subr.bf16.mxu0 0
        %1825 = vmatpush1.bf16.msra.mxu0 0
        %1826 = vmatprep.subr.bf16.mxu0 0
        %1827 = vmatpush1.bf16.msra.mxu0 0
        %1828 = vmatprep.subr.bf16.mxu0 0
        %1829 = vmatpush1.bf16.msra.mxu0 0
        %1830 = vmatprep.subr.bf16.mxu0 0
        %1831 = vmatpush1.bf16.msra.mxu0 0
        %1832 = vmatprep.subr.bf16.mxu0 0
        %1833 = vmatpush1.bf16.msra.mxu0 0
        %1834 = vmatprep.subr.bf16.mxu0 0
        %1835 = vmatpush1.bf16.msra.mxu0 0
        %1836 = vmatprep.mubr.bf16.mxu0 0
        %1837 = vmatmul.mubr.bf16.gmra.mrb[0].mxu0 %v1757
        %v1838 = vpop.f32.mrb[0].mxu0
        %v1839 = vadd.f32 0.0, %v1838
        %v1840 = vpop.f32.mrb[0].mxu0
        %v1841 = vpop.f32.mrb[0].mxu0
        %v1842 = vadd.f32 0.0, %v1841
        %v1843 = vpop.f32.mrb[0].mxu0
        %1844 = vmatprep.mubr.bf16.mxu0 0
        %1845 = vmatmul.mubr.bf16.gmra.mrb[0].mxu0 %v1760
        %v1846 = vpop.f32.mrb[0].mxu0
        %v1847 = vadd.f32 0.0, %v1846
        %v1848 = vpop.f32.mrb[0].mxu0
        %v1849 = vpop.f32.mrb[0].mxu0
        %v1850 = vadd.f32 0.0, %v1849
        %v1851 = vpop.f32.mrb[0].mxu0
        %1852 = vmatprep.mubr.bf16.mxu0 0
        %1853 = vmatmul.mubr.bf16.gmra.mrb[0].mxu0 %v1763
        %v1854 = vpop.f32.mrb[0].mxu0
        %v1855 = vadd.f32 0.0, %v1854
        %v1856 = vpop.f32.mrb[0].mxu0
        %v1857 = vpop.f32.mrb[0].mxu0
        %v1858 = vadd.f32 0.0, %v1857
        %v1859 = vpop.f32.mrb[0].mxu0
        %1860 = vmatprep.mubr.bf16.mxu0 0
        %1861 = vmatmul.mubr.bf16.gmra.mrb[0].mxu0 %v1766
        %v1862 = vpop.f32.mrb[0].mxu0
        %v1863 = vadd.f32 0.0, %v1862
        %v1864 = vpop.f32.mrb[0].mxu0
        %v1865 = vpop.f32.mrb[0].mxu0
        %v1866 = vadd.f32 0.0, %v1865
        %v1867 = vpop.f32.mrb[0].mxu0
        %1868 = vmatprep.mubr.bf16.mxu0 0
        %1869 = vmatmul.mubr.bf16.gmra.mrb[0].mxu0 %v1769
        %v1870 = vpop.f32.mrb[0].mxu0
        %v1871 = vadd.f32 0.0, %v1870
        %v1872 = vpop.f32.mrb[0].mxu0
        %v1873 = vpop.f32.mrb[0].mxu0
        %v1874 = vadd.f32 0.0, %v1873
        %v1875 = vpop.f32.mrb[0].mxu0
        %1876 = vmatprep.mubr.bf16.mxu0 0
        %1877 = vmatmul.mubr.bf16.gmra.mrb[0].mxu0 %v1772
        %v1878 = vpop.f32.mrb[0].mxu0
        %v1879 = vadd.f32 0.0, %v1878
        %v1880 = vpop.f32.mrb[0].mxu0
        %v1881 = vpop.f32.mrb[0].mxu0
        %v1882 = vadd.f32 0.0, %v1881
        %v1883 = vpop.f32.mrb[0].mxu0
        %1884 = vmatprep.mubr.bf16.mxu0 0
        %1885 = vmatmul.mubr.bf16.gmra.mrb[0].mxu0 %v1775
        %v1886 = vpop.f32.mrb[0].mxu0
        %v1887 = vadd.f32 0.0, %v1886
        %v1888 = vpop.f32.mrb[0].mxu0
        %v1889 = vpop.f32.mrb[0].mxu0
        %v1890 = vadd.f32 0.0, %v1889
        %v1891 = vpop.f32.mrb[0].mxu0
        %1892 = vmatprep.mubr.bf16.mxu0 0
        %1893 = vmatmul.mubr.bf16.gmra.mrb[0].mxu0 %v1778
        %v1894 = vpop.f32.mrb[0].mxu0
        %v1895 = vadd.f32 0.0, %v1894
        %v1896 = vpop.f32.mrb[0].mxu0
        %v1897 = vpop.f32.mrb[0].mxu0
        %v1898 = vadd.f32 0.0, %v1897
        %v1899 = vpop.f32.mrb[0].mxu0
        %1900 = vmatprep.mubr.bf16.mxu0 0
        %1901 = vmatmul.mubr.bf16.gmra.mrb[0].mxu0 %v1781
        %v1902 = vpop.f32.mrb[0].mxu0
        %v1903 = vadd.f32 0.0, %v1902
        %v1904 = vpop.f32.mrb[0].mxu0
        %v1905 = vpop.f32.mrb[0].mxu0
        %v1906 = vadd.f32 0.0, %v1905
        %v1907 = vpop.f32.mrb[0].mxu0
        %1908 = vmatprep.mubr.bf16.mxu0 0
        %1909 = vmatmul.mubr.bf16.gmra.mrb[0].mxu0 %v1784
        %v1910 = vpop.f32.mrb[0].mxu0
        %v1911 = vadd.f32 0.0, %v1910
        %v1912 = vpop.f32.mrb[0].mxu0
        %v1913 = vpop.f32.mrb[0].mxu0
        %v1914 = vadd.f32 0.0, %v1913
        %v1915 = vpop.f32.mrb[0].mxu0
        %1916 = vmatprep.mubr.bf16.mxu0 0
        %1917 = vmatmul.mubr.bf16.gmra.mrb[0].mxu0 %v1787
        %v1918 = vpop.f32.mrb[0].mxu0
        %v1919 = vadd.f32 0.0, %v1918
        %v1920 = vpop.f32.mrb[0].mxu0
        %v1921 = vpop.f32.mrb[0].mxu0
        %v1922 = vadd.f32 0.0, %v1921
        %v1923 = vpop.f32.mrb[0].mxu0
        %1924 = vmatprep.mubr.bf16.mxu0 0
        %1925 = vmatmul.mubr.bf16.gmra.mrb[0].mxu0 %v1790
        %v1926 = vpop.f32.mrb[0].mxu0
        %v1927 = vadd.f32 0.0, %v1926
        %v1928 = vpop.f32.mrb[0].mxu0
        %v1929 = vpop.f32.mrb[0].mxu0
        %v1930 = vadd.f32 0.0, %v1929
        %v1931 = vpop.f32.mrb[0].mxu0
        %1932 = vmatprep.mubr.bf16.mxu0 0
        %1933 = vmatmul.mubr.bf16.gmra.mrb[0].mxu0 %v1793
        %v1934 = vpop.f32.mrb[0].mxu0
        %v1935 = vadd.f32 0.0, %v1934
        %v1936 = vpop.f32.mrb[0].mxu0
        %v1937 = vpop.f32.mrb[0].mxu0
        %v1938 = vadd.f32 0.0, %v1937
        %v1939 = vpop.f32.mrb[0].mxu0
        %1940 = vmatprep.mubr.bf16.mxu0 0
        %1941 = vmatmul.mubr.bf16.gmra.mrb[0].mxu0 %v1796
        %v1942 = vpop.f32.mrb[0].mxu0
        %v1943 = vadd.f32 0.0, %v1942
        %v1944 = vpop.f32.mrb[0].mxu0
        %v1945 = vpop.f32.mrb[0].mxu0
        %v1946 = vadd.f32 0.0, %v1945
        %v1947 = vpop.f32.mrb[0].mxu0
        %1948 = vmatprep.mubr.bf16.mxu0 0
        %1949 = vmatmul.mubr.bf16.gmra.mrb[0].mxu0 %v1799
        %v1950 = vpop.f32.mrb[0].mxu0
        %v1951 = vadd.f32 0.0, %v1950
        %v1952 = vpop.f32.mrb[0].mxu0
        %v1953 = vpop.f32.mrb[0].mxu0
        %v1954 = vadd.f32 0.0, %v1953
        %v1955 = vpop.f32.mrb[0].mxu0
        %1956 = vmatprep.mubr.bf16.mxu0 0
        %1957 = vmatmul.mubr.bf16.gmra.mrb[0].mxu0 %v1802
        %v1958 = vpop.f32.mrb[0].mxu0
        %v1959 = vadd.f32 0.0, %v1958
        %v1960 = vpop.f32.mrb[0].mxu0
        %v1961 = vpop.f32.mrb[0].mxu0
        %v1962 = vadd.f32 0.0, %v1961
        %v1963 = vpop.f32.mrb[0].mxu0
        %1964 = vdwg.mxu0
        %v1965 = vadd.f32 %v1659, %v1839
        %v1966 = vadd.f32 %v1660, %v1842
        %v1967 = vadd.f32 %v1661, %v1847
        %v1968 = vadd.f32 %v1662, %v1850
        %v1969 = vadd.f32 %v1663, %v1855
        %v1970 = vadd.f32 %v1664, %v1858
        %v1971 = vadd.f32 %v1665, %v1863
        %v1972 = vadd.f32 %v1666, %v1866
        %v1973 = vadd.f32 %v1667, %v1871
        %v1974 = vadd.f32 %v1668, %v1874
        %v1975 = vadd.f32 %v1669, %v1879
        %v1976 = vadd.f32 %v1670, %v1882
        %v1977 = vadd.f32 %v1671, %v1887
        %v1978 = vadd.f32 %v1672, %v1890
        %v1979 = vadd.f32 %v1673, %v1895
        %v1980 = vadd.f32 %v1674, %v1898
        %v1981 = vadd.f32 %v1675, %v1903
        %v1982 = vadd.f32 %v1676, %v1906
        %v1983 = vadd.f32 %v1677, %v1911
        %v1984 = vadd.f32 %v1678, %v1914
        %v1985 = vadd.f32 %v1679, %v1919
        %v1986 = vadd.f32 %v1680, %v1922
        %v1987 = vadd.f32 %v1681, %v1927
        %v1988 = vadd.f32 %v1682, %v1930
        %v1989 = vadd.f32 %v1683, %v1935
        %v1990 = vadd.f32 %v1684, %v1938
        %v1991 = vadd.f32 %v1685, %v1943
        %v1992 = vadd.f32 %v1686, %v1946
        %v1993 = vadd.f32 %v1687, %v1951
        %v1994 = vadd.f32 %v1688, %v1954
        %v1995 = vadd.f32 %v1689, %v1959
        %v1996 = vadd.f32 %v1690, %v1962
        %s1997 = scalar_lea.vmem %s222, 48
        %v1998 = vld [vmem:[%s1997] sm:$0xff]
        %v1999 = vld [vmem:[%s1997 + $0x8] sm:$0xff]
        %v2000 = vld [vmem:[%s1997 + $0x18] sm:$0xff]
        %v2001 = vld [vmem:[%s1997 + $0x20] sm:$0xff]
        %v2002 = vld [vmem:[%s1997 + $0x30] sm:$0xff]
        %v2003 = vld [vmem:[%s1997 + $0x38] sm:$0xff]
        %v2004 = vld [vmem:[%s1997 + $0x48] sm:$0xff]
        %v2005 = vld [vmem:[%s1997 + $0x50] sm:$0xff]
        %v2006 = vld [vmem:[%s1997 + $0x60] sm:$0xff]
        %v2007 = vld [vmem:[%s1997 + $0x68] sm:$0xff]
        %v2008 = vld [vmem:[%s1997 + $0x78] sm:$0xff]
        %v2009 = vld [vmem:[%s1997 + $0x80] sm:$0xff]
        %v2010 = vld [vmem:[%s1997 + $0x90] sm:$0xff]
        %v2011 = vld [vmem:[%s1997 + $0x98] sm:$0xff]
        %v2012 = vld [vmem:[%s1997 + $0xa8] sm:$0xff]
        %v2013 = vld [vmem:[%s1997 + $0xb0] sm:$0xff]
        %v2014 = vld [vmem:[%s1997 + $0xc0] sm:$0xff]
        %v2015 = vld [vmem:[%s1997 + $0xc8] sm:$0xff]
        %v2016 = vld [vmem:[%s1997 + $0xd8] sm:$0xff]
        %v2017 = vld [vmem:[%s1997 + $0xe0] sm:$0xff]
        %v2018 = vld [vmem:[%s1997 + $0xf0] sm:$0xff]
        %v2019 = vld [vmem:[%s1997 + $0xf8] sm:$0xff]
        %v2020 = vld [vmem:[%s1997 + $0x108] sm:$0xff]
        %v2021 = vld [vmem:[%s1997 + $0x110] sm:$0xff]
        %v2022 = vld [vmem:[%s1997 + $0x120] sm:$0xff]
        %v2023 = vld [vmem:[%s1997 + $0x128] sm:$0xff]
        %v2024 = vld [vmem:[%s1997 + $0x138] sm:$0xff]
        %v2025 = vld [vmem:[%s1997 + $0x140] sm:$0xff]
        %v2026 = vld [vmem:[%s1997 + $0x150] sm:$0xff]
        %v2027 = vld [vmem:[%s1997 + $0x158] sm:$0xff]
        %v2028 = vld [vmem:[%s1997 + $0x168] sm:$0xff]
        %v2029 = vld [vmem:[%s1997 + $0x170] sm:$0xff]
        %v2030 = vpack.c.bf16 %v1999, %v1998
        %v2031 = vpack.c.bf16 %v2001, %v2000
        %v2032 = vpack.c.bf16 %v2003, %v2002
        %v2033 = vpack.c.bf16 %v2005, %v2004
        %v2034 = vpack.c.bf16 %v2007, %v2006
        %v2035 = vpack.c.bf16 %v2009, %v2008
        %v2036 = vpack.c.bf16 %v2011, %v2010
        %v2037 = vpack.c.bf16 %v2013, %v2012
        %v2038 = vpack.c.bf16 %v2015, %v2014
        %v2039 = vpack.c.bf16 %v2017, %v2016
        %v2040 = vpack.c.bf16 %v2019, %v2018
        %v2041 = vpack.c.bf16 %v2021, %v2020
        %v2042 = vpack.c.bf16 %v2023, %v2022
        %v2043 = vpack.c.bf16 %v2025, %v2024
        %v2044 = vpack.c.bf16 %v2027, %v2026
        %v2045 = vpack.c.bf16 %v2029, %v2028
        %s2046 = scalar_lea.vmem %s1, 96
        %v2047 = vld [vmem:[%s2046] sm:$0xf]
        %v2048 = vld [vmem:[%s2046 + $0x4] sm:$0xf]
        %v2049 = vld [vmem:[%s2046 + $0x8] sm:$0xf]
        %v2050 = vld [vmem:[%s2046 + $0xc] sm:$0xf]
        %v2055 = vunpack.c.l.b16 %v2047
        %v2056 = vunpack.c.l.b16 %v2048
        %v2057 = vunpack.c.l.b16 %v2049
        %v2058 = vunpack.c.l.b16 %v2050
        %v2059 = vpack.c.b16 %v2056, %v2055
        %v2060 = vpack.c.b16 %v2058, %v2057
        %v2064 = vsel %vm341, %v2030, 0
        %v2067 = vsel %vm341, %v2031, 0
        %v2070 = vsel %vm341, %v2032, 0
        %v2073 = vsel %vm341, %v2033, 0
        %v2076 = vsel %vm341, %v2034, 0
        %v2079 = vsel %vm341, %v2035, 0
        %v2082 = vsel %vm341, %v2036, 0
        %v2085 = vsel %vm341, %v2037, 0
        %v2088 = vsel %vm341, %v2038, 0
        %v2091 = vsel %vm341, %v2039, 0
        %v2094 = vsel %vm341, %v2040, 0
        %v2097 = vsel %vm341, %v2041, 0
        %v2100 = vsel %vm341, %v2042, 0
        %v2103 = vsel %vm341, %v2043, 0
        %v2106 = vsel %vm341, %v2044, 0
        %v2109 = vsel %vm341, %v2045, 0
        %2111 = vmatprep.subr.bf16.mxu0 0
        %2112 = vmatpush1.bf16.msra.mxu0 %v2059
        %2113 = vmatprep.subr.bf16.mxu0 0
        %2114 = vmatpush1.bf16.msra.mxu0 %v2060
        %2115 = vmatprep.subr.bf16.mxu0 0
        %2116 = vmatpush1.bf16.msra.mxu0 0
        %2117 = vmatprep.subr.bf16.mxu0 0
        %2118 = vmatpush1.bf16.msra.mxu0 0
        %2119 = vmatprep.subr.bf16.mxu0 0
        %2120 = vmatpush1.bf16.msra.mxu0 0
        %2121 = vmatprep.subr.bf16.mxu0 0
        %2122 = vmatpush1.bf16.msra.mxu0 0
        %2123 = vmatprep.subr.bf16.mxu0 0
        %2124 = vmatpush1.bf16.msra.mxu0 0
        %2125 = vmatprep.subr.bf16.mxu0 0
        %2126 = vmatpush1.bf16.msra.mxu0 0
        %2127 = vmatprep.subr.bf16.mxu0 0
        %2128 = vmatpush1.bf16.msra.mxu0 0
        %2129 = vmatprep.subr.bf16.mxu0 0
        %2130 = vmatpush1.bf16.msra.mxu0 0
        %2131 = vmatprep.subr.bf16.mxu0 0
        %2132 = vmatpush1.bf16.msra.mxu0 0
        %2133 = vmatprep.subr.bf16.mxu0 0
        %2134 = vmatpush1.bf16.msra.mxu0 0
        %2135 = vmatprep.subr.bf16.mxu0 0
        %2136 = vmatpush1.bf16.msra.mxu0 0
        %2137 = vmatprep.subr.bf16.mxu0 0
        %2138 = vmatpush1.bf16.msra.mxu0 0
        %2139 = vmatprep.subr.bf16.mxu0 0
        %2140 = vmatpush1.bf16.msra.mxu0 0
        %2141 = vmatprep.subr.bf16.mxu0 0
        %2142 = vmatpush1.bf16.msra.mxu0 0
        %2143 = vmatprep.mubr.bf16.mxu0 0
        %2144 = vmatmul.mubr.bf16.gmra.mrb[0].mxu0 %v2064
        %v2145 = vpop.f32.mrb[0].mxu0
        %v2146 = vadd.f32 0.0, %v2145
        %v2147 = vpop.f32.mrb[0].mxu0
        %v2148 = vpop.f32.mrb[0].mxu0
        %v2149 = vadd.f32 0.0, %v2148
        %v2150 = vpop.f32.mrb[0].mxu0
        %2151 = vmatprep.mubr.bf16.mxu0 0
        %2152 = vmatmul.mubr.bf16.gmra.mrb[0].mxu0 %v2067
        %v2153 = vpop.f32.mrb[0].mxu0
        %v2154 = vadd.f32 0.0, %v2153
        %v2155 = vpop.f32.mrb[0].mxu0
        %v2156 = vpop.f32.mrb[0].mxu0
        %v2157 = vadd.f32 0.0, %v2156
        %v2158 = vpop.f32.mrb[0].mxu0
        %2159 = vmatprep.mubr.bf16.mxu0 0
        %2160 = vmatmul.mubr.bf16.gmra.mrb[0].mxu0 %v2070
        %v2161 = vpop.f32.mrb[0].mxu0
        %v2162 = vadd.f32 0.0, %v2161
        %v2163 = vpop.f32.mrb[0].mxu0
        %v2164 = vpop.f32.mrb[0].mxu0
        %v2165 = vadd.f32 0.0, %v2164
        %v2166 = vpop.f32.mrb[0].mxu0
        %2167 = vmatprep.mubr.bf16.mxu0 0
        %2168 = vmatmul.mubr.bf16.gmra.mrb[0].mxu0 %v2073
        %v2169 = vpop.f32.mrb[0].mxu0
        %v2170 = vadd.f32 0.0, %v2169
        %v2171 = vpop.f32.mrb[0].mxu0
        %v2172 = vpop.f32.mrb[0].mxu0
        %v2173 = vadd.f32 0.0, %v2172
        %v2174 = vpop.f32.mrb[0].mxu0
        %2175 = vmatprep.mubr.bf16.mxu0 0
        %2176 = vmatmul.mubr.bf16.gmra.mrb[0].mxu0 %v2076
        %v2177 = vpop.f32.mrb[0].mxu0
        %v2178 = vadd.f32 0.0, %v2177
        %v2179 = vpop.f32.mrb[0].mxu0
        %v2180 = vpop.f32.mrb[0].mxu0
        %v2181 = vadd.f32 0.0, %v2180
        %v2182 = vpop.f32.mrb[0].mxu0
        %2183 = vmatprep.mubr.bf16.mxu0 0
        %2184 = vmatmul.mubr.bf16.gmra.mrb[0].mxu0 %v2079
        %v2185 = vpop.f32.mrb[0].mxu0
        %v2186 = vadd.f32 0.0, %v2185
        %v2187 = vpop.f32.mrb[0].mxu0
        %v2188 = vpop.f32.mrb[0].mxu0
        %v2189 = vadd.f32 0.0, %v2188
        %v2190 = vpop.f32.mrb[0].mxu0
        %2191 = vmatprep.mubr.bf16.mxu0 0
        %2192 = vmatmul.mubr.bf16.gmra.mrb[0].mxu0 %v2082
        %v2193 = vpop.f32.mrb[0].mxu0
        %v2194 = vadd.f32 0.0, %v2193
        %v2195 = vpop.f32.mrb[0].mxu0
        %v2196 = vpop.f32.mrb[0].mxu0
        %v2197 = vadd.f32 0.0, %v2196
        %v2198 = vpop.f32.mrb[0].mxu0
        %2199 = vmatprep.mubr.bf16.mxu0 0
        %2200 = vmatmul.mubr.bf16.gmra.mrb[0].mxu0 %v2085
        %v2201 = vpop.f32.mrb[0].mxu0
        %v2202 = vadd.f32 0.0, %v2201
        %v2203 = vpop.f32.mrb[0].mxu0
        %v2204 = vpop.f32.mrb[0].mxu0
        %v2205 = vadd.f32 0.0, %v2204
        %v2206 = vpop.f32.mrb[0].mxu0
        %2207 = vmatprep.mubr.bf16.mxu0 0
        %2208 = vmatmul.mubr.bf16.gmra.mrb[0].mxu0 %v2088
        %v2209 = vpop.f32.mrb[0].mxu0
        %v2210 = vadd.f32 0.0, %v2209
        %v2211 = vpop.f32.mrb[0].mxu0
        %v2212 = vpop.f32.mrb[0].mxu0
        %v2213 = vadd.f32 0.0, %v2212
        %v2214 = vpop.f32.mrb[0].mxu0
        %2215 = vmatprep.mubr.bf16.mxu0 0
        %2216 = vmatmul.mubr.bf16.gmra.mrb[0].mxu0 %v2091
        %v2217 = vpop.f32.mrb[0].mxu0
        %v2218 = vadd.f32 0.0, %v2217
        %v2219 = vpop.f32.mrb[0].mxu0
        %v2220 = vpop.f32.mrb[0].mxu0
        %v2221 = vadd.f32 0.0, %v2220
        %v2222 = vpop.f32.mrb[0].mxu0
        %2223 = vmatprep.mubr.bf16.mxu0 0
        %2224 = vmatmul.mubr.bf16.gmra.mrb[0].mxu0 %v2094
        %v2225 = vpop.f32.mrb[0].mxu0
        %v2226 = vadd.f32 0.0, %v2225
        %v2227 = vpop.f32.mrb[0].mxu0
        %v2228 = vpop.f32.mrb[0].mxu0
        %v2229 = vadd.f32 0.0, %v2228
        %v2230 = vpop.f32.mrb[0].mxu0
        %2231 = vmatprep.mubr.bf16.mxu0 0
        %2232 = vmatmul.mubr.bf16.gmra.mrb[0].mxu0 %v2097
        %v2233 = vpop.f32.mrb[0].mxu0
        %v2234 = vadd.f32 0.0, %v2233
        %v2235 = vpop.f32.mrb[0].mxu0
        %v2236 = vpop.f32.mrb[0].mxu0
        %v2237 = vadd.f32 0.0, %v2236
        %v2238 = vpop.f32.mrb[0].mxu0
        %2239 = vmatprep.mubr.bf16.mxu0 0
        %2240 = vmatmul.mubr.bf16.gmra.mrb[0].mxu0 %v2100
        %v2241 = vpop.f32.mrb[0].mxu0
        %v2242 = vadd.f32 0.0, %v2241
        %v2243 = vpop.f32.mrb[0].mxu0
        %v2244 = vpop.f32.mrb[0].mxu0
        %v2245 = vadd.f32 0.0, %v2244
        %v2246 = vpop.f32.mrb[0].mxu0
        %2247 = vmatprep.mubr.bf16.mxu0 0
        %2248 = vmatmul.mubr.bf16.gmra.mrb[0].mxu0 %v2103
        %v2249 = vpop.f32.mrb[0].mxu0
        %v2250 = vadd.f32 0.0, %v2249
        %v2251 = vpop.f32.mrb[0].mxu0
        %v2252 = vpop.f32.mrb[0].mxu0
        %v2253 = vadd.f32 0.0, %v2252
        %v2254 = vpop.f32.mrb[0].mxu0
        %2255 = vmatprep.mubr.bf16.mxu0 0
        %2256 = vmatmul.mubr.bf16.gmra.mrb[0].mxu0 %v2106
        %v2257 = vpop.f32.mrb[0].mxu0
        %v2258 = vadd.f32 0.0, %v2257
        %v2259 = vpop.f32.mrb[0].mxu0
        %v2260 = vpop.f32.mrb[0].mxu0
        %v2261 = vadd.f32 0.0, %v2260
        %v2262 = vpop.f32.mrb[0].mxu0
        %2263 = vmatprep.mubr.bf16.mxu0 0
        %2264 = vmatmul.mubr.bf16.gmra.mrb[0].mxu0 %v2109
        %v2265 = vpop.f32.mrb[0].mxu0
        %v2266 = vadd.f32 0.0, %v2265
        %v2267 = vpop.f32.mrb[0].mxu0
        %v2268 = vpop.f32.mrb[0].mxu0
        %v2269 = vadd.f32 0.0, %v2268
        %v2270 = vpop.f32.mrb[0].mxu0
        %2271 = vdwg.mxu0
        %v2272 = vadd.f32 %v1965, %v2146
        %v2273 = vadd.f32 %v1966, %v2149
        %v2274 = vadd.f32 %v1967, %v2154
        %v2275 = vadd.f32 %v1968, %v2157
        %v2276 = vadd.f32 %v1969, %v2162
        %v2277 = vadd.f32 %v1970, %v2165
        %v2278 = vadd.f32 %v1971, %v2170
        %v2279 = vadd.f32 %v1972, %v2173
        %v2280 = vadd.f32 %v1973, %v2178
        %v2281 = vadd.f32 %v1974, %v2181
        %v2282 = vadd.f32 %v1975, %v2186
        %v2283 = vadd.f32 %v1976, %v2189
        %v2284 = vadd.f32 %v1977, %v2194
        %v2285 = vadd.f32 %v1978, %v2197
        %v2286 = vadd.f32 %v1979, %v2202
        %v2287 = vadd.f32 %v1980, %v2205
        %v2288 = vadd.f32 %v1981, %v2210
        %v2289 = vadd.f32 %v1982, %v2213
        %v2290 = vadd.f32 %v1983, %v2218
        %v2291 = vadd.f32 %v1984, %v2221
        %v2292 = vadd.f32 %v1985, %v2226
        %v2293 = vadd.f32 %v1986, %v2229
        %v2294 = vadd.f32 %v1987, %v2234
        %v2295 = vadd.f32 %v1988, %v2237
        %v2296 = vadd.f32 %v1989, %v2242
        %v2297 = vadd.f32 %v1990, %v2245
        %v2298 = vadd.f32 %v1991, %v2250
        %v2299 = vadd.f32 %v1992, %v2253
        %v2300 = vadd.f32 %v1993, %v2258
        %v2301 = vadd.f32 %v1994, %v2261
        %v2302 = vadd.f32 %v1995, %v2266
        %v2303 = vadd.f32 %v1996, %v2269
        %v2304 = vld [vmem:[%s1997 + $0x1] sm:$0xff]
        %v2305 = vld [vmem:[%s1997 + $0x9] sm:$0xff]
        %v2306 = vld [vmem:[%s1997 + $0x19] sm:$0xff]
        %v2307 = vld [vmem:[%s1997 + $0x21] sm:$0xff]
        %v2308 = vld [vmem:[%s1997 + $0x31] sm:$0xff]
        %v2309 = vld [vmem:[%s1997 + $0x39] sm:$0xff]
        %v2310 = vld [vmem:[%s1997 + $0x49] sm:$0xff]
        %v2311 = vld [vmem:[%s1997 + $0x51] sm:$0xff]
        %v2312 = vld [vmem:[%s1997 + $0x61] sm:$0xff]
        %v2313 = vld [vmem:[%s1997 + $0x69] sm:$0xff]
        %v2314 = vld [vmem:[%s1997 + $0x79] sm:$0xff]
        %v2315 = vld [vmem:[%s1997 + $0x81] sm:$0xff]
        %v2316 = vld [vmem:[%s1997 + $0x91] sm:$0xff]
        %v2317 = vld [vmem:[%s1997 + $0x99] sm:$0xff]
        %v2318 = vld [vmem:[%s1997 + $0xa9] sm:$0xff]
        %v2319 = vld [vmem:[%s1997 + $0xb1] sm:$0xff]
        %v2320 = vld [vmem:[%s1997 + $0xc1] sm:$0xff]
        %v2321 = vld [vmem:[%s1997 + $0xc9] sm:$0xff]
        %v2322 = vld [vmem:[%s1997 + $0xd9] sm:$0xff]
        %v2323 = vld [vmem:[%s1997 + $0xe1] sm:$0xff]
        %v2324 = vld [vmem:[%s1997 + $0xf1] sm:$0xff]
        %v2325 = vld [vmem:[%s1997 + $0xf9] sm:$0xff]
        %v2326 = vld [vmem:[%s1997 + $0x109] sm:$0xff]
        %v2327 = vld [vmem:[%s1997 + $0x111] sm:$0xff]
        %v2328 = vld [vmem:[%s1997 + $0x121] sm:$0xff]
        %v2329 = vld [vmem:[%s1997 + $0x129] sm:$0xff]
        %v2330 = vld [vmem:[%s1997 + $0x139] sm:$0xff]
        %v2331 = vld [vmem:[%s1997 + $0x141] sm:$0xff]
        %v2332 = vld [vmem:[%s1997 + $0x151] sm:$0xff]
        %v2333 = vld [vmem:[%s1997 + $0x159] sm:$0xff]
        %v2334 = vld [vmem:[%s1997 + $0x169] sm:$0xff]
        %v2335 = vld [vmem:[%s1997 + $0x171] sm:$0xff]
        %v2336 = vpack.c.bf16 %v2305, %v2304
        %v2337 = vpack.c.bf16 %v2307, %v2306
        %v2338 = vpack.c.bf16 %v2309, %v2308
        %v2339 = vpack.c.bf16 %v2311, %v2310
        %v2340 = vpack.c.bf16 %v2313, %v2312
        %v2341 = vpack.c.bf16 %v2315, %v2314
        %v2342 = vpack.c.bf16 %v2317, %v2316
        %v2343 = vpack.c.bf16 %v2319, %v2318
        %v2344 = vpack.c.bf16 %v2321, %v2320
        %v2345 = vpack.c.bf16 %v2323, %v2322
        %v2346 = vpack.c.bf16 %v2325, %v2324
        %v2347 = vpack.c.bf16 %v2327, %v2326
        %v2348 = vpack.c.bf16 %v2329, %v2328
        %v2349 = vpack.c.bf16 %v2331, %v2330
        %v2350 = vpack.c.bf16 %v2333, %v2332
        %v2351 = vpack.c.bf16 %v2335, %v2334
        %s2352 = scalar_lea.vmem %s1, 112
        %v2353 = vld [vmem:[%s2352] sm:$0xf]
        %v2354 = vld [vmem:[%s2352 + $0x4] sm:$0xf]
        %v2355 = vld [vmem:[%s2352 + $0x8] sm:$0xf]
        %v2356 = vld [vmem:[%s2352 + $0xc] sm:$0xf]
        %v2361 = vunpack.c.l.b16 %v2353
        %v2362 = vunpack.c.l.b16 %v2354
        %v2363 = vunpack.c.l.b16 %v2355
        %v2364 = vunpack.c.l.b16 %v2356
        %v2365 = vpack.c.b16 %v2362, %v2361
        %v2366 = vpack.c.b16 %v2364, %v2363
        %v2370 = vsel %vm341, %v2336, 0
        %v2373 = vsel %vm341, %v2337, 0
        %v2376 = vsel %vm341, %v2338, 0
        %v2379 = vsel %vm341, %v2339, 0
        %v2382 = vsel %vm341, %v2340, 0
        %v2385 = vsel %vm341, %v2341, 0
        %v2388 = vsel %vm341, %v2342, 0
        %v2391 = vsel %vm341, %v2343, 0
        %v2394 = vsel %vm341, %v2344, 0
        %v2397 = vsel %vm341, %v2345, 0
        %v2400 = vsel %vm341, %v2346, 0
        %v2403 = vsel %vm341, %v2347, 0
        %v2406 = vsel %vm341, %v2348, 0
        %v2409 = vsel %vm341, %v2349, 0
        %v2412 = vsel %vm341, %v2350, 0
        %v2415 = vsel %vm341, %v2351, 0
        %2417 = vmatprep.subr.bf16.mxu0 0
        %2418 = vmatpush1.bf16.msra.mxu0 %v2365
        %2419 = vmatprep.subr.bf16.mxu0 0
        %2420 = vmatpush1.bf16.msra.mxu0 %v2366
        %2421 = vmatprep.subr.bf16.mxu0 0
        %2422 = vmatpush1.bf16.msra.mxu0 0
        %2423 = vmatprep.subr.bf16.mxu0 0
        %2424 = vmatpush1.bf16.msra.mxu0 0
        %2425 = vmatprep.subr.bf16.mxu0 0
        %2426 = vmatpush1.bf16.msra.mxu0 0
        %2427 = vmatprep.subr.bf16.mxu0 0
        %2428 = vmatpush1.bf16.msra.mxu0 0
        %2429 = vmatprep.subr.bf16.mxu0 0
        %2430 = vmatpush1.bf16.msra.mxu0 0
        %2431 = vmatprep.subr.bf16.mxu0 0
        %2432 = vmatpush1.bf16.msra.mxu0 0
        %2433 = vmatprep.subr.bf16.mxu0 0
        %2434 = vmatpush1.bf16.msra.mxu0 0
        %2435 = vmatprep.subr.bf16.mxu0 0
        %2436 = vmatpush1.bf16.msra.mxu0 0
        %2437 = vmatprep.subr.bf16.mxu0 0
        %2438 = vmatpush1.bf16.msra.mxu0 0
        %2439 = vmatprep.subr.bf16.mxu0 0
        %2440 = vmatpush1.bf16.msra.mxu0 0
        %2441 = vmatprep.subr.bf16.mxu0 0
        %2442 = vmatpush1.bf16.msra.mxu0 0
        %2443 = vmatprep.subr.bf16.mxu0 0
        %2444 = vmatpush1.bf16.msra.mxu0 0
        %2445 = vmatprep.subr.bf16.mxu0 0
        %2446 = vmatpush1.bf16.msra.mxu0 0
        %2447 = vmatprep.subr.bf16.mxu0 0
        %2448 = vmatpush1.bf16.msra.mxu0 0
        %2449 = vmatprep.mubr.bf16.mxu0 0
        %2450 = vmatmul.mubr.bf16.gmra.mrb[0].mxu0 %v2370
        %v2451 = vpop.f32.mrb[0].mxu0
        %v2452 = vadd.f32 0.0, %v2451
        %v2453 = vpop.f32.mrb[0].mxu0
        %v2454 = vpop.f32.mrb[0].mxu0
        %v2455 = vadd.f32 0.0, %v2454
        %v2456 = vpop.f32.mrb[0].mxu0
        %2457 = vmatprep.mubr.bf16.mxu0 0
        %2458 = vmatmul.mubr.bf16.gmra.mrb[0].mxu0 %v2373
        %v2459 = vpop.f32.mrb[0].mxu0
        %v2460 = vadd.f32 0.0, %v2459
        %v2461 = vpop.f32.mrb[0].mxu0
        %v2462 = vpop.f32.mrb[0].mxu0
        %v2463 = vadd.f32 0.0, %v2462
        %v2464 = vpop.f32.mrb[0].mxu0
        %2465 = vmatprep.mubr.bf16.mxu0 0
        %2466 = vmatmul.mubr.bf16.gmra.mrb[0].mxu0 %v2376
        %v2467 = vpop.f32.mrb[0].mxu0
        %v2468 = vadd.f32 0.0, %v2467
        %v2469 = vpop.f32.mrb[0].mxu0
        %v2470 = vpop.f32.mrb[0].mxu0
        %v2471 = vadd.f32 0.0, %v2470
        %v2472 = vpop.f32.mrb[0].mxu0
        %2473 = vmatprep.mubr.bf16.mxu0 0
        %2474 = vmatmul.mubr.bf16.gmra.mrb[0].mxu0 %v2379
        %v2475 = vpop.f32.mrb[0].mxu0
        %v2476 = vadd.f32 0.0, %v2475
        %v2477 = vpop.f32.mrb[0].mxu0
        %v2478 = vpop.f32.mrb[0].mxu0
        %v2479 = vadd.f32 0.0, %v2478
        %v2480 = vpop.f32.mrb[0].mxu0
        %2481 = vmatprep.mubr.bf16.mxu0 0
        %2482 = vmatmul.mubr.bf16.gmra.mrb[0].mxu0 %v2382
        %v2483 = vpop.f32.mrb[0].mxu0
        %v2484 = vadd.f32 0.0, %v2483
        %v2485 = vpop.f32.mrb[0].mxu0
        %v2486 = vpop.f32.mrb[0].mxu0
        %v2487 = vadd.f32 0.0, %v2486
        %v2488 = vpop.f32.mrb[0].mxu0
        %2489 = vmatprep.mubr.bf16.mxu0 0
        %2490 = vmatmul.mubr.bf16.gmra.mrb[0].mxu0 %v2385
        %v2491 = vpop.f32.mrb[0].mxu0
        %v2492 = vadd.f32 0.0, %v2491
        %v2493 = vpop.f32.mrb[0].mxu0
        %v2494 = vpop.f32.mrb[0].mxu0
        %v2495 = vadd.f32 0.0, %v2494
        %v2496 = vpop.f32.mrb[0].mxu0
        %2497 = vmatprep.mubr.bf16.mxu0 0
        %2498 = vmatmul.mubr.bf16.gmra.mrb[0].mxu0 %v2388
        %v2499 = vpop.f32.mrb[0].mxu0
        %v2500 = vadd.f32 0.0, %v2499
        %v2501 = vpop.f32.mrb[0].mxu0
        %v2502 = vpop.f32.mrb[0].mxu0
        %v2503 = vadd.f32 0.0, %v2502
        %v2504 = vpop.f32.mrb[0].mxu0
        %2505 = vmatprep.mubr.bf16.mxu0 0
        %2506 = vmatmul.mubr.bf16.gmra.mrb[0].mxu0 %v2391
        %v2507 = vpop.f32.mrb[0].mxu0
        %v2508 = vadd.f32 0.0, %v2507
        %v2509 = vpop.f32.mrb[0].mxu0
        %v2510 = vpop.f32.mrb[0].mxu0
        %v2511 = vadd.f32 0.0, %v2510
        %v2512 = vpop.f32.mrb[0].mxu0
        %2513 = vmatprep.mubr.bf16.mxu0 0
        %2514 = vmatmul.mubr.bf16.gmra.mrb[0].mxu0 %v2394
        %v2515 = vpop.f32.mrb[0].mxu0
        %v2516 = vadd.f32 0.0, %v2515
        %v2517 = vpop.f32.mrb[0].mxu0
        %v2518 = vpop.f32.mrb[0].mxu0
        %v2519 = vadd.f32 0.0, %v2518
        %v2520 = vpop.f32.mrb[0].mxu0
        %2521 = vmatprep.mubr.bf16.mxu0 0
        %2522 = vmatmul.mubr.bf16.gmra.mrb[0].mxu0 %v2397
        %v2523 = vpop.f32.mrb[0].mxu0
        %v2524 = vadd.f32 0.0, %v2523
        %v2525 = vpop.f32.mrb[0].mxu0
        %v2526 = vpop.f32.mrb[0].mxu0
        %v2527 = vadd.f32 0.0, %v2526
        %v2528 = vpop.f32.mrb[0].mxu0
        %2529 = vmatprep.mubr.bf16.mxu0 0
        %2530 = vmatmul.mubr.bf16.gmra.mrb[0].mxu0 %v2400
        %v2531 = vpop.f32.mrb[0].mxu0
        %v2532 = vadd.f32 0.0, %v2531
        %v2533 = vpop.f32.mrb[0].mxu0
        %v2534 = vpop.f32.mrb[0].mxu0
        %v2535 = vadd.f32 0.0, %v2534
        %v2536 = vpop.f32.mrb[0].mxu0
        %2537 = vmatprep.mubr.bf16.mxu0 0
        %2538 = vmatmul.mubr.bf16.gmra.mrb[0].mxu0 %v2403
        %v2539 = vpop.f32.mrb[0].mxu0
        %v2540 = vadd.f32 0.0, %v2539
        %v2541 = vpop.f32.mrb[0].mxu0
        %v2542 = vpop.f32.mrb[0].mxu0
        %v2543 = vadd.f32 0.0, %v2542
        %v2544 = vpop.f32.mrb[0].mxu0
        %2545 = vmatprep.mubr.bf16.mxu0 0
        %2546 = vmatmul.mubr.bf16.gmra.mrb[0].mxu0 %v2406
        %v2547 = vpop.f32.mrb[0].mxu0
        %v2548 = vadd.f32 0.0, %v2547
        %v2549 = vpop.f32.mrb[0].mxu0
        %v2550 = vpop.f32.mrb[0].mxu0
        %v2551 = vadd.f32 0.0, %v2550
        %v2552 = vpop.f32.mrb[0].mxu0
        %2553 = vmatprep.mubr.bf16.mxu0 0
        %2554 = vmatmul.mubr.bf16.gmra.mrb[0].mxu0 %v2409
        %v2555 = vpop.f32.mrb[0].mxu0
        %v2556 = vadd.f32 0.0, %v2555
        %v2557 = vpop.f32.mrb[0].mxu0
        %v2558 = vpop.f32.mrb[0].mxu0
        %v2559 = vadd.f32 0.0, %v2558
        %v2560 = vpop.f32.mrb[0].mxu0
        %2561 = vmatprep.mubr.bf16.mxu0 0
        %2562 = vmatmul.mubr.bf16.gmra.mrb[0].mxu0 %v2412
        %v2563 = vpop.f32.mrb[0].mxu0
        %v2564 = vadd.f32 0.0, %v2563
        %v2565 = vpop.f32.mrb[0].mxu0
        %v2566 = vpop.f32.mrb[0].mxu0
        %v2567 = vadd.f32 0.0, %v2566
        %v2568 = vpop.f32.mrb[0].mxu0
        %2569 = vmatprep.mubr.bf16.mxu0 0
        %2570 = vmatmul.mubr.bf16.gmra.mrb[0].mxu0 %v2415
        %v2571 = vpop.f32.mrb[0].mxu0
        %v2572 = vadd.f32 0.0, %v2571
        %v2573 = vpop.f32.mrb[0].mxu0
        %v2574 = vpop.f32.mrb[0].mxu0
        %v2575 = vadd.f32 0.0, %v2574
        %v2576 = vpop.f32.mrb[0].mxu0
        %2577 = vdwg.mxu0
        %v2578 = vadd.f32 %v2272, %v2452
        %v2579 = vadd.f32 %v2273, %v2455
        %v2580 = vadd.f32 %v2274, %v2460
        %v2581 = vadd.f32 %v2275, %v2463
        %v2582 = vadd.f32 %v2276, %v2468
        %v2583 = vadd.f32 %v2277, %v2471
        %v2584 = vadd.f32 %v2278, %v2476
        %v2585 = vadd.f32 %v2279, %v2479
        %v2586 = vadd.f32 %v2280, %v2484
        %v2587 = vadd.f32 %v2281, %v2487
        %v2588 = vadd.f32 %v2282, %v2492
        %v2589 = vadd.f32 %v2283, %v2495
        %v2590 = vadd.f32 %v2284, %v2500
        %v2591 = vadd.f32 %v2285, %v2503
        %v2592 = vadd.f32 %v2286, %v2508
        %v2593 = vadd.f32 %v2287, %v2511
        %v2594 = vadd.f32 %v2288, %v2516
        %v2595 = vadd.f32 %v2289, %v2519
        %v2596 = vadd.f32 %v2290, %v2524
        %v2597 = vadd.f32 %v2291, %v2527
        %v2598 = vadd.f32 %v2292, %v2532
        %v2599 = vadd.f32 %v2293, %v2535
        %v2600 = vadd.f32 %v2294, %v2540
        %v2601 = vadd.f32 %v2295, %v2543
        %v2602 = vadd.f32 %v2296, %v2548
        %v2603 = vadd.f32 %v2297, %v2551
        %v2604 = vadd.f32 %v2298, %v2556
        %v2605 = vadd.f32 %v2299, %v2559
        %v2606 = vadd.f32 %v2300, %v2564
        %v2607 = vadd.f32 %v2301, %v2567
        %v2608 = vadd.f32 %v2302, %v2572
        %v2609 = vadd.f32 %v2303, %v2575
        %v2610 = vld [vmem:[%s1997 + $0x2] sm:$0xff]
        %v2611 = vld [vmem:[%s1997 + $0xa] sm:$0xff]
        %v2612 = vld [vmem:[%s1997 + $0x1a] sm:$0xff]
        %v2613 = vld [vmem:[%s1997 + $0x22] sm:$0xff]
        %v2614 = vld [vmem:[%s1997 + $0x32] sm:$0xff]
        %v2615 = vld [vmem:[%s1997 + $0x3a] sm:$0xff]
        %v2616 = vld [vmem:[%s1997 + $0x4a] sm:$0xff]
        %v2617 = vld [vmem:[%s1997 + $0x52] sm:$0xff]
        %v2618 = vld [vmem:[%s1997 + $0x62] sm:$0xff]
        %v2619 = vld [vmem:[%s1997 + $0x6a] sm:$0xff]
        %v2620 = vld [vmem:[%s1997 + $0x7a] sm:$0xff]
        %v2621 = vld [vmem:[%s1997 + $0x82] sm:$0xff]
        %v2622 = vld [vmem:[%s1997 + $0x92] sm:$0xff]
        %v2623 = vld [vmem:[%s1997 + $0x9a] sm:$0xff]
        %v2624 = vld [vmem:[%s1997 + $0xaa] sm:$0xff]
        %v2625 = vld [vmem:[%s1997 + $0xb2] sm:$0xff]
        %v2626 = vld [vmem:[%s1997 + $0xc2] sm:$0xff]
        %v2627 = vld [vmem:[%s1997 + $0xca] sm:$0xff]
        %v2628 = vld [vmem:[%s1997 + $0xda] sm:$0xff]
        %v2629 = vld [vmem:[%s1997 + $0xe2] sm:$0xff]
        %v2630 = vld [vmem:[%s1997 + $0xf2] sm:$0xff]
        %v2631 = vld [vmem:[%s1997 + $0xfa] sm:$0xff]
        %v2632 = vld [vmem:[%s1997 + $0x10a] sm:$0xff]
        %v2633 = vld [vmem:[%s1997 + $0x112] sm:$0xff]
        %v2634 = vld [vmem:[%s1997 + $0x122] sm:$0xff]
        %v2635 = vld [vmem:[%s1997 + $0x12a] sm:$0xff]
        %v2636 = vld [vmem:[%s1997 + $0x13a] sm:$0xff]
        %v2637 = vld [vmem:[%s1997 + $0x142] sm:$0xff]
        %v2638 = vld [vmem:[%s1997 + $0x152] sm:$0xff]
        %v2639 = vld [vmem:[%s1997 + $0x15a] sm:$0xff]
        %v2640 = vld [vmem:[%s1997 + $0x16a] sm:$0xff]
        %v2641 = vld [vmem:[%s1997 + $0x172] sm:$0xff]
        %v2642 = vpack.c.bf16 %v2611, %v2610
        %v2643 = vpack.c.bf16 %v2613, %v2612
        %v2644 = vpack.c.bf16 %v2615, %v2614
        %v2645 = vpack.c.bf16 %v2617, %v2616
        %v2646 = vpack.c.bf16 %v2619, %v2618
        %v2647 = vpack.c.bf16 %v2621, %v2620
        %v2648 = vpack.c.bf16 %v2623, %v2622
        %v2649 = vpack.c.bf16 %v2625, %v2624
        %v2650 = vpack.c.bf16 %v2627, %v2626
        %v2651 = vpack.c.bf16 %v2629, %v2628
        %v2652 = vpack.c.bf16 %v2631, %v2630
        %v2653 = vpack.c.bf16 %v2633, %v2632
        %v2654 = vpack.c.bf16 %v2635, %v2634
        %v2655 = vpack.c.bf16 %v2637, %v2636
        %v2656 = vpack.c.bf16 %v2639, %v2638
        %v2657 = vpack.c.bf16 %v2641, %v2640
        %s2658 = scalar_lea.vmem %s1, 128
        %v2659 = vld [vmem:[%s2658] sm:$0xf]
        %v2660 = vld [vmem:[%s2658 + $0x4] sm:$0xf]
        %v2661 = vld [vmem:[%s2658 + $0x8] sm:$0xf]
        %v2662 = vld [vmem:[%s2658 + $0xc] sm:$0xf]
        %v2667 = vunpack.c.l.b16 %v2659
        %v2668 = vunpack.c.l.b16 %v2660
        %v2669 = vunpack.c.l.b16 %v2661
        %v2670 = vunpack.c.l.b16 %v2662
        %v2671 = vpack.c.b16 %v2668, %v2667
        %v2672 = vpack.c.b16 %v2670, %v2669
        %v2676 = vsel %vm341, %v2642, 0
        %v2679 = vsel %vm341, %v2643, 0
        %v2682 = vsel %vm341, %v2644, 0
        %v2685 = vsel %vm341, %v2645, 0
        %v2688 = vsel %vm341, %v2646, 0
        %v2691 = vsel %vm341, %v2647, 0
        %v2694 = vsel %vm341, %v2648, 0
        %v2697 = vsel %vm341, %v2649, 0
        %v2700 = vsel %vm341, %v2650, 0
        %v2703 = vsel %vm341, %v2651, 0
        %v2706 = vsel %vm341, %v2652, 0
        %v2709 = vsel %vm341, %v2653, 0
        %v2712 = vsel %vm341, %v2654, 0
        %v2715 = vsel %vm341, %v2655, 0
        %v2718 = vsel %vm341, %v2656, 0
        %v2721 = vsel %vm341, %v2657, 0
        %2723 = vmatprep.subr.bf16.mxu0 0
        %2724 = vmatpush1.bf16.msra.mxu0 %v2671
        %2725 = vmatprep.subr.bf16.mxu0 0
        %2726 = vmatpush1.bf16.msra.mxu0 %v2672
        %2727 = vmatprep.subr.bf16.mxu0 0
        %2728 = vmatpush1.bf16.msra.mxu0 0
        %2729 = vmatprep.subr.bf16.mxu0 0
        %2730 = vmatpush1.bf16.msra.mxu0 0
        %2731 = vmatprep.subr.bf16.mxu0 0
        %2732 = vmatpush1.bf16.msra.mxu0 0
        %2733 = vmatprep.subr.bf16.mxu0 0
        %2734 = vmatpush1.bf16.msra.mxu0 0
        %2735 = vmatprep.subr.bf16.mxu0 0
        %2736 = vmatpush1.bf16.msra.mxu0 0
        %2737 = vmatprep.subr.bf16.mxu0 0
        %2738 = vmatpush1.bf16.msra.mxu0 0
        %2739 = vmatprep.subr.bf16.mxu0 0
        %2740 = vmatpush1.bf16.msra.mxu0 0
        %2741 = vmatprep.subr.bf16.mxu0 0
        %2742 = vmatpush1.bf16.msra.mxu0 0
        %2743 = vmatprep.subr.bf16.mxu0 0
        %2744 = vmatpush1.bf16.msra.mxu0 0
        %2745 = vmatprep.subr.bf16.mxu0 0
        %2746 = vmatpush1.bf16.msra.mxu0 0
        %2747 = vmatprep.subr.bf16.mxu0 0
        %2748 = vmatpush1.bf16.msra.mxu0 0
        %2749 = vmatprep.subr.bf16.mxu0 0
        %2750 = vmatpush1.bf16.msra.mxu0 0
        %2751 = vmatprep.subr.bf16.mxu0 0
        %2752 = vmatpush1.bf16.msra.mxu0 0
        %2753 = vmatprep.subr.bf16.mxu0 0
        %2754 = vmatpush1.bf16.msra.mxu0 0
        %2755 = vmatprep.mubr.bf16.mxu0 0
        %2756 = vmatmul.mubr.bf16.gmra.mrb[0].mxu0 %v2676
        %v2757 = vpop.f32.mrb[0].mxu0
        %v2758 = vadd.f32 0.0, %v2757
        %v2759 = vpop.f32.mrb[0].mxu0
        %v2760 = vpop.f32.mrb[0].mxu0
        %v2761 = vadd.f32 0.0, %v2760
        %v2762 = vpop.f32.mrb[0].mxu0
        %2763 = vmatprep.mubr.bf16.mxu0 0
        %2764 = vmatmul.mubr.bf16.gmra.mrb[0].mxu0 %v2679
        %v2765 = vpop.f32.mrb[0].mxu0
        %v2766 = vadd.f32 0.0, %v2765
        %v2767 = vpop.f32.mrb[0].mxu0
        %v2768 = vpop.f32.mrb[0].mxu0
        %v2769 = vadd.f32 0.0, %v2768
        %v2770 = vpop.f32.mrb[0].mxu0
        %2771 = vmatprep.mubr.bf16.mxu0 0
        %2772 = vmatmul.mubr.bf16.gmra.mrb[0].mxu0 %v2682
        %v2773 = vpop.f32.mrb[0].mxu0
        %v2774 = vadd.f32 0.0, %v2773
        %v2775 = vpop.f32.mrb[0].mxu0
        %v2776 = vpop.f32.mrb[0].mxu0
        %v2777 = vadd.f32 0.0, %v2776
        %v2778 = vpop.f32.mrb[0].mxu0
        %2779 = vmatprep.mubr.bf16.mxu0 0
        %2780 = vmatmul.mubr.bf16.gmra.mrb[0].mxu0 %v2685
        %v2781 = vpop.f32.mrb[0].mxu0
        %v2782 = vadd.f32 0.0, %v2781
        %v2783 = vpop.f32.mrb[0].mxu0
        %v2784 = vpop.f32.mrb[0].mxu0
        %v2785 = vadd.f32 0.0, %v2784
        %v2786 = vpop.f32.mrb[0].mxu0
        %2787 = vmatprep.mubr.bf16.mxu0 0
        %2788 = vmatmul.mubr.bf16.gmra.mrb[0].mxu0 %v2688
        %v2789 = vpop.f32.mrb[0].mxu0
        %v2790 = vadd.f32 0.0, %v2789
        %v2791 = vpop.f32.mrb[0].mxu0
        %v2792 = vpop.f32.mrb[0].mxu0
        %v2793 = vadd.f32 0.0, %v2792
        %v2794 = vpop.f32.mrb[0].mxu0
        %2795 = vmatprep.mubr.bf16.mxu0 0
        %2796 = vmatmul.mubr.bf16.gmra.mrb[0].mxu0 %v2691
        %v2797 = vpop.f32.mrb[0].mxu0
        %v2798 = vadd.f32 0.0, %v2797
        %v2799 = vpop.f32.mrb[0].mxu0
        %v2800 = vpop.f32.mrb[0].mxu0
        %v2801 = vadd.f32 0.0, %v2800
        %v2802 = vpop.f32.mrb[0].mxu0
        %2803 = vmatprep.mubr.bf16.mxu0 0
        %2804 = vmatmul.mubr.bf16.gmra.mrb[0].mxu0 %v2694
        %v2805 = vpop.f32.mrb[0].mxu0
        %v2806 = vadd.f32 0.0, %v2805
        %v2807 = vpop.f32.mrb[0].mxu0
        %v2808 = vpop.f32.mrb[0].mxu0
        %v2809 = vadd.f32 0.0, %v2808
        %v2810 = vpop.f32.mrb[0].mxu0
        %2811 = vmatprep.mubr.bf16.mxu0 0
        %2812 = vmatmul.mubr.bf16.gmra.mrb[0].mxu0 %v2697
        %v2813 = vpop.f32.mrb[0].mxu0
        %v2814 = vadd.f32 0.0, %v2813
        %v2815 = vpop.f32.mrb[0].mxu0
        %v2816 = vpop.f32.mrb[0].mxu0
        %v2817 = vadd.f32 0.0, %v2816
        %v2818 = vpop.f32.mrb[0].mxu0
        %2819 = vmatprep.mubr.bf16.mxu0 0
        %2820 = vmatmul.mubr.bf16.gmra.mrb[0].mxu0 %v2700
        %v2821 = vpop.f32.mrb[0].mxu0
        %v2822 = vadd.f32 0.0, %v2821
        %v2823 = vpop.f32.mrb[0].mxu0
        %v2824 = vpop.f32.mrb[0].mxu0
        %v2825 = vadd.f32 0.0, %v2824
        %v2826 = vpop.f32.mrb[0].mxu0
        %2827 = vmatprep.mubr.bf16.mxu0 0
        %2828 = vmatmul.mubr.bf16.gmra.mrb[0].mxu0 %v2703
        %v2829 = vpop.f32.mrb[0].mxu0
        %v2830 = vadd.f32 0.0, %v2829
        %v2831 = vpop.f32.mrb[0].mxu0
        %v2832 = vpop.f32.mrb[0].mxu0
        %v2833 = vadd.f32 0.0, %v2832
        %v2834 = vpop.f32.mrb[0].mxu0
        %2835 = vmatprep.mubr.bf16.mxu0 0
        %2836 = vmatmul.mubr.bf16.gmra.mrb[0].mxu0 %v2706
        %v2837 = vpop.f32.mrb[0].mxu0
        %v2838 = vadd.f32 0.0, %v2837
        %v2839 = vpop.f32.mrb[0].mxu0
        %v2840 = vpop.f32.mrb[0].mxu0
        %v2841 = vadd.f32 0.0, %v2840
        %v2842 = vpop.f32.mrb[0].mxu0
        %2843 = vmatprep.mubr.bf16.mxu0 0
        %2844 = vmatmul.mubr.bf16.gmra.mrb[0].mxu0 %v2709
        %v2845 = vpop.f32.mrb[0].mxu0
        %v2846 = vadd.f32 0.0, %v2845
        %v2847 = vpop.f32.mrb[0].mxu0
        %v2848 = vpop.f32.mrb[0].mxu0
        %v2849 = vadd.f32 0.0, %v2848
        %v2850 = vpop.f32.mrb[0].mxu0
        %2851 = vmatprep.mubr.bf16.mxu0 0
        %2852 = vmatmul.mubr.bf16.gmra.mrb[0].mxu0 %v2712
        %v2853 = vpop.f32.mrb[0].mxu0
        %v2854 = vadd.f32 0.0, %v2853
        %v2855 = vpop.f32.mrb[0].mxu0
        %v2856 = vpop.f32.mrb[0].mxu0
        %v2857 = vadd.f32 0.0, %v2856
        %v2858 = vpop.f32.mrb[0].mxu0
        %2859 = vmatprep.mubr.bf16.mxu0 0
        %2860 = vmatmul.mubr.bf16.gmra.mrb[0].mxu0 %v2715
        %v2861 = vpop.f32.mrb[0].mxu0
        %v2862 = vadd.f32 0.0, %v2861
        %v2863 = vpop.f32.mrb[0].mxu0
        %v2864 = vpop.f32.mrb[0].mxu0
        %v2865 = vadd.f32 0.0, %v2864
        %v2866 = vpop.f32.mrb[0].mxu0
        %2867 = vmatprep.mubr.bf16.mxu0 0
        %2868 = vmatmul.mubr.bf16.gmra.mrb[0].mxu0 %v2718
        %v2869 = vpop.f32.mrb[0].mxu0
        %v2870 = vadd.f32 0.0, %v2869
        %v2871 = vpop.f32.mrb[0].mxu0
        %v2872 = vpop.f32.mrb[0].mxu0
        %v2873 = vadd.f32 0.0, %v2872
        %v2874 = vpop.f32.mrb[0].mxu0
        %2875 = vmatprep.mubr.bf16.mxu0 0
        %2876 = vmatmul.mubr.bf16.gmra.mrb[0].mxu0 %v2721
        %v2877 = vpop.f32.mrb[0].mxu0
        %v2878 = vadd.f32 0.0, %v2877
        %v2879 = vpop.f32.mrb[0].mxu0
        %v2880 = vpop.f32.mrb[0].mxu0
        %v2881 = vadd.f32 0.0, %v2880
        %v2882 = vpop.f32.mrb[0].mxu0
        %2883 = vdwg.mxu0
        %v2884 = vadd.f32 %v2578, %v2758
        %v2885 = vadd.f32 %v2579, %v2761
        %v2886 = vadd.f32 %v2580, %v2766
        %v2887 = vadd.f32 %v2581, %v2769
        %v2888 = vadd.f32 %v2582, %v2774
        %v2889 = vadd.f32 %v2583, %v2777
        %v2890 = vadd.f32 %v2584, %v2782
        %v2891 = vadd.f32 %v2585, %v2785
        %v2892 = vadd.f32 %v2586, %v2790
        %v2893 = vadd.f32 %v2587, %v2793
        %v2894 = vadd.f32 %v2588, %v2798
        %v2895 = vadd.f32 %v2589, %v2801
        %v2896 = vadd.f32 %v2590, %v2806
        %v2897 = vadd.f32 %v2591, %v2809
        %v2898 = vadd.f32 %v2592, %v2814
        %v2899 = vadd.f32 %v2593, %v2817
        %v2900 = vadd.f32 %v2594, %v2822
        %v2901 = vadd.f32 %v2595, %v2825
        %v2902 = vadd.f32 %v2596, %v2830
        %v2903 = vadd.f32 %v2597, %v2833
        %v2904 = vadd.f32 %v2598, %v2838
        %v2905 = vadd.f32 %v2599, %v2841
        %v2906 = vadd.f32 %v2600, %v2846
        %v2907 = vadd.f32 %v2601, %v2849
        %v2908 = vadd.f32 %v2602, %v2854
        %v2909 = vadd.f32 %v2603, %v2857
        %v2910 = vadd.f32 %v2604, %v2862
        %v2911 = vadd.f32 %v2605, %v2865
        %v2912 = vadd.f32 %v2606, %v2870
        %v2913 = vadd.f32 %v2607, %v2873
        %v2914 = vadd.f32 %v2608, %v2878
        %v2915 = vadd.f32 %v2609, %v2881
        %v2916 = vld [vmem:[%s2] sm:$0x1]
        %v2918 = vlaneseq
        %v2919 = vshrl.u32 %v2918, 7
        %v2920 = vsub.s32 0, %v2919
        %v2921 = vrot.slane %v2916, %v2920
        %v2923 = vadd.f32 %v2884, %v2921
        %v2924 = vadd.f32 %v2885, %v2921
        %v2925 = vadd.f32 %v2886, %v2921
        %v2926 = vadd.f32 %v2887, %v2921
        %v2927 = vadd.f32 %v2888, %v2921
        %v2928 = vadd.f32 %v2889, %v2921
        %v2929 = vadd.f32 %v2890, %v2921
        %v2930 = vadd.f32 %v2891, %v2921
        %v2931 = vadd.f32 %v2892, %v2921
        %v2932 = vadd.f32 %v2893, %v2921
        %v2933 = vadd.f32 %v2894, %v2921
        %v2934 = vadd.f32 %v2895, %v2921
        %v2935 = vadd.f32 %v2896, %v2921
        %v2936 = vadd.f32 %v2897, %v2921
        %v2937 = vadd.f32 %v2898, %v2921
        %v2938 = vadd.f32 %v2899, %v2921
        %v2939 = vadd.f32 %v2900, %v2921
        %v2940 = vadd.f32 %v2901, %v2921
        %v2941 = vadd.f32 %v2902, %v2921
        %v2942 = vadd.f32 %v2903, %v2921
        %v2943 = vadd.f32 %v2904, %v2921
        %v2944 = vadd.f32 %v2905, %v2921
        %v2945 = vadd.f32 %v2906, %v2921
        %v2946 = vadd.f32 %v2907, %v2921
        %v2947 = vadd.f32 %v2908, %v2921
        %v2948 = vadd.f32 %v2909, %v2921
        %v2949 = vadd.f32 %v2910, %v2921
        %v2950 = vadd.f32 %v2911, %v2921
        %v2951 = vadd.f32 %v2912, %v2921
        %v2952 = vadd.f32 %v2913, %v2921
        %v2953 = vadd.f32 %v2914, %v2921
        %v2954 = vadd.f32 %v2915, %v2921
        %v2955 = vmax.f32 %v2923, 0.0
        %v2956 = vmax.f32 %v2924, 0.0
        %v2957 = vmax.f32 %v2925, 0.0
        %v2958 = vmax.f32 %v2926, 0.0
        %v2959 = vmax.f32 %v2927, 0.0
        %v2960 = vmax.f32 %v2928, 0.0
        %v2961 = vmax.f32 %v2929, 0.0
        %v2962 = vmax.f32 %v2930, 0.0
        %v2963 = vmax.f32 %v2931, 0.0
        %v2964 = vmax.f32 %v2932, 0.0
        %v2965 = vmax.f32 %v2933, 0.0
        %v2966 = vmax.f32 %v2934, 0.0
        %v2967 = vmax.f32 %v2935, 0.0
        %v2968 = vmax.f32 %v2936, 0.0
        %v2969 = vmax.f32 %v2937, 0.0
        %v2970 = vmax.f32 %v2938, 0.0
        %v2971 = vmax.f32 %v2939, 0.0
        %v2972 = vmax.f32 %v2940, 0.0
        %v2973 = vmax.f32 %v2941, 0.0
        %v2974 = vmax.f32 %v2942, 0.0
        %v2975 = vmax.f32 %v2943, 0.0
        %v2976 = vmax.f32 %v2944, 0.0
        %v2977 = vmax.f32 %v2945, 0.0
        %v2978 = vmax.f32 %v2946, 0.0
        %v2979 = vmax.f32 %v2947, 0.0
        %v2980 = vmax.f32 %v2948, 0.0
        %v2981 = vmax.f32 %v2949, 0.0
        %v2982 = vmax.f32 %v2950, 0.0
        %v2983 = vmax.f32 %v2951, 0.0
        %v2984 = vmax.f32 %v2952, 0.0
        %v2985 = vmax.f32 %v2953, 0.0
        %v2986 = vmax.f32 %v2954, 0.0
        %2987 = vst.msk [vmem:[#allocation2] sm:$0xff] %vm341, 0.0
        %2988 = vst.msk [vmem:[#allocation2 + $0x8] sm:$0xff] %vm341, 0.0
        %2989 = vst.msk [vmem:[#allocation2 + $0x10] sm:$0xff] %vm341, 0.0
        %2990 = vst.msk [vmem:[#allocation2 + $0x18] sm:$0xff] %vm341, 0.0
        %2991 = vst.msk [vmem:[#allocation2 + $0x20] sm:$0xff] %vm341, 0.0
        %2992 = vst.msk [vmem:[#allocation2 + $0x28] sm:$0xff] %vm341, 0.0
        %2993 = vst.msk [vmem:[#allocation2 + $0x30] sm:$0xff] %vm341, 0.0
        %2994 = vst.msk [vmem:[#allocation2 + $0x38] sm:$0xff] %vm341, 0.0
        %2995 = vst.msk [vmem:[#allocation2 + $0x40] sm:$0xff] %vm341, 0.0
        %2996 = vst.msk [vmem:[#allocation2 + $0x48] sm:$0xff] %vm341, 0.0
        %2997 = vst.msk [vmem:[#allocation2 + $0x50] sm:$0xff] %vm341, 0.0
        %2998 = vst.msk [vmem:[#allocation2 + $0x58] sm:$0xff] %vm341, 0.0
        %2999 = vst.msk [vmem:[#allocation2 + $0x60] sm:$0xff] %vm341, 0.0
        %3000 = vst.msk [vmem:[#allocation2 + $0x68] sm:$0xff] %vm341, 0.0
        %3001 = vst.msk [vmem:[#allocation2 + $0x70] sm:$0xff] %vm341, 0.0
        %3002 = vst.msk [vmem:[#allocation2 + $0x78] sm:$0xff] %vm341, 0.0
        %3003 = vst.msk [vmem:[#allocation2 + $0x80] sm:$0xff] %vm341, 0.0
        %3004 = vst.msk [vmem:[#allocation2 + $0x88] sm:$0xff] %vm341, 0.0
        %3005 = vst.msk [vmem:[#allocation2 + $0x90] sm:$0xff] %vm341, 0.0
        %3006 = vst.msk [vmem:[#allocation2 + $0x98] sm:$0xff] %vm341, 0.0
        %3007 = vst.msk [vmem:[#allocation2 + $0xa0] sm:$0xff] %vm341, 0.0
        %3008 = vst.msk [vmem:[#allocation2 + $0xa8] sm:$0xff] %vm341, 0.0
        %3009 = vst.msk [vmem:[#allocation2 + $0xb0] sm:$0xff] %vm341, 0.0
        %3010 = vst.msk [vmem:[#allocation2 + $0xb8] sm:$0xff] %vm341, 0.0
        %3011 = vst.msk [vmem:[#allocation2 + $0xc0] sm:$0xff] %vm341, 0.0
        %3012 = vst.msk [vmem:[#allocation2 + $0xc8] sm:$0xff] %vm341, 0.0
        %3013 = vst.msk [vmem:[#allocation2 + $0xd0] sm:$0xff] %vm341, 0.0
        %3014 = vst.msk [vmem:[#allocation2 + $0xd8] sm:$0xff] %vm341, 0.0
        %3015 = vst.msk [vmem:[#allocation2 + $0xe0] sm:$0xff] %vm341, 0.0
        %3016 = vst.msk [vmem:[#allocation2 + $0xe8] sm:$0xff] %vm341, 0.0
        %3017 = vst.msk [vmem:[#allocation2 + $0xf0] sm:$0xff] %vm341, 0.0
        %3018 = vst.msk [vmem:[#allocation2 + $0xf8] sm:$0xff] %vm341, 0.0
        %3019 = vst.msk [vmem:[#allocation2 + $0x100] sm:$0xff] %vm341, 0.0
        %3020 = vst.msk [vmem:[#allocation2 + $0x108] sm:$0xff] %vm341, 0.0
        %3021 = vst.msk [vmem:[#allocation2 + $0x110] sm:$0xff] %vm341, 0.0
        %3022 = vst.msk [vmem:[#allocation2 + $0x118] sm:$0xff] %vm341, 0.0
        %3023 = vst.msk [vmem:[#allocation2 + $0x120] sm:$0xff] %vm341, 0.0
        %3024 = vst.msk [vmem:[#allocation2 + $0x128] sm:$0xff] %vm341, 0.0
        %3025 = vst.msk [vmem:[#allocation2 + $0x130] sm:$0xff] %vm341, 0.0
        %3026 = vst.msk [vmem:[#allocation2 + $0x138] sm:$0xff] %vm341, 0.0
        %3027 = vst.msk [vmem:[#allocation2 + $0x140] sm:$0xff] %vm341, 0.0
        %3028 = vst.msk [vmem:[#allocation2 + $0x148] sm:$0xff] %vm341, 0.0
        %3029 = vst.msk [vmem:[#allocation2 + $0x150] sm:$0xff] %vm341, 0.0
        %3030 = vst.msk [vmem:[#allocation2 + $0x158] sm:$0xff] %vm341, 0.0
        %3031 = vst.msk [vmem:[#allocation2 + $0x160] sm:$0xff] %vm341, 0.0
        %3032 = vst.msk [vmem:[#allocation2 + $0x168] sm:$0xff] %vm341, 0.0
        %3033 = vst.msk [vmem:[#allocation2 + $0x170] sm:$0xff] %vm341, 0.0
        %3034 = vst.msk [vmem:[#allocation2 + $0x178] sm:$0xff] %vm341, 0.0
        %3035 = vst.msk [vmem:[#allocation2 + $0x180] sm:$0xff] %vm341, 0.0
        %3036 = vst.msk [vmem:[#allocation2 + $0x188] sm:$0xff] %vm341, 0.0
        %3037 = vst.msk [vmem:[#allocation2 + $0x190] sm:$0xff] %vm341, 0.0
        %3038 = vst.msk [vmem:[#allocation2 + $0x198] sm:$0xff] %vm341, 0.0
        %3039 = vst.msk [vmem:[#allocation2 + $0x1a0] sm:$0xff] %vm341, 0.0
        %3040 = vst.msk [vmem:[#allocation2 + $0x1a8] sm:$0xff] %vm341, 0.0
        %3041 = vst.msk [vmem:[#allocation2 + $0x1b0] sm:$0xff] %vm341, 0.0
        %3042 = vst.msk [vmem:[#allocation2 + $0x1b8] sm:$0xff] %vm341, 0.0
        %3043 = vst.msk [vmem:[#allocation2 + $0x1c0] sm:$0xff] %vm341, 0.0
        %3044 = vst.msk [vmem:[#allocation2 + $0x1c8] sm:$0xff] %vm341, 0.0
        %3045 = vst.msk [vmem:[#allocation2 + $0x1d0] sm:$0xff] %vm341, 0.0
        %3046 = vst.msk [vmem:[#allocation2 + $0x1d8] sm:$0xff] %vm341, 0.0
        %3047 = vst.msk [vmem:[#allocation2 + $0x1e0] sm:$0xff] %vm341, 0.0
        %3048 = vst.msk [vmem:[#allocation2 + $0x1e8] sm:$0xff] %vm341, 0.0
        %3049 = vst.msk [vmem:[#allocation2 + $0x1f0] sm:$0xff] %vm341, 0.0
        %3050 = vst.msk [vmem:[#allocation2 + $0x1f8] sm:$0xff] %vm341, 0.0
        %3051 = vst.msk [vmem:[#allocation2 + $0x200] sm:$0xff] %vm341, 0.0
        %3052 = vst.msk [vmem:[#allocation2 + $0x208] sm:$0xff] %vm341, 0.0
        %3053 = vst.msk [vmem:[#allocation2 + $0x210] sm:$0xff] %vm341, 0.0
        %3054 = vst.msk [vmem:[#allocation2 + $0x218] sm:$0xff] %vm341, 0.0
        %3055 = vst.msk [vmem:[#allocation2 + $0x220] sm:$0xff] %vm341, 0.0
        %3056 = vst.msk [vmem:[#allocation2 + $0x228] sm:$0xff] %vm341, 0.0
        %3057 = vst.msk [vmem:[#allocation2 + $0x230] sm:$0xff] %vm341, 0.0
        %3058 = vst.msk [vmem:[#allocation2 + $0x238] sm:$0xff] %vm341, 0.0
        %s3059 = scalar_lea.vmem [#allocation2], 32
        %3060 = vst.msk [vmem:[%s3059 + $0x8] sm:$0xff] %vm341, %v2955
        %3061 = vst.msk [vmem:[%s3059 + $0x10] sm:$0xff] %vm341, %v2956
        %3062 = vst.msk [vmem:[%s3059 + $0x28] sm:$0xff] %vm341, %v2957
        %3063 = vst.msk [vmem:[%s3059 + $0x30] sm:$0xff] %vm341, %v2958
        %3064 = vst.msk [vmem:[%s3059 + $0x48] sm:$0xff] %vm341, %v2959
        %3065 = vst.msk [vmem:[%s3059 + $0x50] sm:$0xff] %vm341, %v2960
        %3066 = vst.msk [vmem:[%s3059 + $0x68] sm:$0xff] %vm341, %v2961
        %3067 = vst.msk [vmem:[%s3059 + $0x70] sm:$0xff] %vm341, %v2962
        %3068 = vst.msk [vmem:[%s3059 + $0x88] sm:$0xff] %vm341, %v2963
        %3069 = vst.msk [vmem:[%s3059 + $0x90] sm:$0xff] %vm341, %v2964
        %3070 = vst.msk [vmem:[%s3059 + $0xa8] sm:$0xff] %vm341, %v2965
        %3071 = vst.msk [vmem:[%s3059 + $0xb0] sm:$0xff] %vm341, %v2966
        %3072 = vst.msk [vmem:[%s3059 + $0xc8] sm:$0xff] %vm341, %v2967
        %3073 = vst.msk [vmem:[%s3059 + $0xd0] sm:$0xff] %vm341, %v2968
        %3074 = vst.msk [vmem:[%s3059 + $0xe8] sm:$0xff] %vm341, %v2969
        %3075 = vst.msk [vmem:[%s3059 + $0xf0] sm:$0xff] %vm341, %v2970
        %3076 = vst.msk [vmem:[%s3059 + $0x108] sm:$0xff] %vm341, %v2971
        %3077 = vst.msk [vmem:[%s3059 + $0x110] sm:$0xff] %vm341, %v2972
        %3078 = vst.msk [vmem:[%s3059 + $0x128] sm:$0xff] %vm341, %v2973
        %3079 = vst.msk [vmem:[%s3059 + $0x130] sm:$0xff] %vm341, %v2974
        %3080 = vst.msk [vmem:[%s3059 + $0x148] sm:$0xff] %vm341, %v2975
        %3081 = vst.msk [vmem:[%s3059 + $0x150] sm:$0xff] %vm341, %v2976
        %3082 = vst.msk [vmem:[%s3059 + $0x168] sm:$0xff] %vm341, %v2977
        %3083 = vst.msk [vmem:[%s3059 + $0x170] sm:$0xff] %vm341, %v2978
        %3084 = vst.msk [vmem:[%s3059 + $0x188] sm:$0xff] %vm341, %v2979
        %3085 = vst.msk [vmem:[%s3059 + $0x190] sm:$0xff] %vm341, %v2980
        %3086 = vst.msk [vmem:[%s3059 + $0x1a8] sm:$0xff] %vm341, %v2981
        %3087 = vst.msk [vmem:[%s3059 + $0x1b0] sm:$0xff] %vm341, %v2982
        %3088 = vst.msk [vmem:[%s3059 + $0x1c8] sm:$0xff] %vm341, %v2983
        %3089 = vst.msk [vmem:[%s3059 + $0x1d0] sm:$0xff] %vm341, %v2984
        %3090 = vst.msk [vmem:[%s3059 + $0x1e8] sm:$0xff] %vm341, %v2985
        %3091 = vst.msk [vmem:[%s3059 + $0x1f0] sm:$0xff] %vm341, %v2986
        %v3092 = vld [vmem:[#allocation2 + $0x7] sm:$0xff]
        %v3093 = vld [vmem:[#allocation2 + $0xf] sm:$0xff]
        %v3094 = vld [vmem:[#allocation2 + $0x27] sm:$0xff]
        %v3095 = vld [vmem:[#allocation2 + $0x2f] sm:$0xff]
        %v3096 = vld [vmem:[#allocation2 + $0x47] sm:$0xff]
        %v3097 = vld [vmem:[#allocation2 + $0x4f] sm:$0xff]
        %v3098 = vld [vmem:[#allocation2 + $0x67] sm:$0xff]
        %v3099 = vld [vmem:[#allocation2 + $0x6f] sm:$0xff]
        %v3100 = vld [vmem:[#allocation2 + $0x87] sm:$0xff]
        %v3101 = vld [vmem:[#allocation2 + $0x8f] sm:$0xff]
        %v3102 = vld [vmem:[#allocation2 + $0xa7] sm:$0xff]
        %v3103 = vld [vmem:[#allocation2 + $0xaf] sm:$0xff]
        %v3104 = vld [vmem:[#allocation2 + $0xc7] sm:$0xff]
        %v3105 = vld [vmem:[#allocation2 + $0xcf] sm:$0xff]
        %v3106 = vld [vmem:[#allocation2 + $0xe7] sm:$0xff]
        %v3107 = vld [vmem:[#allocation2 + $0xef] sm:$0xff]
        %v3108 = vld [vmem:[#allocation2 + $0x107] sm:$0xff]
        %v3109 = vld [vmem:[#allocation2 + $0x10f] sm:$0xff]
        %v3110 = vld [vmem:[#allocation2 + $0x127] sm:$0xff]
        %v3111 = vld [vmem:[#allocation2 + $0x12f] sm:$0xff]
        %v3112 = vld [vmem:[#allocation2 + $0x147] sm:$0xff]
        %v3113 = vld [vmem:[#allocation2 + $0x14f] sm:$0xff]
        %v3114 = vld [vmem:[#allocation2 + $0x167] sm:$0xff]
        %v3115 = vld [vmem:[#allocation2 + $0x16f] sm:$0xff]
        %v3116 = vld [vmem:[#allocation2 + $0x187] sm:$0xff]
        %v3117 = vld [vmem:[#allocation2 + $0x18f] sm:$0xff]
        %v3118 = vld [vmem:[#allocation2 + $0x1a7] sm:$0xff]
        %v3119 = vld [vmem:[#allocation2 + $0x1af] sm:$0xff]
        %v3120 = vld [vmem:[#allocation2 + $0x1c7] sm:$0xff]
        %v3121 = vld [vmem:[#allocation2 + $0x1cf] sm:$0xff]
        %v3122 = vld [vmem:[#allocation2 + $0x1e7] sm:$0xff]
        %v3123 = vld [vmem:[#allocation2 + $0x1ef] sm:$0xff]
        %v3124 = vpack.c.bf16 %v3093, %v3092
        %v3125 = vpack.c.bf16 %v3095, %v3094
        %v3126 = vpack.c.bf16 %v3097, %v3096
        %v3127 = vpack.c.bf16 %v3099, %v3098
        %v3128 = vpack.c.bf16 %v3101, %v3100
        %v3129 = vpack.c.bf16 %v3103, %v3102
        %v3130 = vpack.c.bf16 %v3105, %v3104
        %v3131 = vpack.c.bf16 %v3107, %v3106
        %v3132 = vpack.c.bf16 %v3109, %v3108
        %v3133 = vpack.c.bf16 %v3111, %v3110
        %v3134 = vpack.c.bf16 %v3113, %v3112
        %v3135 = vpack.c.bf16 %v3115, %v3114
        %v3136 = vpack.c.bf16 %v3117, %v3116
        %v3137 = vpack.c.bf16 %v3119, %v3118
        %v3138 = vpack.c.bf16 %v3121, %v3120
        %v3139 = vpack.c.bf16 %v3123, %v3122
        %v3140 = vld [vmem:[%s3] sm:$0xf]
        %v3141 = vld [vmem:[%s3 + $0x4] sm:$0xf]
        %v3142 = vld [vmem:[%s3 + $0x8] sm:$0xf]
        %v3143 = vld [vmem:[%s3 + $0xc] sm:$0xf]
        %v3144 = vld [vmem:[#allocation2 + $0x8] sm:$0xff]
        %v3145 = vld [vmem:[#allocation2 + $0x10] sm:$0xff]
        %v3146 = vld [vmem:[#allocation2 + $0x28] sm:$0xff]
        %v3147 = vld [vmem:[#allocation2 + $0x30] sm:$0xff]
        %v3148 = vld [vmem:[#allocation2 + $0x48] sm:$0xff]
        %v3149 = vld [vmem:[#allocation2 + $0x50] sm:$0xff]
        %v3150 = vld [vmem:[#allocation2 + $0x68] sm:$0xff]
        %v3151 = vld [vmem:[#allocation2 + $0x70] sm:$0xff]
        %v3152 = vld [vmem:[#allocation2 + $0x88] sm:$0xff]
        %v3153 = vld [vmem:[#allocation2 + $0x90] sm:$0xff]
        %v3154 = vld [vmem:[#allocation2 + $0xa8] sm:$0xff]
        %v3155 = vld [vmem:[#allocation2 + $0xb0] sm:$0xff]
        %v3156 = vld [vmem:[#allocation2 + $0xc8] sm:$0xff]
        %v3157 = vld [vmem:[#allocation2 + $0xd0] sm:$0xff]
        %v3158 = vld [vmem:[#allocation2 + $0xe8] sm:$0xff]
        %v3159 = vld [vmem:[#allocation2 + $0xf0] sm:$0xff]
        %v3160 = vld [vmem:[#allocation2 + $0x108] sm:$0xff]
        %v3161 = vld [vmem:[#allocation2 + $0x110] sm:$0xff]
        %v3162 = vld [vmem:[#allocation2 + $0x128] sm:$0xff]
        %v3163 = vld [vmem:[#allocation2 + $0x130] sm:$0xff]
        %v3164 = vld [vmem:[#allocation2 + $0x148] sm:$0xff]
        %v3165 = vld [vmem:[#allocation2 + $0x150] sm:$0xff]
        %v3166 = vld [vmem:[#allocation2 + $0x168] sm:$0xff]
        %v3167 = vld [vmem:[#allocation2 + $0x170] sm:$0xff]
        %v3168 = vld [vmem:[#allocation2 + $0x188] sm:$0xff]
        %v3169 = vld [vmem:[#allocation2 + $0x190] sm:$0xff]
        %v3170 = vld [vmem:[#allocation2 + $0x1a8] sm:$0xff]
        %v3171 = vld [vmem:[#allocation2 + $0x1b0] sm:$0xff]
        %v3172 = vld [vmem:[#allocation2 + $0x1c8] sm:$0xff]
        %v3173 = vld [vmem:[#allocation2 + $0x1d0] sm:$0xff]
        %v3174 = vld [vmem:[#allocation2 + $0x1e8] sm:$0xff]
        %v3175 = vld [vmem:[#allocation2 + $0x1f0] sm:$0xff]
        %v3176 = vpack.c.bf16 %v3145, %v3144
        %v3177 = vpack.c.bf16 %v3147, %v3146
        %v3178 = vpack.c.bf16 %v3149, %v3148
        %v3179 = vpack.c.bf16 %v3151, %v3150
        %v3180 = vpack.c.bf16 %v3153, %v3152
        %v3181 = vpack.c.bf16 %v3155, %v3154
        %v3182 = vpack.c.bf16 %v3157, %v3156
        %v3183 = vpack.c.bf16 %v3159, %v3158
        %v3184 = vpack.c.bf16 %v3161, %v3160
        %v3185 = vpack.c.bf16 %v3163, %v3162
        %v3186 = vpack.c.bf16 %v3165, %v3164
        %v3187 = vpack.c.bf16 %v3167, %v3166
        %v3188 = vpack.c.bf16 %v3169, %v3168
        %v3189 = vpack.c.bf16 %v3171, %v3170
        %v3190 = vpack.c.bf16 %v3173, %v3172
        %v3191 = vpack.c.bf16 %v3175, %v3174
        %s3192 = scalar_lea.vmem %s3, 16
        %v3193 = vld [vmem:[%s3192] sm:$0xf]
        %v3194 = vld [vmem:[%s3192 + $0x4] sm:$0xf]
        %v3195 = vld [vmem:[%s3192 + $0x8] sm:$0xf]
        %v3196 = vld [vmem:[%s3192 + $0xc] sm:$0xf]
        %v3201 = vunpack.c.l.b16 %v3193
        %v3202 = vunpack.c.l.b16 %v3194
        %v3203 = vunpack.c.l.b16 %v3195
        %v3204 = vunpack.c.l.b16 %v3196
        %v3205 = vpack.c.b16 %v3202, %v3201
        %v3206 = vpack.c.b16 %v3204, %v3203
        %v3210 = vsel %vm341, %v3176, 0
        %v3213 = vsel %vm341, %v3177, 0
        %v3216 = vsel %vm341, %v3178, 0
        %v3219 = vsel %vm341, %v3179, 0
        %v3222 = vsel %vm341, %v3180, 0
        %v3225 = vsel %vm341, %v3181, 0
        %v3228 = vsel %vm341, %v3182, 0
        %v3231 = vsel %vm341, %v3183, 0
        %v3234 = vsel %vm341, %v3184, 0
        %v3237 = vsel %vm341, %v3185, 0
        %v3240 = vsel %vm341, %v3186, 0
        %v3243 = vsel %vm341, %v3187, 0
        %v3246 = vsel %vm341, %v3188, 0
        %v3249 = vsel %vm341, %v3189, 0
        %v3252 = vsel %vm341, %v3190, 0
        %v3255 = vsel %vm341, %v3191, 0
        %3257 = vmatprep.subr.bf16.mxu0 0
        %3258 = vmatpush1.bf16.msra.mxu0 %v3205
        %3259 = vmatprep.subr.bf16.mxu0 0
        %3260 = vmatpush1.bf16.msra.mxu0 %v3206
        %3261 = vmatprep.subr.bf16.mxu0 0
        %3262 = vmatpush1.bf16.msra.mxu0 0
        %3263 = vmatprep.subr.bf16.mxu0 0
        %3264 = vmatpush1.bf16.msra.mxu0 0
        %3265 = vmatprep.subr.bf16.mxu0 0
        %3266 = vmatpush1.bf16.msra.mxu0 0
        %3267 = vmatprep.subr.bf16.mxu0 0
        %3268 = vmatpush1.bf16.msra.mxu0 0
        %3269 = vmatprep.subr.bf16.mxu0 0
        %3270 = vmatpush1.bf16.msra.mxu0 0
        %3271 = vmatprep.subr.bf16.mxu0 0
        %3272 = vmatpush1.bf16.msra.mxu0 0
        %3273 = vmatprep.subr.bf16.mxu0 0
        %3274 = vmatpush1.bf16.msra.mxu0 0
        %3275 = vmatprep.subr.bf16.mxu0 0
        %3276 = vmatpush1.bf16.msra.mxu0 0
        %3277 = vmatprep.subr.bf16.mxu0 0
        %3278 = vmatpush1.bf16.msra.mxu0 0
        %3279 = vmatprep.subr.bf16.mxu0 0
        %3280 = vmatpush1.bf16.msra.mxu0 0
        %3281 = vmatprep.subr.bf16.mxu0 0
        %3282 = vmatpush1.bf16.msra.mxu0 0
        %3283 = vmatprep.subr.bf16.mxu0 0
        %3284 = vmatpush1.bf16.msra.mxu0 0
        %3285 = vmatprep.subr.bf16.mxu0 0
        %3286 = vmatpush1.bf16.msra.mxu0 0
        %3287 = vmatprep.subr.bf16.mxu0 0
        %3288 = vmatpush1.bf16.msra.mxu0 0
        %3289 = vmatprep.mubr.bf16.mxu0 0
        %3290 = vmatmul.mubr.bf16.gmra.mrb[0].mxu0 %v3210
        %v3291 = vpop.f32.mrb[0].mxu0
        %v3292 = vadd.f32 0.0, %v3291
        %v3293 = vpop.f32.mrb[0].mxu0
        %v3294 = vpop.f32.mrb[0].mxu0
        %v3295 = vadd.f32 0.0, %v3294
        %v3296 = vpop.f32.mrb[0].mxu0
        %3297 = vmatprep.mubr.bf16.mxu0 0
        %3298 = vmatmul.mubr.bf16.gmra.mrb[0].mxu0 %v3213
        %v3299 = vpop.f32.mrb[0].mxu0
        %v3300 = vadd.f32 0.0, %v3299
        %v3301 = vpop.f32.mrb[0].mxu0
        %v3302 = vpop.f32.mrb[0].mxu0
        %v3303 = vadd.f32 0.0, %v3302
        %v3304 = vpop.f32.mrb[0].mxu0
        %3305 = vmatprep.mubr.bf16.mxu0 0
        %3306 = vmatmul.mubr.bf16.gmra.mrb[0].mxu0 %v3216
        %v3307 = vpop.f32.mrb[0].mxu0
        %v3308 = vadd.f32 0.0, %v3307
        %v3309 = vpop.f32.mrb[0].mxu0
        %v3310 = vpop.f32.mrb[0].mxu0
        %v3311 = vadd.f32 0.0, %v3310
        %v3312 = vpop.f32.mrb[0].mxu0
        %3313 = vmatprep.mubr.bf16.mxu0 0
        %3314 = vmatmul.mubr.bf16.gmra.mrb[0].mxu0 %v3219
        %v3315 = vpop.f32.mrb[0].mxu0
        %v3316 = vadd.f32 0.0, %v3315
        %v3317 = vpop.f32.mrb[0].mxu0
        %v3318 = vpop.f32.mrb[0].mxu0
        %v3319 = vadd.f32 0.0, %v3318
        %v3320 = vpop.f32.mrb[0].mxu0
        %3321 = vmatprep.mubr.bf16.mxu0 0
        %3322 = vmatmul.mubr.bf16.gmra.mrb[0].mxu0 %v3222
        %v3323 = vpop.f32.mrb[0].mxu0
        %v3324 = vadd.f32 0.0, %v3323
        %v3325 = vpop.f32.mrb[0].mxu0
        %v3326 = vpop.f32.mrb[0].mxu0
        %v3327 = vadd.f32 0.0, %v3326
        %v3328 = vpop.f32.mrb[0].mxu0
        %3329 = vmatprep.mubr.bf16.mxu0 0
        %3330 = vmatmul.mubr.bf16.gmra.mrb[0].mxu0 %v3225
        %v3331 = vpop.f32.mrb[0].mxu0
        %v3332 = vadd.f32 0.0, %v3331
        %v3333 = vpop.f32.mrb[0].mxu0
        %v3334 = vpop.f32.mrb[0].mxu0
        %v3335 = vadd.f32 0.0, %v3334
        %v3336 = vpop.f32.mrb[0].mxu0
        %3337 = vmatprep.mubr.bf16.mxu0 0
        %3338 = vmatmul.mubr.bf16.gmra.mrb[0].mxu0 %v3228
        %v3339 = vpop.f32.mrb[0].mxu0
        %v3340 = vadd.f32 0.0, %v3339
        %v3341 = vpop.f32.mrb[0].mxu0
        %v3342 = vpop.f32.mrb[0].mxu0
        %v3343 = vadd.f32 0.0, %v3342
        %v3344 = vpop.f32.mrb[0].mxu0
        %3345 = vmatprep.mubr.bf16.mxu0 0
        %3346 = vmatmul.mubr.bf16.gmra.mrb[0].mxu0 %v3231
        %v3347 = vpop.f32.mrb[0].mxu0
        %v3348 = vadd.f32 0.0, %v3347
        %v3349 = vpop.f32.mrb[0].mxu0
        %v3350 = vpop.f32.mrb[0].mxu0
        %v3351 = vadd.f32 0.0, %v3350
        %v3352 = vpop.f32.mrb[0].mxu0
        %3353 = vmatprep.mubr.bf16.mxu0 0
        %3354 = vmatmul.mubr.bf16.gmra.mrb[0].mxu0 %v3234
        %v3355 = vpop.f32.mrb[0].mxu0
        %v3356 = vadd.f32 0.0, %v3355
        %v3357 = vpop.f32.mrb[0].mxu0
        %v3358 = vpop.f32.mrb[0].mxu0
        %v3359 = vadd.f32 0.0, %v3358
        %v3360 = vpop.f32.mrb[0].mxu0
        %3361 = vmatprep.mubr.bf16.mxu0 0
        %3362 = vmatmul.mubr.bf16.gmra.mrb[0].mxu0 %v3237
        %v3363 = vpop.f32.mrb[0].mxu0
        %v3364 = vadd.f32 0.0, %v3363
        %v3365 = vpop.f32.mrb[0].mxu0
        %v3366 = vpop.f32.mrb[0].mxu0
        %v3367 = vadd.f32 0.0, %v3366
        %v3368 = vpop.f32.mrb[0].mxu0
        %3369 = vmatprep.mubr.bf16.mxu0 0
        %3370 = vmatmul.mubr.bf16.gmra.mrb[0].mxu0 %v3240
        %v3371 = vpop.f32.mrb[0].mxu0
        %v3372 = vadd.f32 0.0, %v3371
        %v3373 = vpop.f32.mrb[0].mxu0
        %v3374 = vpop.f32.mrb[0].mxu0
        %v3375 = vadd.f32 0.0, %v3374
        %v3376 = vpop.f32.mrb[0].mxu0
        %3377 = vmatprep.mubr.bf16.mxu0 0
        %3378 = vmatmul.mubr.bf16.gmra.mrb[0].mxu0 %v3243
        %v3379 = vpop.f32.mrb[0].mxu0
        %v3380 = vadd.f32 0.0, %v3379
        %v3381 = vpop.f32.mrb[0].mxu0
        %v3382 = vpop.f32.mrb[0].mxu0
        %v3383 = vadd.f32 0.0, %v3382
        %v3384 = vpop.f32.mrb[0].mxu0
        %3385 = vmatprep.mubr.bf16.mxu0 0
        %3386 = vmatmul.mubr.bf16.gmra.mrb[0].mxu0 %v3246
        %v3387 = vpop.f32.mrb[0].mxu0
        %v3388 = vadd.f32 0.0, %v3387
        %v3389 = vpop.f32.mrb[0].mxu0
        %v3390 = vpop.f32.mrb[0].mxu0
        %v3391 = vadd.f32 0.0, %v3390
        %v3392 = vpop.f32.mrb[0].mxu0
        %3393 = vmatprep.mubr.bf16.mxu0 0
        %3394 = vmatmul.mubr.bf16.gmra.mrb[0].mxu0 %v3249
        %v3395 = vpop.f32.mrb[0].mxu0
        %v3396 = vadd.f32 0.0, %v3395
        %v3397 = vpop.f32.mrb[0].mxu0
        %v3398 = vpop.f32.mrb[0].mxu0
        %v3399 = vadd.f32 0.0, %v3398
        %v3400 = vpop.f32.mrb[0].mxu0
        %3401 = vmatprep.mubr.bf16.mxu0 0
        %3402 = vmatmul.mubr.bf16.gmra.mrb[0].mxu0 %v3252
        %v3403 = vpop.f32.mrb[0].mxu0
        %v3404 = vadd.f32 0.0, %v3403
        %v3405 = vpop.f32.mrb[0].mxu0
        %v3406 = vpop.f32.mrb[0].mxu0
        %v3407 = vadd.f32 0.0, %v3406
        %v3408 = vpop.f32.mrb[0].mxu0
        %3409 = vmatprep.mubr.bf16.mxu0 0
        %3410 = vmatmul.mubr.bf16.gmra.mrb[0].mxu0 %v3255
        %v3411 = vpop.f32.mrb[0].mxu0
        %v3412 = vadd.f32 0.0, %v3411
        %v3413 = vpop.f32.mrb[0].mxu0
        %v3414 = vpop.f32.mrb[0].mxu0
        %v3415 = vadd.f32 0.0, %v3414
        %v3416 = vpop.f32.mrb[0].mxu0
        %3417 = vdwg.mxu0
        %v3422 = vunpack.c.l.b16 %v3140
        %v3423 = vunpack.c.l.b16 %v3141
        %v3424 = vunpack.c.l.b16 %v3142
        %v3425 = vunpack.c.l.b16 %v3143
        %v3426 = vpack.c.b16 %v3423, %v3422
        %v3427 = vpack.c.b16 %v3425, %v3424
        %v3431 = vsel %vm341, %v3124, 0
        %v3434 = vsel %vm341, %v3125, 0
        %v3437 = vsel %vm341, %v3126, 0
        %v3440 = vsel %vm341, %v3127, 0
        %v3443 = vsel %vm341, %v3128, 0
        %v3446 = vsel %vm341, %v3129, 0
        %v3449 = vsel %vm341, %v3130, 0
        %v3452 = vsel %vm341, %v3131, 0
        %v3455 = vsel %vm341, %v3132, 0
        %v3458 = vsel %vm341, %v3133, 0
        %v3461 = vsel %vm341, %v3134, 0
        %v3464 = vsel %vm341, %v3135, 0
        %v3467 = vsel %vm341, %v3136, 0
        %v3470 = vsel %vm341, %v3137, 0
        %v3473 = vsel %vm341, %v3138, 0
        %v3476 = vsel %vm341, %v3139, 0
        %3478 = vmatprep.subr.bf16.mxu0 0
        %3479 = vmatpush1.bf16.msra.mxu0 %v3426
        %3480 = vmatprep.subr.bf16.mxu0 0
        %3481 = vmatpush1.bf16.msra.mxu0 %v3427
        %3482 = vmatprep.subr.bf16.mxu0 0
        %3483 = vmatpush1.bf16.msra.mxu0 0
        %3484 = vmatprep.subr.bf16.mxu0 0
        %3485 = vmatpush1.bf16.msra.mxu0 0
        %3486 = vmatprep.subr.bf16.mxu0 0
        %3487 = vmatpush1.bf16.msra.mxu0 0
        %3488 = vmatprep.subr.bf16.mxu0 0
        %3489 = vmatpush1.bf16.msra.mxu0 0
        %3490 = vmatprep.subr.bf16.mxu0 0
        %3491 = vmatpush1.bf16.msra.mxu0 0
        %3492 = vmatprep.subr.bf16.mxu0 0
        %3493 = vmatpush1.bf16.msra.mxu0 0
        %3494 = vmatprep.subr.bf16.mxu0 0
        %3495 = vmatpush1.bf16.msra.mxu0 0
        %3496 = vmatprep.subr.bf16.mxu0 0
        %3497 = vmatpush1.bf16.msra.mxu0 0
        %3498 = vmatprep.subr.bf16.mxu0 0
        %3499 = vmatpush1.bf16.msra.mxu0 0
        %3500 = vmatprep.subr.bf16.mxu0 0
        %3501 = vmatpush1.bf16.msra.mxu0 0
        %3502 = vmatprep.subr.bf16.mxu0 0
        %3503 = vmatpush1.bf16.msra.mxu0 0
        %3504 = vmatprep.subr.bf16.mxu0 0
        %3505 = vmatpush1.bf16.msra.mxu0 0
        %3506 = vmatprep.subr.bf16.mxu0 0
        %3507 = vmatpush1.bf16.msra.mxu0 0
        %3508 = vmatprep.subr.bf16.mxu0 0
        %3509 = vmatpush1.bf16.msra.mxu0 0
        %3510 = vmatprep.mubr.bf16.mxu0 0
        %3511 = vmatmul.mubr.bf16.gmra.mrb[0].mxu0 %v3431
        %v3512 = vpop.f32.mrb[0].mxu0
        %v3513 = vadd.f32 %v3292, %v3512
        %v3514 = vpop.f32.mrb[0].mxu0
        %v3515 = vpop.f32.mrb[0].mxu0
        %v3516 = vadd.f32 %v3295, %v3515
        %v3517 = vpop.f32.mrb[0].mxu0
        %3518 = vmatprep.mubr.bf16.mxu0 0
        %3519 = vmatmul.mubr.bf16.gmra.mrb[0].mxu0 %v3434
        %v3520 = vpop.f32.mrb[0].mxu0
        %v3521 = vadd.f32 %v3300, %v3520
        %v3522 = vpop.f32.mrb[0].mxu0
        %v3523 = vpop.f32.mrb[0].mxu0
        %v3524 = vadd.f32 %v3303, %v3523
        %v3525 = vpop.f32.mrb[0].mxu0
        %3526 = vmatprep.mubr.bf16.mxu0 0
        %3527 = vmatmul.mubr.bf16.gmra.mrb[0].mxu0 %v3437
        %v3528 = vpop.f32.mrb[0].mxu0
        %v3529 = vadd.f32 %v3308, %v3528
        %v3530 = vpop.f32.mrb[0].mxu0
        %v3531 = vpop.f32.mrb[0].mxu0
        %v3532 = vadd.f32 %v3311, %v3531
        %v3533 = vpop.f32.mrb[0].mxu0
        %3534 = vmatprep.mubr.bf16.mxu0 0
        %3535 = vmatmul.mubr.bf16.gmra.mrb[0].mxu0 %v3440
        %v3536 = vpop.f32.mrb[0].mxu0
        %v3537 = vadd.f32 %v3316, %v3536
        %v3538 = vpop.f32.mrb[0].mxu0
        %v3539 = vpop.f32.mrb[0].mxu0
        %v3540 = vadd.f32 %v3319, %v3539
        %v3541 = vpop.f32.mrb[0].mxu0
        %3542 = vmatprep.mubr.bf16.mxu0 0
        %3543 = vmatmul.mubr.bf16.gmra.mrb[0].mxu0 %v3443
        %v3544 = vpop.f32.mrb[0].mxu0
        %v3545 = vadd.f32 %v3324, %v3544
        %v3546 = vpop.f32.mrb[0].mxu0
        %v3547 = vpop.f32.mrb[0].mxu0
        %v3548 = vadd.f32 %v3327, %v3547
        %v3549 = vpop.f32.mrb[0].mxu0
        %3550 = vmatprep.mubr.bf16.mxu0 0
        %3551 = vmatmul.mubr.bf16.gmra.mrb[0].mxu0 %v3446
        %v3552 = vpop.f32.mrb[0].mxu0
        %v3553 = vadd.f32 %v3332, %v3552
        %v3554 = vpop.f32.mrb[0].mxu0
        %v3555 = vpop.f32.mrb[0].mxu0
        %v3556 = vadd.f32 %v3335, %v3555
        %v3557 = vpop.f32.mrb[0].mxu0
        %3558 = vmatprep.mubr.bf16.mxu0 0
        %3559 = vmatmul.mubr.bf16.gmra.mrb[0].mxu0 %v3449
        %v3560 = vpop.f32.mrb[0].mxu0
        %v3561 = vadd.f32 %v3340, %v3560
        %v3562 = vpop.f32.mrb[0].mxu0
        %v3563 = vpop.f32.mrb[0].mxu0
        %v3564 = vadd.f32 %v3343, %v3563
        %v3565 = vpop.f32.mrb[0].mxu0
        %3566 = vmatprep.mubr.bf16.mxu0 0
        %3567 = vmatmul.mubr.bf16.gmra.mrb[0].mxu0 %v3452
        %v3568 = vpop.f32.mrb[0].mxu0
        %v3569 = vadd.f32 %v3348, %v3568
        %v3570 = vpop.f32.mrb[0].mxu0
        %v3571 = vpop.f32.mrb[0].mxu0
        %v3572 = vadd.f32 %v3351, %v3571
        %v3573 = vpop.f32.mrb[0].mxu0
        %3574 = vmatprep.mubr.bf16.mxu0 0
        %3575 = vmatmul.mubr.bf16.gmra.mrb[0].mxu0 %v3455
        %v3576 = vpop.f32.mrb[0].mxu0
        %v3577 = vadd.f32 %v3356, %v3576
        %v3578 = vpop.f32.mrb[0].mxu0
        %v3579 = vpop.f32.mrb[0].mxu0
        %v3580 = vadd.f32 %v3359, %v3579
        %v3581 = vpop.f32.mrb[0].mxu0
        %3582 = vmatprep.mubr.bf16.mxu0 0
        %3583 = vmatmul.mubr.bf16.gmra.mrb[0].mxu0 %v3458
        %v3584 = vpop.f32.mrb[0].mxu0
        %v3585 = vadd.f32 %v3364, %v3584
        %v3586 = vpop.f32.mrb[0].mxu0
        %v3587 = vpop.f32.mrb[0].mxu0
        %v3588 = vadd.f32 %v3367, %v3587
        %v3589 = vpop.f32.mrb[0].mxu0
        %3590 = vmatprep.mubr.bf16.mxu0 0
        %3591 = vmatmul.mubr.bf16.gmra.mrb[0].mxu0 %v3461
        %v3592 = vpop.f32.mrb[0].mxu0
        %v3593 = vadd.f32 %v3372, %v3592
        %v3594 = vpop.f32.mrb[0].mxu0
        %v3595 = vpop.f32.mrb[0].mxu0
        %v3596 = vadd.f32 %v3375, %v3595
        %v3597 = vpop.f32.mrb[0].mxu0
        %3598 = vmatprep.mubr.bf16.mxu0 0
        %3599 = vmatmul.mubr.bf16.gmra.mrb[0].mxu0 %v3464
        %v3600 = vpop.f32.mrb[0].mxu0
        %v3601 = vadd.f32 %v3380, %v3600
        %v3602 = vpop.f32.mrb[0].mxu0
        %v3603 = vpop.f32.mrb[0].mxu0
        %v3604 = vadd.f32 %v3383, %v3603
        %v3605 = vpop.f32.mrb[0].mxu0
        %3606 = vmatprep.mubr.bf16.mxu0 0
        %3607 = vmatmul.mubr.bf16.gmra.mrb[0].mxu0 %v3467
        %v3608 = vpop.f32.mrb[0].mxu0
        %v3609 = vadd.f32 %v3388, %v3608
        %v3610 = vpop.f32.mrb[0].mxu0
        %v3611 = vpop.f32.mrb[0].mxu0
        %v3612 = vadd.f32 %v3391, %v3611
        %v3613 = vpop.f32.mrb[0].mxu0
        %3614 = vmatprep.mubr.bf16.mxu0 0
        %3615 = vmatmul.mubr.bf16.gmra.mrb[0].mxu0 %v3470
        %v3616 = vpop.f32.mrb[0].mxu0
        %v3617 = vadd.f32 %v3396, %v3616
        %v3618 = vpop.f32.mrb[0].mxu0
        %v3619 = vpop.f32.mrb[0].mxu0
        %v3620 = vadd.f32 %v3399, %v3619
        %v3621 = vpop.f32.mrb[0].mxu0
        %3622 = vmatprep.mubr.bf16.mxu0 0
        %3623 = vmatmul.mubr.bf16.gmra.mrb[0].mxu0 %v3473
        %v3624 = vpop.f32.mrb[0].mxu0
        %v3625 = vadd.f32 %v3404, %v3624
        %v3626 = vpop.f32.mrb[0].mxu0
        %v3627 = vpop.f32.mrb[0].mxu0
        %v3628 = vadd.f32 %v3407, %v3627
        %v3629 = vpop.f32.mrb[0].mxu0
        %3630 = vmatprep.mubr.bf16.mxu0 0
        %3631 = vmatmul.mubr.bf16.gmra.mrb[0].mxu0 %v3476
        %v3632 = vpop.f32.mrb[0].mxu0
        %v3633 = vadd.f32 %v3412, %v3632
        %v3634 = vpop.f32.mrb[0].mxu0
        %v3635 = vpop.f32.mrb[0].mxu0
        %v3636 = vadd.f32 %v3415, %v3635
        %v3637 = vpop.f32.mrb[0].mxu0
        %3638 = vdwg.mxu0
        %v3639 = vld [vmem:[#allocation2 + $0x9] sm:$0xff]
        %v3640 = vld [vmem:[#allocation2 + $0x11] sm:$0xff]
        %v3641 = vld [vmem:[#allocation2 + $0x29] sm:$0xff]
        %v3642 = vld [vmem:[#allocation2 + $0x31] sm:$0xff]
        %v3643 = vld [vmem:[#allocation2 + $0x49] sm:$0xff]
        %v3644 = vld [vmem:[#allocation2 + $0x51] sm:$0xff]
        %v3645 = vld [vmem:[#allocation2 + $0x69] sm:$0xff]
        %v3646 = vld [vmem:[#allocation2 + $0x71] sm:$0xff]
        %v3647 = vld [vmem:[#allocation2 + $0x89] sm:$0xff]
        %v3648 = vld [vmem:[#allocation2 + $0x91] sm:$0xff]
        %v3649 = vld [vmem:[#allocation2 + $0xa9] sm:$0xff]
        %v3650 = vld [vmem:[#allocation2 + $0xb1] sm:$0xff]
        %v3651 = vld [vmem:[#allocation2 + $0xc9] sm:$0xff]
        %v3652 = vld [vmem:[#allocation2 + $0xd1] sm:$0xff]
        %v3653 = vld [vmem:[#allocation2 + $0xe9] sm:$0xff]
        %v3654 = vld [vmem:[#allocation2 + $0xf1] sm:$0xff]
        %v3655 = vld [vmem:[#allocation2 + $0x109] sm:$0xff]
        %v3656 = vld [vmem:[#allocation2 + $0x111] sm:$0xff]
        %v3657 = vld [vmem:[#allocation2 + $0x129] sm:$0xff]
        %v3658 = vld [vmem:[#allocation2 + $0x131] sm:$0xff]
        %v3659 = vld [vmem:[#allocation2 + $0x149] sm:$0xff]
        %v3660 = vld [vmem:[#allocation2 + $0x151] sm:$0xff]
        %v3661 = vld [vmem:[#allocation2 + $0x169] sm:$0xff]
        %v3662 = vld [vmem:[#allocation2 + $0x171] sm:$0xff]
        %v3663 = vld [vmem:[#allocation2 + $0x189] sm:$0xff]
        %v3664 = vld [vmem:[#allocation2 + $0x191] sm:$0xff]
        %v3665 = vld [vmem:[#allocation2 + $0x1a9] sm:$0xff]
        %v3666 = vld [vmem:[#allocation2 + $0x1b1] sm:$0xff]
        %v3667 = vld [vmem:[#allocation2 + $0x1c9] sm:$0xff]
        %v3668 = vld [vmem:[#allocation2 + $0x1d1] sm:$0xff]
        %v3669 = vld [vmem:[#allocation2 + $0x1e9] sm:$0xff]
        %v3670 = vld [vmem:[#allocation2 + $0x1f1] sm:$0xff]
        %v3671 = vpack.c.bf16 %v3640, %v3639
        %v3672 = vpack.c.bf16 %v3642, %v3641
        %v3673 = vpack.c.bf16 %v3644, %v3643
        %v3674 = vpack.c.bf16 %v3646, %v3645
        %v3675 = vpack.c.bf16 %v3648, %v3647
        %v3676 = vpack.c.bf16 %v3650, %v3649
        %v3677 = vpack.c.bf16 %v3652, %v3651
        %v3678 = vpack.c.bf16 %v3654, %v3653
        %v3679 = vpack.c.bf16 %v3656, %v3655
        %v3680 = vpack.c.bf16 %v3658, %v3657
        %v3681 = vpack.c.bf16 %v3660, %v3659
        %v3682 = vpack.c.bf16 %v3662, %v3661
        %v3683 = vpack.c.bf16 %v3664, %v3663
        %v3684 = vpack.c.bf16 %v3666, %v3665
        %v3685 = vpack.c.bf16 %v3668, %v3667
        %v3686 = vpack.c.bf16 %v3670, %v3669
        %s3687 = scalar_lea.vmem %s3, 32
        %v3688 = vld [vmem:[%s3687] sm:$0xf]
        %v3689 = vld [vmem:[%s3687 + $0x4] sm:$0xf]
        %v3690 = vld [vmem:[%s3687 + $0x8] sm:$0xf]
        %v3691 = vld [vmem:[%s3687 + $0xc] sm:$0xf]
        %v3696 = vunpack.c.l.b16 %v3688
        %v3697 = vunpack.c.l.b16 %v3689
        %v3698 = vunpack.c.l.b16 %v3690
        %v3699 = vunpack.c.l.b16 %v3691
        %v3700 = vpack.c.b16 %v3697, %v3696
        %v3701 = vpack.c.b16 %v3699, %v3698
        %v3705 = vsel %vm341, %v3671, 0
        %v3708 = vsel %vm341, %v3672, 0
        %v3711 = vsel %vm341, %v3673, 0
        %v3714 = vsel %vm341, %v3674, 0
        %v3717 = vsel %vm341, %v3675, 0
        %v3720 = vsel %vm341, %v3676, 0
        %v3723 = vsel %vm341, %v3677, 0
        %v3726 = vsel %vm341, %v3678, 0
        %v3729 = vsel %vm341, %v3679, 0
        %v3732 = vsel %vm341, %v3680, 0
        %v3735 = vsel %vm341, %v3681, 0
        %v3738 = vsel %vm341, %v3682, 0
        %v3741 = vsel %vm341, %v3683, 0
        %v3744 = vsel %vm341, %v3684, 0
        %v3747 = vsel %vm341, %v3685, 0
        %v3750 = vsel %vm341, %v3686, 0
        %3752 = vmatprep.subr.bf16.mxu0 0
        %3753 = vmatpush1.bf16.msra.mxu0 %v3700
        %3754 = vmatprep.subr.bf16.mxu0 0
        %3755 = vmatpush1.bf16.msra.mxu0 %v3701
        %3756 = vmatprep.subr.bf16.mxu0 0
        %3757 = vmatpush1.bf16.msra.mxu0 0
        %3758 = vmatprep.subr.bf16.mxu0 0
        %3759 = vmatpush1.bf16.msra.mxu0 0
        %3760 = vmatprep.subr.bf16.mxu0 0
        %3761 = vmatpush1.bf16.msra.mxu0 0
        %3762 = vmatprep.subr.bf16.mxu0 0
        %3763 = vmatpush1.bf16.msra.mxu0 0
        %3764 = vmatprep.subr.bf16.mxu0 0
        %3765 = vmatpush1.bf16.msra.mxu0 0
        %3766 = vmatprep.subr.bf16.mxu0 0
        %3767 = vmatpush1.bf16.msra.mxu0 0
        %3768 = vmatprep.subr.bf16.mxu0 0
        %3769 = vmatpush1.bf16.msra.mxu0 0
        %3770 = vmatprep.subr.bf16.mxu0 0
        %3771 = vmatpush1.bf16.msra.mxu0 0
        %3772 = vmatprep.subr.bf16.mxu0 0
        %3773 = vmatpush1.bf16.msra.mxu0 0
        %3774 = vmatprep.subr.bf16.mxu0 0
        %3775 = vmatpush1.bf16.msra.mxu0 0
        %3776 = vmatprep.subr.bf16.mxu0 0
        %3777 = vmatpush1.bf16.msra.mxu0 0
        %3778 = vmatprep.subr.bf16.mxu0 0
        %3779 = vmatpush1.bf16.msra.mxu0 0
        %3780 = vmatprep.subr.bf16.mxu0 0
        %3781 = vmatpush1.bf16.msra.mxu0 0
        %3782 = vmatprep.subr.bf16.mxu0 0
        %3783 = vmatpush1.bf16.msra.mxu0 0
        %3784 = vmatprep.mubr.bf16.mxu0 0
        %3785 = vmatmul.mubr.bf16.gmra.mrb[0].mxu0 %v3705
        %v3786 = vpop.f32.mrb[0].mxu0
        %v3787 = vadd.f32 0.0, %v3786
        %v3788 = vpop.f32.mrb[0].mxu0
        %v3789 = vpop.f32.mrb[0].mxu0
        %v3790 = vadd.f32 0.0, %v3789
        %v3791 = vpop.f32.mrb[0].mxu0
        %3792 = vmatprep.mubr.bf16.mxu0 0
        %3793 = vmatmul.mubr.bf16.gmra.mrb[0].mxu0 %v3708
        %v3794 = vpop.f32.mrb[0].mxu0
        %v3795 = vadd.f32 0.0, %v3794
        %v3796 = vpop.f32.mrb[0].mxu0
        %v3797 = vpop.f32.mrb[0].mxu0
        %v3798 = vadd.f32 0.0, %v3797
        %v3799 = vpop.f32.mrb[0].mxu0
        %3800 = vmatprep.mubr.bf16.mxu0 0
        %3801 = vmatmul.mubr.bf16.gmra.mrb[0].mxu0 %v3711
        %v3802 = vpop.f32.mrb[0].mxu0
        %v3803 = vadd.f32 0.0, %v3802
        %v3804 = vpop.f32.mrb[0].mxu0
        %v3805 = vpop.f32.mrb[0].mxu0
        %v3806 = vadd.f32 0.0, %v3805
        %v3807 = vpop.f32.mrb[0].mxu0
        %3808 = vmatprep.mubr.bf16.mxu0 0
        %3809 = vmatmul.mubr.bf16.gmra.mrb[0].mxu0 %v3714
        %v3810 = vpop.f32.mrb[0].mxu0
        %v3811 = vadd.f32 0.0, %v3810
        %v3812 = vpop.f32.mrb[0].mxu0
        %v3813 = vpop.f32.mrb[0].mxu0
        %v3814 = vadd.f32 0.0, %v3813
        %v3815 = vpop.f32.mrb[0].mxu0
        %3816 = vmatprep.mubr.bf16.mxu0 0
        %3817 = vmatmul.mubr.bf16.gmra.mrb[0].mxu0 %v3717
        %v3818 = vpop.f32.mrb[0].mxu0
        %v3819 = vadd.f32 0.0, %v3818
        %v3820 = vpop.f32.mrb[0].mxu0
        %v3821 = vpop.f32.mrb[0].mxu0
        %v3822 = vadd.f32 0.0, %v3821
        %v3823 = vpop.f32.mrb[0].mxu0
        %3824 = vmatprep.mubr.bf16.mxu0 0
        %3825 = vmatmul.mubr.bf16.gmra.mrb[0].mxu0 %v3720
        %v3826 = vpop.f32.mrb[0].mxu0
        %v3827 = vadd.f32 0.0, %v3826
        %v3828 = vpop.f32.mrb[0].mxu0
        %v3829 = vpop.f32.mrb[0].mxu0
        %v3830 = vadd.f32 0.0, %v3829
        %v3831 = vpop.f32.mrb[0].mxu0
        %3832 = vmatprep.mubr.bf16.mxu0 0
        %3833 = vmatmul.mubr.bf16.gmra.mrb[0].mxu0 %v3723
        %v3834 = vpop.f32.mrb[0].mxu0
        %v3835 = vadd.f32 0.0, %v3834
        %v3836 = vpop.f32.mrb[0].mxu0
        %v3837 = vpop.f32.mrb[0].mxu0
        %v3838 = vadd.f32 0.0, %v3837
        %v3839 = vpop.f32.mrb[0].mxu0
        %3840 = vmatprep.mubr.bf16.mxu0 0
        %3841 = vmatmul.mubr.bf16.gmra.mrb[0].mxu0 %v3726
        %v3842 = vpop.f32.mrb[0].mxu0
        %v3843 = vadd.f32 0.0, %v3842
        %v3844 = vpop.f32.mrb[0].mxu0
        %v3845 = vpop.f32.mrb[0].mxu0
        %v3846 = vadd.f32 0.0, %v3845
        %v3847 = vpop.f32.mrb[0].mxu0
        %3848 = vmatprep.mubr.bf16.mxu0 0
        %3849 = vmatmul.mubr.bf16.gmra.mrb[0].mxu0 %v3729
        %v3850 = vpop.f32.mrb[0].mxu0
        %v3851 = vadd.f32 0.0, %v3850
        %v3852 = vpop.f32.mrb[0].mxu0
        %v3853 = vpop.f32.mrb[0].mxu0
        %v3854 = vadd.f32 0.0, %v3853
        %v3855 = vpop.f32.mrb[0].mxu0
        %3856 = vmatprep.mubr.bf16.mxu0 0
        %3857 = vmatmul.mubr.bf16.gmra.mrb[0].mxu0 %v3732
        %v3858 = vpop.f32.mrb[0].mxu0
        %v3859 = vadd.f32 0.0, %v3858
        %v3860 = vpop.f32.mrb[0].mxu0
        %v3861 = vpop.f32.mrb[0].mxu0
        %v3862 = vadd.f32 0.0, %v3861
        %v3863 = vpop.f32.mrb[0].mxu0
        %3864 = vmatprep.mubr.bf16.mxu0 0
        %3865 = vmatmul.mubr.bf16.gmra.mrb[0].mxu0 %v3735
        %v3866 = vpop.f32.mrb[0].mxu0
        %v3867 = vadd.f32 0.0, %v3866
        %v3868 = vpop.f32.mrb[0].mxu0
        %v3869 = vpop.f32.mrb[0].mxu0
        %v3870 = vadd.f32 0.0, %v3869
        %v3871 = vpop.f32.mrb[0].mxu0
        %3872 = vmatprep.mubr.bf16.mxu0 0
        %3873 = vmatmul.mubr.bf16.gmra.mrb[0].mxu0 %v3738
        %v3874 = vpop.f32.mrb[0].mxu0
        %v3875 = vadd.f32 0.0, %v3874
        %v3876 = vpop.f32.mrb[0].mxu0
        %v3877 = vpop.f32.mrb[0].mxu0
        %v3878 = vadd.f32 0.0, %v3877
        %v3879 = vpop.f32.mrb[0].mxu0
        %3880 = vmatprep.mubr.bf16.mxu0 0
        %3881 = vmatmul.mubr.bf16.gmra.mrb[0].mxu0 %v3741
        %v3882 = vpop.f32.mrb[0].mxu0
        %v3883 = vadd.f32 0.0, %v3882
        %v3884 = vpop.f32.mrb[0].mxu0
        %v3885 = vpop.f32.mrb[0].mxu0
        %v3886 = vadd.f32 0.0, %v3885
        %v3887 = vpop.f32.mrb[0].mxu0
        %3888 = vmatprep.mubr.bf16.mxu0 0
        %3889 = vmatmul.mubr.bf16.gmra.mrb[0].mxu0 %v3744
        %v3890 = vpop.f32.mrb[0].mxu0
        %v3891 = vadd.f32 0.0, %v3890
        %v3892 = vpop.f32.mrb[0].mxu0
        %v3893 = vpop.f32.mrb[0].mxu0
        %v3894 = vadd.f32 0.0, %v3893
        %v3895 = vpop.f32.mrb[0].mxu0
        %3896 = vmatprep.mubr.bf16.mxu0 0
        %3897 = vmatmul.mubr.bf16.gmra.mrb[0].mxu0 %v3747
        %v3898 = vpop.f32.mrb[0].mxu0
        %v3899 = vadd.f32 0.0, %v3898
        %v3900 = vpop.f32.mrb[0].mxu0
        %v3901 = vpop.f32.mrb[0].mxu0
        %v3902 = vadd.f32 0.0, %v3901
        %v3903 = vpop.f32.mrb[0].mxu0
        %3904 = vmatprep.mubr.bf16.mxu0 0
        %3905 = vmatmul.mubr.bf16.gmra.mrb[0].mxu0 %v3750
        %v3906 = vpop.f32.mrb[0].mxu0
        %v3907 = vadd.f32 0.0, %v3906
        %v3908 = vpop.f32.mrb[0].mxu0
        %v3909 = vpop.f32.mrb[0].mxu0
        %v3910 = vadd.f32 0.0, %v3909
        %v3911 = vpop.f32.mrb[0].mxu0
        %3912 = vdwg.mxu0
        %v3913 = vadd.f32 %v3513, %v3787
        %v3914 = vadd.f32 %v3516, %v3790
        %v3915 = vadd.f32 %v3521, %v3795
        %v3916 = vadd.f32 %v3524, %v3798
        %v3917 = vadd.f32 %v3529, %v3803
        %v3918 = vadd.f32 %v3532, %v3806
        %v3919 = vadd.f32 %v3537, %v3811
        %v3920 = vadd.f32 %v3540, %v3814
        %v3921 = vadd.f32 %v3545, %v3819
        %v3922 = vadd.f32 %v3548, %v3822
        %v3923 = vadd.f32 %v3553, %v3827
        %v3924 = vadd.f32 %v3556, %v3830
        %v3925 = vadd.f32 %v3561, %v3835
        %v3926 = vadd.f32 %v3564, %v3838
        %v3927 = vadd.f32 %v3569, %v3843
        %v3928 = vadd.f32 %v3572, %v3846
        %v3929 = vadd.f32 %v3577, %v3851
        %v3930 = vadd.f32 %v3580, %v3854
        %v3931 = vadd.f32 %v3585, %v3859
        %v3932 = vadd.f32 %v3588, %v3862
        %v3933 = vadd.f32 %v3593, %v3867
        %v3934 = vadd.f32 %v3596, %v3870
        %v3935 = vadd.f32 %v3601, %v3875
        %v3936 = vadd.f32 %v3604, %v3878
        %v3937 = vadd.f32 %v3609, %v3883
        %v3938 = vadd.f32 %v3612, %v3886
        %v3939 = vadd.f32 %v3617, %v3891
        %v3940 = vadd.f32 %v3620, %v3894
        %v3941 = vadd.f32 %v3625, %v3899
        %v3942 = vadd.f32 %v3628, %v3902
        %v3943 = vadd.f32 %v3633, %v3907
        %v3944 = vadd.f32 %v3636, %v3910
        %v3945 = vld [vmem:[%s3059 + $0x7] sm:$0xff]
        %v3946 = vld [vmem:[%s3059 + $0xf] sm:$0xff]
        %v3947 = vld [vmem:[%s3059 + $0x27] sm:$0xff]
        %v3948 = vld [vmem:[%s3059 + $0x2f] sm:$0xff]
        %v3949 = vld [vmem:[%s3059 + $0x47] sm:$0xff]
        %v3950 = vld [vmem:[%s3059 + $0x4f] sm:$0xff]
        %v3951 = vld [vmem:[%s3059 + $0x67] sm:$0xff]
        %v3952 = vld [vmem:[%s3059 + $0x6f] sm:$0xff]
        %v3953 = vld [vmem:[%s3059 + $0x87] sm:$0xff]
        %v3954 = vld [vmem:[%s3059 + $0x8f] sm:$0xff]
        %v3955 = vld [vmem:[%s3059 + $0xa7] sm:$0xff]
        %v3956 = vld [vmem:[%s3059 + $0xaf] sm:$0xff]
        %v3957 = vld [vmem:[%s3059 + $0xc7] sm:$0xff]
        %v3958 = vld [vmem:[%s3059 + $0xcf] sm:$0xff]
        %v3959 = vld [vmem:[%s3059 + $0xe7] sm:$0xff]
        %v3960 = vld [vmem:[%s3059 + $0xef] sm:$0xff]
        %v3961 = vld [vmem:[%s3059 + $0x107] sm:$0xff]
        %v3962 = vld [vmem:[%s3059 + $0x10f] sm:$0xff]
        %v3963 = vld [vmem:[%s3059 + $0x127] sm:$0xff]
        %v3964 = vld [vmem:[%s3059 + $0x12f] sm:$0xff]
        %v3965 = vld [vmem:[%s3059 + $0x147] sm:$0xff]
        %v3966 = vld [vmem:[%s3059 + $0x14f] sm:$0xff]
        %v3967 = vld [vmem:[%s3059 + $0x167] sm:$0xff]
        %v3968 = vld [vmem:[%s3059 + $0x16f] sm:$0xff]
        %v3969 = vld [vmem:[%s3059 + $0x187] sm:$0xff]
        %v3970 = vld [vmem:[%s3059 + $0x18f] sm:$0xff]
        %v3971 = vld [vmem:[%s3059 + $0x1a7] sm:$0xff]
        %v3972 = vld [vmem:[%s3059 + $0x1af] sm:$0xff]
        %v3973 = vld [vmem:[%s3059 + $0x1c7] sm:$0xff]
        %v3974 = vld [vmem:[%s3059 + $0x1cf] sm:$0xff]
        %v3975 = vld [vmem:[%s3059 + $0x1e7] sm:$0xff]
        %v3976 = vld [vmem:[%s3059 + $0x1ef] sm:$0xff]
        %v3977 = vpack.c.bf16 %v3946, %v3945
        %v3978 = vpack.c.bf16 %v3948, %v3947
        %v3979 = vpack.c.bf16 %v3950, %v3949
        %v3980 = vpack.c.bf16 %v3952, %v3951
        %v3981 = vpack.c.bf16 %v3954, %v3953
        %v3982 = vpack.c.bf16 %v3956, %v3955
        %v3983 = vpack.c.bf16 %v3958, %v3957
        %v3984 = vpack.c.bf16 %v3960, %v3959
        %v3985 = vpack.c.bf16 %v3962, %v3961
        %v3986 = vpack.c.bf16 %v3964, %v3963
        %v3987 = vpack.c.bf16 %v3966, %v3965
        %v3988 = vpack.c.bf16 %v3968, %v3967
        %v3989 = vpack.c.bf16 %v3970, %v3969
        %v3990 = vpack.c.bf16 %v3972, %v3971
        %v3991 = vpack.c.bf16 %v3974, %v3973
        %v3992 = vpack.c.bf16 %v3976, %v3975
        %s3993 = scalar_lea.vmem %s3, 48
        %v3994 = vld [vmem:[%s3993] sm:$0xf]
        %v3995 = vld [vmem:[%s3993 + $0x4] sm:$0xf]
        %v3996 = vld [vmem:[%s3993 + $0x8] sm:$0xf]
        %v3997 = vld [vmem:[%s3993 + $0xc] sm:$0xf]
        %v4002 = vunpack.c.l.b16 %v3994
        %v4003 = vunpack.c.l.b16 %v3995
        %v4004 = vunpack.c.l.b16 %v3996
        %v4005 = vunpack.c.l.b16 %v3997
        %v4006 = vpack.c.b16 %v4003, %v4002
        %v4007 = vpack.c.b16 %v4005, %v4004
        %v4011 = vsel %vm341, %v3977, 0
        %v4014 = vsel %vm341, %v3978, 0
        %v4017 = vsel %vm341, %v3979, 0
        %v4020 = vsel %vm341, %v3980, 0
        %v4023 = vsel %vm341, %v3981, 0
        %v4026 = vsel %vm341, %v3982, 0
        %v4029 = vsel %vm341, %v3983, 0
        %v4032 = vsel %vm341, %v3984, 0
        %v4035 = vsel %vm341, %v3985, 0
        %v4038 = vsel %vm341, %v3986, 0
        %v4041 = vsel %vm341, %v3987, 0
        %v4044 = vsel %vm341, %v3988, 0
        %v4047 = vsel %vm341, %v3989, 0
        %v4050 = vsel %vm341, %v3990, 0
        %v4053 = vsel %vm341, %v3991, 0
        %v4056 = vsel %vm341, %v3992, 0
        %4058 = vmatprep.subr.bf16.mxu0 0
        %4059 = vmatpush1.bf16.msra.mxu0 %v4006
        %4060 = vmatprep.subr.bf16.mxu0 0
        %4061 = vmatpush1.bf16.msra.mxu0 %v4007
        %4062 = vmatprep.subr.bf16.mxu0 0
        %4063 = vmatpush1.bf16.msra.mxu0 0
        %4064 = vmatprep.subr.bf16.mxu0 0
        %4065 = vmatpush1.bf16.msra.mxu0 0
        %4066 = vmatprep.subr.bf16.mxu0 0
        %4067 = vmatpush1.bf16.msra.mxu0 0
        %4068 = vmatprep.subr.bf16.mxu0 0
        %4069 = vmatpush1.bf16.msra.mxu0 0
        %4070 = vmatprep.subr.bf16.mxu0 0
        %4071 = vmatpush1.bf16.msra.mxu0 0
        %4072 = vmatprep.subr.bf16.mxu0 0
        %4073 = vmatpush1.bf16.msra.mxu0 0
        %4074 = vmatprep.subr.bf16.mxu0 0
        %4075 = vmatpush1.bf16.msra.mxu0 0
        %4076 = vmatprep.subr.bf16.mxu0 0
        %4077 = vmatpush1.bf16.msra.mxu0 0
        %4078 = vmatprep.subr.bf16.mxu0 0
        %4079 = vmatpush1.bf16.msra.mxu0 0
        %4080 = vmatprep.subr.bf16.mxu0 0
        %4081 = vmatpush1.bf16.msra.mxu0 0
        %4082 = vmatprep.subr.bf16.mxu0 0
        %4083 = vmatpush1.bf16.msra.mxu0 0
        %4084 = vmatprep.subr.bf16.mxu0 0
        %4085 = vmatpush1.bf16.msra.mxu0 0
        %4086 = vmatprep.subr.bf16.mxu0 0
        %4087 = vmatpush1.bf16.msra.mxu0 0
        %4088 = vmatprep.subr.bf16.mxu0 0
        %4089 = vmatpush1.bf16.msra.mxu0 0
        %4090 = vmatprep.mubr.bf16.mxu0 0
        %4091 = vmatmul.mubr.bf16.gmra.mrb[0].mxu0 %v4011
        %v4092 = vpop.f32.mrb[0].mxu0
        %v4093 = vadd.f32 0.0, %v4092
        %v4094 = vpop.f32.mrb[0].mxu0
        %v4095 = vpop.f32.mrb[0].mxu0
        %v4096 = vadd.f32 0.0, %v4095
        %v4097 = vpop.f32.mrb[0].mxu0
        %4098 = vmatprep.mubr.bf16.mxu0 0
        %4099 = vmatmul.mubr.bf16.gmra.mrb[0].mxu0 %v4014
        %v4100 = vpop.f32.mrb[0].mxu0
        %v4101 = vadd.f32 0.0, %v4100
        %v4102 = vpop.f32.mrb[0].mxu0
        %v4103 = vpop.f32.mrb[0].mxu0
        %v4104 = vadd.f32 0.0, %v4103
        %v4105 = vpop.f32.mrb[0].mxu0
        %4106 = vmatprep.mubr.bf16.mxu0 0
        %4107 = vmatmul.mubr.bf16.gmra.mrb[0].mxu0 %v4017
        %v4108 = vpop.f32.mrb[0].mxu0
        %v4109 = vadd.f32 0.0, %v4108
        %v4110 = vpop.f32.mrb[0].mxu0
        %v4111 = vpop.f32.mrb[0].mxu0
        %v4112 = vadd.f32 0.0, %v4111
        %v4113 = vpop.f32.mrb[0].mxu0
        %4114 = vmatprep.mubr.bf16.mxu0 0
        %4115 = vmatmul.mubr.bf16.gmra.mrb[0].mxu0 %v4020
        %v4116 = vpop.f32.mrb[0].mxu0
        %v4117 = vadd.f32 0.0, %v4116
        %v4118 = vpop.f32.mrb[0].mxu0
        %v4119 = vpop.f32.mrb[0].mxu0
        %v4120 = vadd.f32 0.0, %v4119
        %v4121 = vpop.f32.mrb[0].mxu0
        %4122 = vmatprep.mubr.bf16.mxu0 0
        %4123 = vmatmul.mubr.bf16.gmra.mrb[0].mxu0 %v4023
        %v4124 = vpop.f32.mrb[0].mxu0
        %v4125 = vadd.f32 0.0, %v4124
        %v4126 = vpop.f32.mrb[0].mxu0
        %v4127 = vpop.f32.mrb[0].mxu0
        %v4128 = vadd.f32 0.0, %v4127
        %v4129 = vpop.f32.mrb[0].mxu0
        %4130 = vmatprep.mubr.bf16.mxu0 0
        %4131 = vmatmul.mubr.bf16.gmra.mrb[0].mxu0 %v4026
        %v4132 = vpop.f32.mrb[0].mxu0
        %v4133 = vadd.f32 0.0, %v4132
        %v4134 = vpop.f32.mrb[0].mxu0
        %v4135 = vpop.f32.mrb[0].mxu0
        %v4136 = vadd.f32 0.0, %v4135
        %v4137 = vpop.f32.mrb[0].mxu0
        %4138 = vmatprep.mubr.bf16.mxu0 0
        %4139 = vmatmul.mubr.bf16.gmra.mrb[0].mxu0 %v4029
        %v4140 = vpop.f32.mrb[0].mxu0
        %v4141 = vadd.f32 0.0, %v4140
        %v4142 = vpop.f32.mrb[0].mxu0
        %v4143 = vpop.f32.mrb[0].mxu0
        %v4144 = vadd.f32 0.0, %v4143
        %v4145 = vpop.f32.mrb[0].mxu0
        %4146 = vmatprep.mubr.bf16.mxu0 0
        %4147 = vmatmul.mubr.bf16.gmra.mrb[0].mxu0 %v4032
        %v4148 = vpop.f32.mrb[0].mxu0
        %v4149 = vadd.f32 0.0, %v4148
        %v4150 = vpop.f32.mrb[0].mxu0
        %v4151 = vpop.f32.mrb[0].mxu0
        %v4152 = vadd.f32 0.0, %v4151
        %v4153 = vpop.f32.mrb[0].mxu0
        %4154 = vmatprep.mubr.bf16.mxu0 0
        %4155 = vmatmul.mubr.bf16.gmra.mrb[0].mxu0 %v4035
        %v4156 = vpop.f32.mrb[0].mxu0
        %v4157 = vadd.f32 0.0, %v4156
        %v4158 = vpop.f32.mrb[0].mxu0
        %v4159 = vpop.f32.mrb[0].mxu0
        %v4160 = vadd.f32 0.0, %v4159
        %v4161 = vpop.f32.mrb[0].mxu0
        %4162 = vmatprep.mubr.bf16.mxu0 0
        %4163 = vmatmul.mubr.bf16.gmra.mrb[0].mxu0 %v4038
        %v4164 = vpop.f32.mrb[0].mxu0
        %v4165 = vadd.f32 0.0, %v4164
        %v4166 = vpop.f32.mrb[0].mxu0
        %v4167 = vpop.f32.mrb[0].mxu0
        %v4168 = vadd.f32 0.0, %v4167
        %v4169 = vpop.f32.mrb[0].mxu0
        %4170 = vmatprep.mubr.bf16.mxu0 0
        %4171 = vmatmul.mubr.bf16.gmra.mrb[0].mxu0 %v4041
        %v4172 = vpop.f32.mrb[0].mxu0
        %v4173 = vadd.f32 0.0, %v4172
        %v4174 = vpop.f32.mrb[0].mxu0
        %v4175 = vpop.f32.mrb[0].mxu0
        %v4176 = vadd.f32 0.0, %v4175
        %v4177 = vpop.f32.mrb[0].mxu0
        %4178 = vmatprep.mubr.bf16.mxu0 0
        %4179 = vmatmul.mubr.bf16.gmra.mrb[0].mxu0 %v4044
        %v4180 = vpop.f32.mrb[0].mxu0
        %v4181 = vadd.f32 0.0, %v4180
        %v4182 = vpop.f32.mrb[0].mxu0
        %v4183 = vpop.f32.mrb[0].mxu0
        %v4184 = vadd.f32 0.0, %v4183
        %v4185 = vpop.f32.mrb[0].mxu0
        %4186 = vmatprep.mubr.bf16.mxu0 0
        %4187 = vmatmul.mubr.bf16.gmra.mrb[0].mxu0 %v4047
        %v4188 = vpop.f32.mrb[0].mxu0
        %v4189 = vadd.f32 0.0, %v4188
        %v4190 = vpop.f32.mrb[0].mxu0
        %v4191 = vpop.f32.mrb[0].mxu0
        %v4192 = vadd.f32 0.0, %v4191
        %v4193 = vpop.f32.mrb[0].mxu0
        %4194 = vmatprep.mubr.bf16.mxu0 0
        %4195 = vmatmul.mubr.bf16.gmra.mrb[0].mxu0 %v4050
        %v4196 = vpop.f32.mrb[0].mxu0
        %v4197 = vadd.f32 0.0, %v4196
        %v4198 = vpop.f32.mrb[0].mxu0
        %v4199 = vpop.f32.mrb[0].mxu0
        %v4200 = vadd.f32 0.0, %v4199
        %v4201 = vpop.f32.mrb[0].mxu0
        %4202 = vmatprep.mubr.bf16.mxu0 0
        %4203 = vmatmul.mubr.bf16.gmra.mrb[0].mxu0 %v4053
        %v4204 = vpop.f32.mrb[0].mxu0
        %v4205 = vadd.f32 0.0, %v4204
        %v4206 = vpop.f32.mrb[0].mxu0
        %v4207 = vpop.f32.mrb[0].mxu0
        %v4208 = vadd.f32 0.0, %v4207
        %v4209 = vpop.f32.mrb[0].mxu0
        %4210 = vmatprep.mubr.bf16.mxu0 0
        %4211 = vmatmul.mubr.bf16.gmra.mrb[0].mxu0 %v4056
        %v4212 = vpop.f32.mrb[0].mxu0
        %v4213 = vadd.f32 0.0, %v4212
        %v4214 = vpop.f32.mrb[0].mxu0
        %v4215 = vpop.f32.mrb[0].mxu0
        %v4216 = vadd.f32 0.0, %v4215
        %v4217 = vpop.f32.mrb[0].mxu0
        %4218 = vdwg.mxu0
        %v4219 = vadd.f32 %v3913, %v4093
        %v4220 = vadd.f32 %v3914, %v4096
        %v4221 = vadd.f32 %v3915, %v4101
        %v4222 = vadd.f32 %v3916, %v4104
        %v4223 = vadd.f32 %v3917, %v4109
        %v4224 = vadd.f32 %v3918, %v4112
        %v4225 = vadd.f32 %v3919, %v4117
        %v4226 = vadd.f32 %v3920, %v4120
        %v4227 = vadd.f32 %v3921, %v4125
        %v4228 = vadd.f32 %v3922, %v4128
        %v4229 = vadd.f32 %v3923, %v4133
        %v4230 = vadd.f32 %v3924, %v4136
        %v4231 = vadd.f32 %v3925, %v4141
        %v4232 = vadd.f32 %v3926, %v4144
        %v4233 = vadd.f32 %v3927, %v4149
        %v4234 = vadd.f32 %v3928, %v4152
        %v4235 = vadd.f32 %v3929, %v4157
        %v4236 = vadd.f32 %v3930, %v4160
        %v4237 = vadd.f32 %v3931, %v4165
        %v4238 = vadd.f32 %v3932, %v4168
        %v4239 = vadd.f32 %v3933, %v4173
        %v4240 = vadd.f32 %v3934, %v4176
        %v4241 = vadd.f32 %v3935, %v4181
        %v4242 = vadd.f32 %v3936, %v4184
        %v4243 = vadd.f32 %v3937, %v4189
        %v4244 = vadd.f32 %v3938, %v4192
        %v4245 = vadd.f32 %v3939, %v4197
        %v4246 = vadd.f32 %v3940, %v4200
        %v4247 = vadd.f32 %v3941, %v4205
        %v4248 = vadd.f32 %v3942, %v4208
        %v4249 = vadd.f32 %v3943, %v4213
        %v4250 = vadd.f32 %v3944, %v4216
        %v4251 = vld [vmem:[%s3059 + $0x8] sm:$0xff]
        %v4252 = vld [vmem:[%s3059 + $0x10] sm:$0xff]
        %v4253 = vld [vmem:[%s3059 + $0x28] sm:$0xff]
        %v4254 = vld [vmem:[%s3059 + $0x30] sm:$0xff]
        %v4255 = vld [vmem:[%s3059 + $0x48] sm:$0xff]
        %v4256 = vld [vmem:[%s3059 + $0x50] sm:$0xff]
        %v4257 = vld [vmem:[%s3059 + $0x68] sm:$0xff]
        %v4258 = vld [vmem:[%s3059 + $0x70] sm:$0xff]
        %v4259 = vld [vmem:[%s3059 + $0x88] sm:$0xff]
        %v4260 = vld [vmem:[%s3059 + $0x90] sm:$0xff]
        %v4261 = vld [vmem:[%s3059 + $0xa8] sm:$0xff]
        %v4262 = vld [vmem:[%s3059 + $0xb0] sm:$0xff]
        %v4263 = vld [vmem:[%s3059 + $0xc8] sm:$0xff]
        %v4264 = vld [vmem:[%s3059 + $0xd0] sm:$0xff]
        %v4265 = vld [vmem:[%s3059 + $0xe8] sm:$0xff]
        %v4266 = vld [vmem:[%s3059 + $0xf0] sm:$0xff]
        %v4267 = vld [vmem:[%s3059 + $0x108] sm:$0xff]
        %v4268 = vld [vmem:[%s3059 + $0x110] sm:$0xff]
        %v4269 = vld [vmem:[%s3059 + $0x128] sm:$0xff]
        %v4270 = vld [vmem:[%s3059 + $0x130] sm:$0xff]
        %v4271 = vld [vmem:[%s3059 + $0x148] sm:$0xff]
        %v4272 = vld [vmem:[%s3059 + $0x150] sm:$0xff]
        %v4273 = vld [vmem:[%s3059 + $0x168] sm:$0xff]
        %v4274 = vld [vmem:[%s3059 + $0x170] sm:$0xff]
        %v4275 = vld [vmem:[%s3059 + $0x188] sm:$0xff]
        %v4276 = vld [vmem:[%s3059 + $0x190] sm:$0xff]
        %v4277 = vld [vmem:[%s3059 + $0x1a8] sm:$0xff]
        %v4278 = vld [vmem:[%s3059 + $0x1b0] sm:$0xff]
        %v4279 = vld [vmem:[%s3059 + $0x1c8] sm:$0xff]
        %v4280 = vld [vmem:[%s3059 + $0x1d0] sm:$0xff]
        %v4281 = vld [vmem:[%s3059 + $0x1e8] sm:$0xff]
        %v4282 = vld [vmem:[%s3059 + $0x1f0] sm:$0xff]
        %v4283 = vpack.c.bf16 %v4252, %v4251
        %v4284 = vpack.c.bf16 %v4254, %v4253
        %v4285 = vpack.c.bf16 %v4256, %v4255
        %v4286 = vpack.c.bf16 %v4258, %v4257
        %v4287 = vpack.c.bf16 %v4260, %v4259
        %v4288 = vpack.c.bf16 %v4262, %v4261
        %v4289 = vpack.c.bf16 %v4264, %v4263
        %v4290 = vpack.c.bf16 %v4266, %v4265
        %v4291 = vpack.c.bf16 %v4268, %v4267
        %v4292 = vpack.c.bf16 %v4270, %v4269
        %v4293 = vpack.c.bf16 %v4272, %v4271
        %v4294 = vpack.c.bf16 %v4274, %v4273
        %v4295 = vpack.c.bf16 %v4276, %v4275
        %v4296 = vpack.c.bf16 %v4278, %v4277
        %v4297 = vpack.c.bf16 %v4280, %v4279
        %v4298 = vpack.c.bf16 %v4282, %v4281
        %s4299 = scalar_lea.vmem %s3, 64
        %v4300 = vld [vmem:[%s4299] sm:$0xf]
        %v4301 = vld [vmem:[%s4299 + $0x4] sm:$0xf]
        %v4302 = vld [vmem:[%s4299 + $0x8] sm:$0xf]
        %v4303 = vld [vmem:[%s4299 + $0xc] sm:$0xf]
        %v4308 = vunpack.c.l.b16 %v4300
        %v4309 = vunpack.c.l.b16 %v4301
        %v4310 = vunpack.c.l.b16 %v4302
        %v4311 = vunpack.c.l.b16 %v4303
        %v4312 = vpack.c.b16 %v4309, %v4308
        %v4313 = vpack.c.b16 %v4311, %v4310
        %v4317 = vsel %vm341, %v4283, 0
        %v4320 = vsel %vm341, %v4284, 0
        %v4323 = vsel %vm341, %v4285, 0
        %v4326 = vsel %vm341, %v4286, 0
        %v4329 = vsel %vm341, %v4287, 0
        %v4332 = vsel %vm341, %v4288, 0
        %v4335 = vsel %vm341, %v4289, 0
        %v4338 = vsel %vm341, %v4290, 0
        %v4341 = vsel %vm341, %v4291, 0
        %v4344 = vsel %vm341, %v4292, 0
        %v4347 = vsel %vm341, %v4293, 0
        %v4350 = vsel %vm341, %v4294, 0
        %v4353 = vsel %vm341, %v4295, 0
        %v4356 = vsel %vm341, %v4296, 0
        %v4359 = vsel %vm341, %v4297, 0
        %v4362 = vsel %vm341, %v4298, 0
        %4364 = vmatprep.subr.bf16.mxu0 0
        %4365 = vmatpush1.bf16.msra.mxu0 %v4312
        %4366 = vmatprep.subr.bf16.mxu0 0
        %4367 = vmatpush1.bf16.msra.mxu0 %v4313
        %4368 = vmatprep.subr.bf16.mxu0 0
        %4369 = vmatpush1.bf16.msra.mxu0 0
        %4370 = vmatprep.subr.bf16.mxu0 0
        %4371 = vmatpush1.bf16.msra.mxu0 0
        %4372 = vmatprep.subr.bf16.mxu0 0
        %4373 = vmatpush1.bf16.msra.mxu0 0
        %4374 = vmatprep.subr.bf16.mxu0 0
        %4375 = vmatpush1.bf16.msra.mxu0 0
        %4376 = vmatprep.subr.bf16.mxu0 0
        %4377 = vmatpush1.bf16.msra.mxu0 0
        %4378 = vmatprep.subr.bf16.mxu0 0
        %4379 = vmatpush1.bf16.msra.mxu0 0
        %4380 = vmatprep.subr.bf16.mxu0 0
        %4381 = vmatpush1.bf16.msra.mxu0 0
        %4382 = vmatprep.subr.bf16.mxu0 0
        %4383 = vmatpush1.bf16.msra.mxu0 0
        %4384 = vmatprep.subr.bf16.mxu0 0
        %4385 = vmatpush1.bf16.msra.mxu0 0
        %4386 = vmatprep.subr.bf16.mxu0 0
        %4387 = vmatpush1.bf16.msra.mxu0 0
        %4388 = vmatprep.subr.bf16.mxu0 0
        %4389 = vmatpush1.bf16.msra.mxu0 0
        %4390 = vmatprep.subr.bf16.mxu0 0
        %4391 = vmatpush1.bf16.msra.mxu0 0
        %4392 = vmatprep.subr.bf16.mxu0 0
        %4393 = vmatpush1.bf16.msra.mxu0 0
        %4394 = vmatprep.subr.bf16.mxu0 0
        %4395 = vmatpush1.bf16.msra.mxu0 0
        %4396 = vmatprep.mubr.bf16.mxu0 0
        %4397 = vmatmul.mubr.bf16.gmra.mrb[0].mxu0 %v4317
        %v4398 = vpop.f32.mrb[0].mxu0
        %v4399 = vadd.f32 0.0, %v4398
        %v4400 = vpop.f32.mrb[0].mxu0
        %v4401 = vpop.f32.mrb[0].mxu0
        %v4402 = vadd.f32 0.0, %v4401
        %v4403 = vpop.f32.mrb[0].mxu0
        %4404 = vmatprep.mubr.bf16.mxu0 0
        %4405 = vmatmul.mubr.bf16.gmra.mrb[0].mxu0 %v4320
        %v4406 = vpop.f32.mrb[0].mxu0
        %v4407 = vadd.f32 0.0, %v4406
        %v4408 = vpop.f32.mrb[0].mxu0
        %v4409 = vpop.f32.mrb[0].mxu0
        %v4410 = vadd.f32 0.0, %v4409
        %v4411 = vpop.f32.mrb[0].mxu0
        %4412 = vmatprep.mubr.bf16.mxu0 0
        %4413 = vmatmul.mubr.bf16.gmra.mrb[0].mxu0 %v4323
        %v4414 = vpop.f32.mrb[0].mxu0
        %v4415 = vadd.f32 0.0, %v4414
        %v4416 = vpop.f32.mrb[0].mxu0
        %v4417 = vpop.f32.mrb[0].mxu0
        %v4418 = vadd.f32 0.0, %v4417
        %v4419 = vpop.f32.mrb[0].mxu0
        %4420 = vmatprep.mubr.bf16.mxu0 0
        %4421 = vmatmul.mubr.bf16.gmra.mrb[0].mxu0 %v4326
        %v4422 = vpop.f32.mrb[0].mxu0
        %v4423 = vadd.f32 0.0, %v4422
        %v4424 = vpop.f32.mrb[0].mxu0
        %v4425 = vpop.f32.mrb[0].mxu0
        %v4426 = vadd.f32 0.0, %v4425
        %v4427 = vpop.f32.mrb[0].mxu0
        %4428 = vmatprep.mubr.bf16.mxu0 0
        %4429 = vmatmul.mubr.bf16.gmra.mrb[0].mxu0 %v4329
        %v4430 = vpop.f32.mrb[0].mxu0
        %v4431 = vadd.f32 0.0, %v4430
        %v4432 = vpop.f32.mrb[0].mxu0
        %v4433 = vpop.f32.mrb[0].mxu0
        %v4434 = vadd.f32 0.0, %v4433
        %v4435 = vpop.f32.mrb[0].mxu0
        %4436 = vmatprep.mubr.bf16.mxu0 0
        %4437 = vmatmul.mubr.bf16.gmra.mrb[0].mxu0 %v4332
        %v4438 = vpop.f32.mrb[0].mxu0
        %v4439 = vadd.f32 0.0, %v4438
        %v4440 = vpop.f32.mrb[0].mxu0
        %v4441 = vpop.f32.mrb[0].mxu0
        %v4442 = vadd.f32 0.0, %v4441
        %v4443 = vpop.f32.mrb[0].mxu0
        %4444 = vmatprep.mubr.bf16.mxu0 0
        %4445 = vmatmul.mubr.bf16.gmra.mrb[0].mxu0 %v4335
        %v4446 = vpop.f32.mrb[0].mxu0
        %v4447 = vadd.f32 0.0, %v4446
        %v4448 = vpop.f32.mrb[0].mxu0
        %v4449 = vpop.f32.mrb[0].mxu0
        %v4450 = vadd.f32 0.0, %v4449
        %v4451 = vpop.f32.mrb[0].mxu0
        %4452 = vmatprep.mubr.bf16.mxu0 0
        %4453 = vmatmul.mubr.bf16.gmra.mrb[0].mxu0 %v4338
        %v4454 = vpop.f32.mrb[0].mxu0
        %v4455 = vadd.f32 0.0, %v4454
        %v4456 = vpop.f32.mrb[0].mxu0
        %v4457 = vpop.f32.mrb[0].mxu0
        %v4458 = vadd.f32 0.0, %v4457
        %v4459 = vpop.f32.mrb[0].mxu0
        %4460 = vmatprep.mubr.bf16.mxu0 0
        %4461 = vmatmul.mubr.bf16.gmra.mrb[0].mxu0 %v4341
        %v4462 = vpop.f32.mrb[0].mxu0
        %v4463 = vadd.f32 0.0, %v4462
        %v4464 = vpop.f32.mrb[0].mxu0
        %v4465 = vpop.f32.mrb[0].mxu0
        %v4466 = vadd.f32 0.0, %v4465
        %v4467 = vpop.f32.mrb[0].mxu0
        %4468 = vmatprep.mubr.bf16.mxu0 0
        %4469 = vmatmul.mubr.bf16.gmra.mrb[0].mxu0 %v4344
        %v4470 = vpop.f32.mrb[0].mxu0
        %v4471 = vadd.f32 0.0, %v4470
        %v4472 = vpop.f32.mrb[0].mxu0
        %v4473 = vpop.f32.mrb[0].mxu0
        %v4474 = vadd.f32 0.0, %v4473
        %v4475 = vpop.f32.mrb[0].mxu0
        %4476 = vmatprep.mubr.bf16.mxu0 0
        %4477 = vmatmul.mubr.bf16.gmra.mrb[0].mxu0 %v4347
        %v4478 = vpop.f32.mrb[0].mxu0
        %v4479 = vadd.f32 0.0, %v4478
        %v4480 = vpop.f32.mrb[0].mxu0
        %v4481 = vpop.f32.mrb[0].mxu0
        %v4482 = vadd.f32 0.0, %v4481
        %v4483 = vpop.f32.mrb[0].mxu0
        %4484 = vmatprep.mubr.bf16.mxu0 0
        %4485 = vmatmul.mubr.bf16.gmra.mrb[0].mxu0 %v4350
        %v4486 = vpop.f32.mrb[0].mxu0
        %v4487 = vadd.f32 0.0, %v4486
        %v4488 = vpop.f32.mrb[0].mxu0
        %v4489 = vpop.f32.mrb[0].mxu0
        %v4490 = vadd.f32 0.0, %v4489
        %v4491 = vpop.f32.mrb[0].mxu0
        %4492 = vmatprep.mubr.bf16.mxu0 0
        %4493 = vmatmul.mubr.bf16.gmra.mrb[0].mxu0 %v4353
        %v4494 = vpop.f32.mrb[0].mxu0
        %v4495 = vadd.f32 0.0, %v4494
        %v4496 = vpop.f32.mrb[0].mxu0
        %v4497 = vpop.f32.mrb[0].mxu0
        %v4498 = vadd.f32 0.0, %v4497
        %v4499 = vpop.f32.mrb[0].mxu0
        %4500 = vmatprep.mubr.bf16.mxu0 0
        %4501 = vmatmul.mubr.bf16.gmra.mrb[0].mxu0 %v4356
        %v4502 = vpop.f32.mrb[0].mxu0
        %v4503 = vadd.f32 0.0, %v4502
        %v4504 = vpop.f32.mrb[0].mxu0
        %v4505 = vpop.f32.mrb[0].mxu0
        %v4506 = vadd.f32 0.0, %v4505
        %v4507 = vpop.f32.mrb[0].mxu0
        %4508 = vmatprep.mubr.bf16.mxu0 0
        %4509 = vmatmul.mubr.bf16.gmra.mrb[0].mxu0 %v4359
        %v4510 = vpop.f32.mrb[0].mxu0
        %v4511 = vadd.f32 0.0, %v4510
        %v4512 = vpop.f32.mrb[0].mxu0
        %v4513 = vpop.f32.mrb[0].mxu0
        %v4514 = vadd.f32 0.0, %v4513
        %v4515 = vpop.f32.mrb[0].mxu0
        %4516 = vmatprep.mubr.bf16.mxu0 0
        %4517 = vmatmul.mubr.bf16.gmra.mrb[0].mxu0 %v4362
        %v4518 = vpop.f32.mrb[0].mxu0
        %v4519 = vadd.f32 0.0, %v4518
        %v4520 = vpop.f32.mrb[0].mxu0
        %v4521 = vpop.f32.mrb[0].mxu0
        %v4522 = vadd.f32 0.0, %v4521
        %v4523 = vpop.f32.mrb[0].mxu0
        %4524 = vdwg.mxu0
        %v4525 = vadd.f32 %v4219, %v4399
        %v4526 = vadd.f32 %v4220, %v4402
        %v4527 = vadd.f32 %v4221, %v4407
        %v4528 = vadd.f32 %v4222, %v4410
        %v4529 = vadd.f32 %v4223, %v4415
        %v4530 = vadd.f32 %v4224, %v4418
        %v4531 = vadd.f32 %v4225, %v4423
        %v4532 = vadd.f32 %v4226, %v4426
        %v4533 = vadd.f32 %v4227, %v4431
        %v4534 = vadd.f32 %v4228, %v4434
        %v4535 = vadd.f32 %v4229, %v4439
        %v4536 = vadd.f32 %v4230, %v4442
        %v4537 = vadd.f32 %v4231, %v4447
        %v4538 = vadd.f32 %v4232, %v4450
        %v4539 = vadd.f32 %v4233, %v4455
        %v4540 = vadd.f32 %v4234, %v4458
        %v4541 = vadd.f32 %v4235, %v4463
        %v4542 = vadd.f32 %v4236, %v4466
        %v4543 = vadd.f32 %v4237, %v4471
        %v4544 = vadd.f32 %v4238, %v4474
        %v4545 = vadd.f32 %v4239, %v4479
        %v4546 = vadd.f32 %v4240, %v4482
        %v4547 = vadd.f32 %v4241, %v4487
        %v4548 = vadd.f32 %v4242, %v4490
        %v4549 = vadd.f32 %v4243, %v4495
        %v4550 = vadd.f32 %v4244, %v4498
        %v4551 = vadd.f32 %v4245, %v4503
        %v4552 = vadd.f32 %v4246, %v4506
        %v4553 = vadd.f32 %v4247, %v4511
        %v4554 = vadd.f32 %v4248, %v4514
        %v4555 = vadd.f32 %v4249, %v4519
        %v4556 = vadd.f32 %v4250, %v4522
        %v4557 = vld [vmem:[%s3059 + $0x9] sm:$0xff]
        %v4558 = vld [vmem:[%s3059 + $0x11] sm:$0xff]
        %v4559 = vld [vmem:[%s3059 + $0x29] sm:$0xff]
        %v4560 = vld [vmem:[%s3059 + $0x31] sm:$0xff]
        %v4561 = vld [vmem:[%s3059 + $0x49] sm:$0xff]
        %v4562 = vld [vmem:[%s3059 + $0x51] sm:$0xff]
        %v4563 = vld [vmem:[%s3059 + $0x69] sm:$0xff]
        %v4564 = vld [vmem:[%s3059 + $0x71] sm:$0xff]
        %v4565 = vld [vmem:[%s3059 + $0x89] sm:$0xff]
        %v4566 = vld [vmem:[%s3059 + $0x91] sm:$0xff]
        %v4567 = vld [vmem:[%s3059 + $0xa9] sm:$0xff]
        %v4568 = vld [vmem:[%s3059 + $0xb1] sm:$0xff]
        %v4569 = vld [vmem:[%s3059 + $0xc9] sm:$0xff]
        %v4570 = vld [vmem:[%s3059 + $0xd1] sm:$0xff]
        %v4571 = vld [vmem:[%s3059 + $0xe9] sm:$0xff]
        %v4572 = vld [vmem:[%s3059 + $0xf1] sm:$0xff]
        %v4573 = vld [vmem:[%s3059 + $0x109] sm:$0xff]
        %v4574 = vld [vmem:[%s3059 + $0x111] sm:$0xff]
        %v4575 = vld [vmem:[%s3059 + $0x129] sm:$0xff]
        %v4576 = vld [vmem:[%s3059 + $0x131] sm:$0xff]
        %v4577 = vld [vmem:[%s3059 + $0x149] sm:$0xff]
        %v4578 = vld [vmem:[%s3059 + $0x151] sm:$0xff]
        %v4579 = vld [vmem:[%s3059 + $0x169] sm:$0xff]
        %v4580 = vld [vmem:[%s3059 + $0x171] sm:$0xff]
        %v4581 = vld [vmem:[%s3059 + $0x189] sm:$0xff]
        %v4582 = vld [vmem:[%s3059 + $0x191] sm:$0xff]
        %v4583 = vld [vmem:[%s3059 + $0x1a9] sm:$0xff]
        %v4584 = vld [vmem:[%s3059 + $0x1b1] sm:$0xff]
        %v4585 = vld [vmem:[%s3059 + $0x1c9] sm:$0xff]
        %v4586 = vld [vmem:[%s3059 + $0x1d1] sm:$0xff]
        %v4587 = vld [vmem:[%s3059 + $0x1e9] sm:$0xff]
        %v4588 = vld [vmem:[%s3059 + $0x1f1] sm:$0xff]
        %v4589 = vpack.c.bf16 %v4558, %v4557
        %v4590 = vpack.c.bf16 %v4560, %v4559
        %v4591 = vpack.c.bf16 %v4562, %v4561
        %v4592 = vpack.c.bf16 %v4564, %v4563
        %v4593 = vpack.c.bf16 %v4566, %v4565
        %v4594 = vpack.c.bf16 %v4568, %v4567
        %v4595 = vpack.c.bf16 %v4570, %v4569
        %v4596 = vpack.c.bf16 %v4572, %v4571
        %v4597 = vpack.c.bf16 %v4574, %v4573
        %v4598 = vpack.c.bf16 %v4576, %v4575
        %v4599 = vpack.c.bf16 %v4578, %v4577
        %v4600 = vpack.c.bf16 %v4580, %v4579
        %v4601 = vpack.c.bf16 %v4582, %v4581
        %v4602 = vpack.c.bf16 %v4584, %v4583
        %v4603 = vpack.c.bf16 %v4586, %v4585
        %v4604 = vpack.c.bf16 %v4588, %v4587
        %s4605 = scalar_lea.vmem %s3, 80
        %v4606 = vld [vmem:[%s4605] sm:$0xf]
        %v4607 = vld [vmem:[%s4605 + $0x4] sm:$0xf]
        %v4608 = vld [vmem:[%s4605 + $0x8] sm:$0xf]
        %v4609 = vld [vmem:[%s4605 + $0xc] sm:$0xf]
        %v4614 = vunpack.c.l.b16 %v4606
        %v4615 = vunpack.c.l.b16 %v4607
        %v4616 = vunpack.c.l.b16 %v4608
        %v4617 = vunpack.c.l.b16 %v4609
        %v4618 = vpack.c.b16 %v4615, %v4614
        %v4619 = vpack.c.b16 %v4617, %v4616
        %v4623 = vsel %vm341, %v4589, 0
        %v4626 = vsel %vm341, %v4590, 0
        %v4629 = vsel %vm341, %v4591, 0
        %v4632 = vsel %vm341, %v4592, 0
        %v4635 = vsel %vm341, %v4593, 0
        %v4638 = vsel %vm341, %v4594, 0
        %v4641 = vsel %vm341, %v4595, 0
        %v4644 = vsel %vm341, %v4596, 0
        %v4647 = vsel %vm341, %v4597, 0
        %v4650 = vsel %vm341, %v4598, 0
        %v4653 = vsel %vm341, %v4599, 0
        %v4656 = vsel %vm341, %v4600, 0
        %v4659 = vsel %vm341, %v4601, 0
        %v4662 = vsel %vm341, %v4602, 0
        %v4665 = vsel %vm341, %v4603, 0
        %v4668 = vsel %vm341, %v4604, 0
        %4670 = vmatprep.subr.bf16.mxu0 0
        %4671 = vmatpush1.bf16.msra.mxu0 %v4618
        %4672 = vmatprep.subr.bf16.mxu0 0
        %4673 = vmatpush1.bf16.msra.mxu0 %v4619
        %4674 = vmatprep.subr.bf16.mxu0 0
        %4675 = vmatpush1.bf16.msra.mxu0 0
        %4676 = vmatprep.subr.bf16.mxu0 0
        %4677 = vmatpush1.bf16.msra.mxu0 0
        %4678 = vmatprep.subr.bf16.mxu0 0
        %4679 = vmatpush1.bf16.msra.mxu0 0
        %4680 = vmatprep.subr.bf16.mxu0 0
        %4681 = vmatpush1.bf16.msra.mxu0 0
        %4682 = vmatprep.subr.bf16.mxu0 0
        %4683 = vmatpush1.bf16.msra.mxu0 0
        %4684 = vmatprep.subr.bf16.mxu0 0
        %4685 = vmatpush1.bf16.msra.mxu0 0
        %4686 = vmatprep.subr.bf16.mxu0 0
        %4687 = vmatpush1.bf16.msra.mxu0 0
        %4688 = vmatprep.subr.bf16.mxu0 0
        %4689 = vmatpush1.bf16.msra.mxu0 0
        %4690 = vmatprep.subr.bf16.mxu0 0
        %4691 = vmatpush1.bf16.msra.mxu0 0
        %4692 = vmatprep.subr.bf16.mxu0 0
        %4693 = vmatpush1.bf16.msra.mxu0 0
        %4694 = vmatprep.subr.bf16.mxu0 0
        %4695 = vmatpush1.bf16.msra.mxu0 0
        %4696 = vmatprep.subr.bf16.mxu0 0
        %4697 = vmatpush1.bf16.msra.mxu0 0
        %4698 = vmatprep.subr.bf16.mxu0 0
        %4699 = vmatpush1.bf16.msra.mxu0 0
        %4700 = vmatprep.subr.bf16.mxu0 0
        %4701 = vmatpush1.bf16.msra.mxu0 0
        %4702 = vmatprep.mubr.bf16.mxu0 0
        %4703 = vmatmul.mubr.bf16.gmra.mrb[0].mxu0 %v4623
        %v4704 = vpop.f32.mrb[0].mxu0
        %v4705 = vadd.f32 0.0, %v4704
        %v4706 = vpop.f32.mrb[0].mxu0
        %v4707 = vpop.f32.mrb[0].mxu0
        %v4708 = vadd.f32 0.0, %v4707
        %v4709 = vpop.f32.mrb[0].mxu0
        %4710 = vmatprep.mubr.bf16.mxu0 0
        %4711 = vmatmul.mubr.bf16.gmra.mrb[0].mxu0 %v4626
        %v4712 = vpop.f32.mrb[0].mxu0
        %v4713 = vadd.f32 0.0, %v4712
        %v4714 = vpop.f32.mrb[0].mxu0
        %v4715 = vpop.f32.mrb[0].mxu0
        %v4716 = vadd.f32 0.0, %v4715
        %v4717 = vpop.f32.mrb[0].mxu0
        %4718 = vmatprep.mubr.bf16.mxu0 0
        %4719 = vmatmul.mubr.bf16.gmra.mrb[0].mxu0 %v4629
        %v4720 = vpop.f32.mrb[0].mxu0
        %v4721 = vadd.f32 0.0, %v4720
        %v4722 = vpop.f32.mrb[0].mxu0
        %v4723 = vpop.f32.mrb[0].mxu0
        %v4724 = vadd.f32 0.0, %v4723
        %v4725 = vpop.f32.mrb[0].mxu0
        %4726 = vmatprep.mubr.bf16.mxu0 0
        %4727 = vmatmul.mubr.bf16.gmra.mrb[0].mxu0 %v4632
        %v4728 = vpop.f32.mrb[0].mxu0
        %v4729 = vadd.f32 0.0, %v4728
        %v4730 = vpop.f32.mrb[0].mxu0
        %v4731 = vpop.f32.mrb[0].mxu0
        %v4732 = vadd.f32 0.0, %v4731
        %v4733 = vpop.f32.mrb[0].mxu0
        %4734 = vmatprep.mubr.bf16.mxu0 0
        %4735 = vmatmul.mubr.bf16.gmra.mrb[0].mxu0 %v4635
        %v4736 = vpop.f32.mrb[0].mxu0
        %v4737 = vadd.f32 0.0, %v4736
        %v4738 = vpop.f32.mrb[0].mxu0
        %v4739 = vpop.f32.mrb[0].mxu0
        %v4740 = vadd.f32 0.0, %v4739
        %v4741 = vpop.f32.mrb[0].mxu0
        %4742 = vmatprep.mubr.bf16.mxu0 0
        %4743 = vmatmul.mubr.bf16.gmra.mrb[0].mxu0 %v4638
        %v4744 = vpop.f32.mrb[0].mxu0
        %v4745 = vadd.f32 0.0, %v4744
        %v4746 = vpop.f32.mrb[0].mxu0
        %v4747 = vpop.f32.mrb[0].mxu0
        %v4748 = vadd.f32 0.0, %v4747
        %v4749 = vpop.f32.mrb[0].mxu0
        %4750 = vmatprep.mubr.bf16.mxu0 0
        %4751 = vmatmul.mubr.bf16.gmra.mrb[0].mxu0 %v4641
        %v4752 = vpop.f32.mrb[0].mxu0
        %v4753 = vadd.f32 0.0, %v4752
        %v4754 = vpop.f32.mrb[0].mxu0
        %v4755 = vpop.f32.mrb[0].mxu0
        %v4756 = vadd.f32 0.0, %v4755
        %v4757 = vpop.f32.mrb[0].mxu0
        %4758 = vmatprep.mubr.bf16.mxu0 0
        %4759 = vmatmul.mubr.bf16.gmra.mrb[0].mxu0 %v4644
        %v4760 = vpop.f32.mrb[0].mxu0
        %v4761 = vadd.f32 0.0, %v4760
        %v4762 = vpop.f32.mrb[0].mxu0
        %v4763 = vpop.f32.mrb[0].mxu0
        %v4764 = vadd.f32 0.0, %v4763
        %v4765 = vpop.f32.mrb[0].mxu0
        %4766 = vmatprep.mubr.bf16.mxu0 0
        %4767 = vmatmul.mubr.bf16.gmra.mrb[0].mxu0 %v4647
        %v4768 = vpop.f32.mrb[0].mxu0
        %v4769 = vadd.f32 0.0, %v4768
        %v4770 = vpop.f32.mrb[0].mxu0
        %v4771 = vpop.f32.mrb[0].mxu0
        %v4772 = vadd.f32 0.0, %v4771
        %v4773 = vpop.f32.mrb[0].mxu0
        %4774 = vmatprep.mubr.bf16.mxu0 0
        %4775 = vmatmul.mubr.bf16.gmra.mrb[0].mxu0 %v4650
        %v4776 = vpop.f32.mrb[0].mxu0
        %v4777 = vadd.f32 0.0, %v4776
        %v4778 = vpop.f32.mrb[0].mxu0
        %v4779 = vpop.f32.mrb[0].mxu0
        %v4780 = vadd.f32 0.0, %v4779
        %v4781 = vpop.f32.mrb[0].mxu0
        %4782 = vmatprep.mubr.bf16.mxu0 0
        %4783 = vmatmul.mubr.bf16.gmra.mrb[0].mxu0 %v4653
        %v4784 = vpop.f32.mrb[0].mxu0
        %v4785 = vadd.f32 0.0, %v4784
        %v4786 = vpop.f32.mrb[0].mxu0
        %v4787 = vpop.f32.mrb[0].mxu0
        %v4788 = vadd.f32 0.0, %v4787
        %v4789 = vpop.f32.mrb[0].mxu0
        %4790 = vmatprep.mubr.bf16.mxu0 0
        %4791 = vmatmul.mubr.bf16.gmra.mrb[0].mxu0 %v4656
        %v4792 = vpop.f32.mrb[0].mxu0
        %v4793 = vadd.f32 0.0, %v4792
        %v4794 = vpop.f32.mrb[0].mxu0
        %v4795 = vpop.f32.mrb[0].mxu0
        %v4796 = vadd.f32 0.0, %v4795
        %v4797 = vpop.f32.mrb[0].mxu0
        %4798 = vmatprep.mubr.bf16.mxu0 0
        %4799 = vmatmul.mubr.bf16.gmra.mrb[0].mxu0 %v4659
        %v4800 = vpop.f32.mrb[0].mxu0
        %v4801 = vadd.f32 0.0, %v4800
        %v4802 = vpop.f32.mrb[0].mxu0
        %v4803 = vpop.f32.mrb[0].mxu0
        %v4804 = vadd.f32 0.0, %v4803
        %v4805 = vpop.f32.mrb[0].mxu0
        %4806 = vmatprep.mubr.bf16.mxu0 0
        %4807 = vmatmul.mubr.bf16.gmra.mrb[0].mxu0 %v4662
        %v4808 = vpop.f32.mrb[0].mxu0
        %v4809 = vadd.f32 0.0, %v4808
        %v4810 = vpop.f32.mrb[0].mxu0
        %v4811 = vpop.f32.mrb[0].mxu0
        %v4812 = vadd.f32 0.0, %v4811
        %v4813 = vpop.f32.mrb[0].mxu0
        %4814 = vmatprep.mubr.bf16.mxu0 0
        %4815 = vmatmul.mubr.bf16.gmra.mrb[0].mxu0 %v4665
        %v4816 = vpop.f32.mrb[0].mxu0
        %v4817 = vadd.f32 0.0, %v4816
        %v4818 = vpop.f32.mrb[0].mxu0
        %v4819 = vpop.f32.mrb[0].mxu0
        %v4820 = vadd.f32 0.0, %v4819
        %v4821 = vpop.f32.mrb[0].mxu0
        %4822 = vmatprep.mubr.bf16.mxu0 0
        %4823 = vmatmul.mubr.bf16.gmra.mrb[0].mxu0 %v4668
        %v4824 = vpop.f32.mrb[0].mxu0
        %v4825 = vadd.f32 0.0, %v4824
        %v4826 = vpop.f32.mrb[0].mxu0
        %v4827 = vpop.f32.mrb[0].mxu0
        %v4828 = vadd.f32 0.0, %v4827
        %v4829 = vpop.f32.mrb[0].mxu0
        %4830 = vdwg.mxu0
        %v4831 = vadd.f32 %v4525, %v4705
        %v4832 = vadd.f32 %v4526, %v4708
        %v4833 = vadd.f32 %v4527, %v4713
        %v4834 = vadd.f32 %v4528, %v4716
        %v4835 = vadd.f32 %v4529, %v4721
        %v4836 = vadd.f32 %v4530, %v4724
        %v4837 = vadd.f32 %v4531, %v4729
        %v4838 = vadd.f32 %v4532, %v4732
        %v4839 = vadd.f32 %v4533, %v4737
        %v4840 = vadd.f32 %v4534, %v4740
        %v4841 = vadd.f32 %v4535, %v4745
        %v4842 = vadd.f32 %v4536, %v4748
        %v4843 = vadd.f32 %v4537, %v4753
        %v4844 = vadd.f32 %v4538, %v4756
        %v4845 = vadd.f32 %v4539, %v4761
        %v4846 = vadd.f32 %v4540, %v4764
        %v4847 = vadd.f32 %v4541, %v4769
        %v4848 = vadd.f32 %v4542, %v4772
        %v4849 = vadd.f32 %v4543, %v4777
        %v4850 = vadd.f32 %v4544, %v4780
        %v4851 = vadd.f32 %v4545, %v4785
        %v4852 = vadd.f32 %v4546, %v4788
        %v4853 = vadd.f32 %v4547, %v4793
        %v4854 = vadd.f32 %v4548, %v4796
        %v4855 = vadd.f32 %v4549, %v4801
        %v4856 = vadd.f32 %v4550, %v4804
        %v4857 = vadd.f32 %v4551, %v4809
        %v4858 = vadd.f32 %v4552, %v4812
        %v4859 = vadd.f32 %v4553, %v4817
        %v4860 = vadd.f32 %v4554, %v4820
        %v4861 = vadd.f32 %v4555, %v4825
        %v4862 = vadd.f32 %v4556, %v4828
        %s4863 = scalar_lea.vmem [#allocation2], 64
        %v4864 = vld [vmem:[%s4863 + $0x7] sm:$0xff]
        %v4865 = vld [vmem:[%s4863 + $0xf] sm:$0xff]
        %v4866 = vld [vmem:[%s4863 + $0x27] sm:$0xff]
        %v4867 = vld [vmem:[%s4863 + $0x2f] sm:$0xff]
        %v4868 = vld [vmem:[%s4863 + $0x47] sm:$0xff]
        %v4869 = vld [vmem:[%s4863 + $0x4f] sm:$0xff]
        %v4870 = vld [vmem:[%s4863 + $0x67] sm:$0xff]
        %v4871 = vld [vmem:[%s4863 + $0x6f] sm:$0xff]
        %v4872 = vld [vmem:[%s4863 + $0x87] sm:$0xff]
        %v4873 = vld [vmem:[%s4863 + $0x8f] sm:$0xff]
        %v4874 = vld [vmem:[%s4863 + $0xa7] sm:$0xff]
        %v4875 = vld [vmem:[%s4863 + $0xaf] sm:$0xff]
        %v4876 = vld [vmem:[%s4863 + $0xc7] sm:$0xff]
        %v4877 = vld [vmem:[%s4863 + $0xcf] sm:$0xff]
        %v4878 = vld [vmem:[%s4863 + $0xe7] sm:$0xff]
        %v4879 = vld [vmem:[%s4863 + $0xef] sm:$0xff]
        %v4880 = vld [vmem:[%s4863 + $0x107] sm:$0xff]
        %v4881 = vld [vmem:[%s4863 + $0x10f] sm:$0xff]
        %v4882 = vld [vmem:[%s4863 + $0x127] sm:$0xff]
        %v4883 = vld [vmem:[%s4863 + $0x12f] sm:$0xff]
        %v4884 = vld [vmem:[%s4863 + $0x147] sm:$0xff]
        %v4885 = vld [vmem:[%s4863 + $0x14f] sm:$0xff]
        %v4886 = vld [vmem:[%s4863 + $0x167] sm:$0xff]
        %v4887 = vld [vmem:[%s4863 + $0x16f] sm:$0xff]
        %v4888 = vld [vmem:[%s4863 + $0x187] sm:$0xff]
        %v4889 = vld [vmem:[%s4863 + $0x18f] sm:$0xff]
        %v4890 = vld [vmem:[%s4863 + $0x1a7] sm:$0xff]
        %v4891 = vld [vmem:[%s4863 + $0x1af] sm:$0xff]
        %v4892 = vld [vmem:[%s4863 + $0x1c7] sm:$0xff]
        %v4893 = vld [vmem:[%s4863 + $0x1cf] sm:$0xff]
        %v4894 = vld [vmem:[%s4863 + $0x1e7] sm:$0xff]
        %v4895 = vld [vmem:[%s4863 + $0x1ef] sm:$0xff]
        %v4896 = vpack.c.bf16 %v4865, %v4864
        %v4897 = vpack.c.bf16 %v4867, %v4866
        %v4898 = vpack.c.bf16 %v4869, %v4868
        %v4899 = vpack.c.bf16 %v4871, %v4870
        %v4900 = vpack.c.bf16 %v4873, %v4872
        %v4901 = vpack.c.bf16 %v4875, %v4874
        %v4902 = vpack.c.bf16 %v4877, %v4876
        %v4903 = vpack.c.bf16 %v4879, %v4878
        %v4904 = vpack.c.bf16 %v4881, %v4880
        %v4905 = vpack.c.bf16 %v4883, %v4882
        %v4906 = vpack.c.bf16 %v4885, %v4884
        %v4907 = vpack.c.bf16 %v4887, %v4886
        %v4908 = vpack.c.bf16 %v4889, %v4888
        %v4909 = vpack.c.bf16 %v4891, %v4890
        %v4910 = vpack.c.bf16 %v4893, %v4892
        %v4911 = vpack.c.bf16 %v4895, %v4894
        %s4912 = scalar_lea.vmem %s3, 96
        %v4913 = vld [vmem:[%s4912] sm:$0xf]
        %v4914 = vld [vmem:[%s4912 + $0x4] sm:$0xf]
        %v4915 = vld [vmem:[%s4912 + $0x8] sm:$0xf]
        %v4916 = vld [vmem:[%s4912 + $0xc] sm:$0xf]
        %v4921 = vunpack.c.l.b16 %v4913
        %v4922 = vunpack.c.l.b16 %v4914
        %v4923 = vunpack.c.l.b16 %v4915
        %v4924 = vunpack.c.l.b16 %v4916
        %v4925 = vpack.c.b16 %v4922, %v4921
        %v4926 = vpack.c.b16 %v4924, %v4923
        %v4930 = vsel %vm341, %v4896, 0
        %v4933 = vsel %vm341, %v4897, 0
        %v4936 = vsel %vm341, %v4898, 0
        %v4939 = vsel %vm341, %v4899, 0
        %v4942 = vsel %vm341, %v4900, 0
        %v4945 = vsel %vm341, %v4901, 0
        %v4948 = vsel %vm341, %v4902, 0
        %v4951 = vsel %vm341, %v4903, 0
        %v4954 = vsel %vm341, %v4904, 0
        %v4957 = vsel %vm341, %v4905, 0
        %v4960 = vsel %vm341, %v4906, 0
        %v4963 = vsel %vm341, %v4907, 0
        %v4966 = vsel %vm341, %v4908, 0
        %v4969 = vsel %vm341, %v4909, 0
        %v4972 = vsel %vm341, %v4910, 0
        %v4975 = vsel %vm341, %v4911, 0
        %4977 = vmatprep.subr.bf16.mxu0 0
        %4978 = vmatpush1.bf16.msra.mxu0 %v4925
        %4979 = vmatprep.subr.bf16.mxu0 0
        %4980 = vmatpush1.bf16.msra.mxu0 %v4926
        %4981 = vmatprep.subr.bf16.mxu0 0
        %4982 = vmatpush1.bf16.msra.mxu0 0
        %4983 = vmatprep.subr.bf16.mxu0 0
        %4984 = vmatpush1.bf16.msra.mxu0 0
        %4985 = vmatprep.subr.bf16.mxu0 0
        %4986 = vmatpush1.bf16.msra.mxu0 0
        %4987 = vmatprep.subr.bf16.mxu0 0
        %4988 = vmatpush1.bf16.msra.mxu0 0
        %4989 = vmatprep.subr.bf16.mxu0 0
        %4990 = vmatpush1.bf16.msra.mxu0 0
        %4991 = vmatprep.subr.bf16.mxu0 0
        %4992 = vmatpush1.bf16.msra.mxu0 0
        %4993 = vmatprep.subr.bf16.mxu0 0
        %4994 = vmatpush1.bf16.msra.mxu0 0
        %4995 = vmatprep.subr.bf16.mxu0 0
        %4996 = vmatpush1.bf16.msra.mxu0 0
        %4997 = vmatprep.subr.bf16.mxu0 0
        %4998 = vmatpush1.bf16.msra.mxu0 0
        %4999 = vmatprep.subr.bf16.mxu0 0
        %5000 = vmatpush1.bf16.msra.mxu0 0
        %5001 = vmatprep.subr.bf16.mxu0 0
        %5002 = vmatpush1.bf16.msra.mxu0 0
        %5003 = vmatprep.subr.bf16.mxu0 0
        %5004 = vmatpush1.bf16.msra.mxu0 0
        %5005 = vmatprep.subr.bf16.mxu0 0
        %5006 = vmatpush1.bf16.msra.mxu0 0
        %5007 = vmatprep.subr.bf16.mxu0 0
        %5008 = vmatpush1.bf16.msra.mxu0 0
        %5009 = vmatprep.mubr.bf16.mxu0 0
        %5010 = vmatmul.mubr.bf16.gmra.mrb[0].mxu0 %v4930
        %v5011 = vpop.f32.mrb[0].mxu0
        %v5012 = vadd.f32 0.0, %v5011
        %v5013 = vpop.f32.mrb[0].mxu0
        %v5014 = vpop.f32.mrb[0].mxu0
        %v5015 = vadd.f32 0.0, %v5014
        %v5016 = vpop.f32.mrb[0].mxu0
        %5017 = vmatprep.mubr.bf16.mxu0 0
        %5018 = vmatmul.mubr.bf16.gmra.mrb[0].mxu0 %v4933
        %v5019 = vpop.f32.mrb[0].mxu0
        %v5020 = vadd.f32 0.0, %v5019
        %v5021 = vpop.f32.mrb[0].mxu0
        %v5022 = vpop.f32.mrb[0].mxu0
        %v5023 = vadd.f32 0.0, %v5022
        %v5024 = vpop.f32.mrb[0].mxu0
        %5025 = vmatprep.mubr.bf16.mxu0 0
        %5026 = vmatmul.mubr.bf16.gmra.mrb[0].mxu0 %v4936
        %v5027 = vpop.f32.mrb[0].mxu0
        %v5028 = vadd.f32 0.0, %v5027
        %v5029 = vpop.f32.mrb[0].mxu0
        %v5030 = vpop.f32.mrb[0].mxu0
        %v5031 = vadd.f32 0.0, %v5030
        %v5032 = vpop.f32.mrb[0].mxu0
        %5033 = vmatprep.mubr.bf16.mxu0 0
        %5034 = vmatmul.mubr.bf16.gmra.mrb[0].mxu0 %v4939
        %v5035 = vpop.f32.mrb[0].mxu0
        %v5036 = vadd.f32 0.0, %v5035
        %v5037 = vpop.f32.mrb[0].mxu0
        %v5038 = vpop.f32.mrb[0].mxu0
        %v5039 = vadd.f32 0.0, %v5038
        %v5040 = vpop.f32.mrb[0].mxu0
        %5041 = vmatprep.mubr.bf16.mxu0 0
        %5042 = vmatmul.mubr.bf16.gmra.mrb[0].mxu0 %v4942
        %v5043 = vpop.f32.mrb[0].mxu0
        %v5044 = vadd.f32 0.0, %v5043
        %v5045 = vpop.f32.mrb[0].mxu0
        %v5046 = vpop.f32.mrb[0].mxu0
        %v5047 = vadd.f32 0.0, %v5046
        %v5048 = vpop.f32.mrb[0].mxu0
        %5049 = vmatprep.mubr.bf16.mxu0 0
        %5050 = vmatmul.mubr.bf16.gmra.mrb[0].mxu0 %v4945
        %v5051 = vpop.f32.mrb[0].mxu0
        %v5052 = vadd.f32 0.0, %v5051
        %v5053 = vpop.f32.mrb[0].mxu0
        %v5054 = vpop.f32.mrb[0].mxu0
        %v5055 = vadd.f32 0.0, %v5054
        %v5056 = vpop.f32.mrb[0].mxu0
        %5057 = vmatprep.mubr.bf16.mxu0 0
        %5058 = vmatmul.mubr.bf16.gmra.mrb[0].mxu0 %v4948
        %v5059 = vpop.f32.mrb[0].mxu0
        %v5060 = vadd.f32 0.0, %v5059
        %v5061 = vpop.f32.mrb[0].mxu0
        %v5062 = vpop.f32.mrb[0].mxu0
        %v5063 = vadd.f32 0.0, %v5062
        %v5064 = vpop.f32.mrb[0].mxu0
        %5065 = vmatprep.mubr.bf16.mxu0 0
        %5066 = vmatmul.mubr.bf16.gmra.mrb[0].mxu0 %v4951
        %v5067 = vpop.f32.mrb[0].mxu0
        %v5068 = vadd.f32 0.0, %v5067
        %v5069 = vpop.f32.mrb[0].mxu0
        %v5070 = vpop.f32.mrb[0].mxu0
        %v5071 = vadd.f32 0.0, %v5070
        %v5072 = vpop.f32.mrb[0].mxu0
        %5073 = vmatprep.mubr.bf16.mxu0 0
        %5074 = vmatmul.mubr.bf16.gmra.mrb[0].mxu0 %v4954
        %v5075 = vpop.f32.mrb[0].mxu0
        %v5076 = vadd.f32 0.0, %v5075
        %v5077 = vpop.f32.mrb[0].mxu0
        %v5078 = vpop.f32.mrb[0].mxu0
        %v5079 = vadd.f32 0.0, %v5078
        %v5080 = vpop.f32.mrb[0].mxu0
        %5081 = vmatprep.mubr.bf16.mxu0 0
        %5082 = vmatmul.mubr.bf16.gmra.mrb[0].mxu0 %v4957
        %v5083 = vpop.f32.mrb[0].mxu0
        %v5084 = vadd.f32 0.0, %v5083
        %v5085 = vpop.f32.mrb[0].mxu0
        %v5086 = vpop.f32.mrb[0].mxu0
        %v5087 = vadd.f32 0.0, %v5086
        %v5088 = vpop.f32.mrb[0].mxu0
        %5089 = vmatprep.mubr.bf16.mxu0 0
        %5090 = vmatmul.mubr.bf16.gmra.mrb[0].mxu0 %v4960
        %v5091 = vpop.f32.mrb[0].mxu0
        %v5092 = vadd.f32 0.0, %v5091
        %v5093 = vpop.f32.mrb[0].mxu0
        %v5094 = vpop.f32.mrb[0].mxu0
        %v5095 = vadd.f32 0.0, %v5094
        %v5096 = vpop.f32.mrb[0].mxu0
        %5097 = vmatprep.mubr.bf16.mxu0 0
        %5098 = vmatmul.mubr.bf16.gmra.mrb[0].mxu0 %v4963
        %v5099 = vpop.f32.mrb[0].mxu0
        %v5100 = vadd.f32 0.0, %v5099
        %v5101 = vpop.f32.mrb[0].mxu0
        %v5102 = vpop.f32.mrb[0].mxu0
        %v5103 = vadd.f32 0.0, %v5102
        %v5104 = vpop.f32.mrb[0].mxu0
        %5105 = vmatprep.mubr.bf16.mxu0 0
        %5106 = vmatmul.mubr.bf16.gmra.mrb[0].mxu0 %v4966
        %v5107 = vpop.f32.mrb[0].mxu0
        %v5108 = vadd.f32 0.0, %v5107
        %v5109 = vpop.f32.mrb[0].mxu0
        %v5110 = vpop.f32.mrb[0].mxu0
        %v5111 = vadd.f32 0.0, %v5110
        %v5112 = vpop.f32.mrb[0].mxu0
        %5113 = vmatprep.mubr.bf16.mxu0 0
        %5114 = vmatmul.mubr.bf16.gmra.mrb[0].mxu0 %v4969
        %v5115 = vpop.f32.mrb[0].mxu0
        %v5116 = vadd.f32 0.0, %v5115
        %v5117 = vpop.f32.mrb[0].mxu0
        %v5118 = vpop.f32.mrb[0].mxu0
        %v5119 = vadd.f32 0.0, %v5118
        %v5120 = vpop.f32.mrb[0].mxu0
        %5121 = vmatprep.mubr.bf16.mxu0 0
        %5122 = vmatmul.mubr.bf16.gmra.mrb[0].mxu0 %v4972
        %v5123 = vpop.f32.mrb[0].mxu0
        %v5124 = vadd.f32 0.0, %v5123
        %v5125 = vpop.f32.mrb[0].mxu0
        %v5126 = vpop.f32.mrb[0].mxu0
        %v5127 = vadd.f32 0.0, %v5126
        %v5128 = vpop.f32.mrb[0].mxu0
        %5129 = vmatprep.mubr.bf16.mxu0 0
        %5130 = vmatmul.mubr.bf16.gmra.mrb[0].mxu0 %v4975
        %v5131 = vpop.f32.mrb[0].mxu0
        %v5132 = vadd.f32 0.0, %v5131
        %v5133 = vpop.f32.mrb[0].mxu0
        %v5134 = vpop.f32.mrb[0].mxu0
        %v5135 = vadd.f32 0.0, %v5134
        %v5136 = vpop.f32.mrb[0].mxu0
        %5137 = vdwg.mxu0
        %v5138 = vadd.f32 %v4831, %v5012
        %v5139 = vadd.f32 %v4832, %v5015
        %v5140 = vadd.f32 %v4833, %v5020
        %v5141 = vadd.f32 %v4834, %v5023
        %v5142 = vadd.f32 %v4835, %v5028
        %v5143 = vadd.f32 %v4836, %v5031
        %v5144 = vadd.f32 %v4837, %v5036
        %v5145 = vadd.f32 %v4838, %v5039
        %v5146 = vadd.f32 %v4839, %v5044
        %v5147 = vadd.f32 %v4840, %v5047
        %v5148 = vadd.f32 %v4841, %v5052
        %v5149 = vadd.f32 %v4842, %v5055
        %v5150 = vadd.f32 %v4843, %v5060
        %v5151 = vadd.f32 %v4844, %v5063
        %v5152 = vadd.f32 %v4845, %v5068
        %v5153 = vadd.f32 %v4846, %v5071
        %v5154 = vadd.f32 %v4847, %v5076
        %v5155 = vadd.f32 %v4848, %v5079
        %v5156 = vadd.f32 %v4849, %v5084
        %v5157 = vadd.f32 %v4850, %v5087
        %v5158 = vadd.f32 %v4851, %v5092
        %v5159 = vadd.f32 %v4852, %v5095
        %v5160 = vadd.f32 %v4853, %v5100
        %v5161 = vadd.f32 %v4854, %v5103
        %v5162 = vadd.f32 %v4855, %v5108
        %v5163 = vadd.f32 %v4856, %v5111
        %v5164 = vadd.f32 %v4857, %v5116
        %v5165 = vadd.f32 %v4858, %v5119
        %v5166 = vadd.f32 %v4859, %v5124
        %v5167 = vadd.f32 %v4860, %v5127
        %v5168 = vadd.f32 %v4861, %v5132
        %v5169 = vadd.f32 %v4862, %v5135
        %v5170 = vld [vmem:[%s4863 + $0x8] sm:$0xff]
        %v5171 = vld [vmem:[%s4863 + $0x10] sm:$0xff]
        %v5172 = vld [vmem:[%s4863 + $0x28] sm:$0xff]
        %v5173 = vld [vmem:[%s4863 + $0x30] sm:$0xff]
        %v5174 = vld [vmem:[%s4863 + $0x48] sm:$0xff]
        %v5175 = vld [vmem:[%s4863 + $0x50] sm:$0xff]
        %v5176 = vld [vmem:[%s4863 + $0x68] sm:$0xff]
        %v5177 = vld [vmem:[%s4863 + $0x70] sm:$0xff]
        %v5178 = vld [vmem:[%s4863 + $0x88] sm:$0xff]
        %v5179 = vld [vmem:[%s4863 + $0x90] sm:$0xff]
        %v5180 = vld [vmem:[%s4863 + $0xa8] sm:$0xff]
        %v5181 = vld [vmem:[%s4863 + $0xb0] sm:$0xff]
        %v5182 = vld [vmem:[%s4863 + $0xc8] sm:$0xff]
        %v5183 = vld [vmem:[%s4863 + $0xd0] sm:$0xff]
        %v5184 = vld [vmem:[%s4863 + $0xe8] sm:$0xff]
        %v5185 = vld [vmem:[%s4863 + $0xf0] sm:$0xff]
        %v5186 = vld [vmem:[%s4863 + $0x108] sm:$0xff]
        %v5187 = vld [vmem:[%s4863 + $0x110] sm:$0xff]
        %v5188 = vld [vmem:[%s4863 + $0x128] sm:$0xff]
        %v5189 = vld [vmem:[%s4863 + $0x130] sm:$0xff]
        %v5190 = vld [vmem:[%s4863 + $0x148] sm:$0xff]
        %v5191 = vld [vmem:[%s4863 + $0x150] sm:$0xff]
        %v5192 = vld [vmem:[%s4863 + $0x168] sm:$0xff]
        %v5193 = vld [vmem:[%s4863 + $0x170] sm:$0xff]
        %v5194 = vld [vmem:[%s4863 + $0x188] sm:$0xff]
        %v5195 = vld [vmem:[%s4863 + $0x190] sm:$0xff]
        %v5196 = vld [vmem:[%s4863 + $0x1a8] sm:$0xff]
        %v5197 = vld [vmem:[%s4863 + $0x1b0] sm:$0xff]
        %v5198 = vld [vmem:[%s4863 + $0x1c8] sm:$0xff]
        %v5199 = vld [vmem:[%s4863 + $0x1d0] sm:$0xff]
        %v5200 = vld [vmem:[%s4863 + $0x1e8] sm:$0xff]
        %v5201 = vld [vmem:[%s4863 + $0x1f0] sm:$0xff]
        %v5202 = vpack.c.bf16 %v5171, %v5170
        %v5203 = vpack.c.bf16 %v5173, %v5172
        %v5204 = vpack.c.bf16 %v5175, %v5174
        %v5205 = vpack.c.bf16 %v5177, %v5176
        %v5206 = vpack.c.bf16 %v5179, %v5178
        %v5207 = vpack.c.bf16 %v5181, %v5180
        %v5208 = vpack.c.bf16 %v5183, %v5182
        %v5209 = vpack.c.bf16 %v5185, %v5184
        %v5210 = vpack.c.bf16 %v5187, %v5186
        %v5211 = vpack.c.bf16 %v5189, %v5188
        %v5212 = vpack.c.bf16 %v5191, %v5190
        %v5213 = vpack.c.bf16 %v5193, %v5192
        %v5214 = vpack.c.bf16 %v5195, %v5194
        %v5215 = vpack.c.bf16 %v5197, %v5196
        %v5216 = vpack.c.bf16 %v5199, %v5198
        %v5217 = vpack.c.bf16 %v5201, %v5200
        %s5218 = scalar_lea.vmem %s3, 112
        %v5219 = vld [vmem:[%s5218] sm:$0xf]
        %v5220 = vld [vmem:[%s5218 + $0x4] sm:$0xf]
        %v5221 = vld [vmem:[%s5218 + $0x8] sm:$0xf]
        %v5222 = vld [vmem:[%s5218 + $0xc] sm:$0xf]
        %v5227 = vunpack.c.l.b16 %v5219
        %v5228 = vunpack.c.l.b16 %v5220
        %v5229 = vunpack.c.l.b16 %v5221
        %v5230 = vunpack.c.l.b16 %v5222
        %v5231 = vpack.c.b16 %v5228, %v5227
        %v5232 = vpack.c.b16 %v5230, %v5229
        %v5236 = vsel %vm341, %v5202, 0
        %v5239 = vsel %vm341, %v5203, 0
        %v5242 = vsel %vm341, %v5204, 0
        %v5245 = vsel %vm341, %v5205, 0
        %v5248 = vsel %vm341, %v5206, 0
        %v5251 = vsel %vm341, %v5207, 0
        %v5254 = vsel %vm341, %v5208, 0
        %v5257 = vsel %vm341, %v5209, 0
        %v5260 = vsel %vm341, %v5210, 0
        %v5263 = vsel %vm341, %v5211, 0
        %v5266 = vsel %vm341, %v5212, 0
        %v5269 = vsel %vm341, %v5213, 0
        %v5272 = vsel %vm341, %v5214, 0
        %v5275 = vsel %vm341, %v5215, 0
        %v5278 = vsel %vm341, %v5216, 0
        %v5281 = vsel %vm341, %v5217, 0
        %5283 = vmatprep.subr.bf16.mxu0 0
        %5284 = vmatpush1.bf16.msra.mxu0 %v5231
        %5285 = vmatprep.subr.bf16.mxu0 0
        %5286 = vmatpush1.bf16.msra.mxu0 %v5232
        %5287 = vmatprep.subr.bf16.mxu0 0
        %5288 = vmatpush1.bf16.msra.mxu0 0
        %5289 = vmatprep.subr.bf16.mxu0 0
        %5290 = vmatpush1.bf16.msra.mxu0 0
        %5291 = vmatprep.subr.bf16.mxu0 0
        %5292 = vmatpush1.bf16.msra.mxu0 0
        %5293 = vmatprep.subr.bf16.mxu0 0
        %5294 = vmatpush1.bf16.msra.mxu0 0
        %5295 = vmatprep.subr.bf16.mxu0 0
        %5296 = vmatpush1.bf16.msra.mxu0 0
        %5297 = vmatprep.subr.bf16.mxu0 0
        %5298 = vmatpush1.bf16.msra.mxu0 0
        %5299 = vmatprep.subr.bf16.mxu0 0
        %5300 = vmatpush1.bf16.msra.mxu0 0
        %5301 = vmatprep.subr.bf16.mxu0 0
        %5302 = vmatpush1.bf16.msra.mxu0 0
        %5303 = vmatprep.subr.bf16.mxu0 0
        %5304 = vmatpush1.bf16.msra.mxu0 0
        %5305 = vmatprep.subr.bf16.mxu0 0
        %5306 = vmatpush1.bf16.msra.mxu0 0
        %5307 = vmatprep.subr.bf16.mxu0 0
        %5308 = vmatpush1.bf16.msra.mxu0 0
        %5309 = vmatprep.subr.bf16.mxu0 0
        %5310 = vmatpush1.bf16.msra.mxu0 0
        %5311 = vmatprep.subr.bf16.mxu0 0
        %5312 = vmatpush1.bf16.msra.mxu0 0
        %5313 = vmatprep.subr.bf16.mxu0 0
        %5314 = vmatpush1.bf16.msra.mxu0 0
        %5315 = vmatprep.mubr.bf16.mxu0 0
        %5316 = vmatmul.mubr.bf16.gmra.mrb[0].mxu0 %v5236
        %v5317 = vpop.f32.mrb[0].mxu0
        %v5318 = vadd.f32 0.0, %v5317
        %v5319 = vpop.f32.mrb[0].mxu0
        %v5320 = vpop.f32.mrb[0].mxu0
        %v5321 = vadd.f32 0.0, %v5320
        %v5322 = vpop.f32.mrb[0].mxu0
        %5323 = vmatprep.mubr.bf16.mxu0 0
        %5324 = vmatmul.mubr.bf16.gmra.mrb[0].mxu0 %v5239
        %v5325 = vpop.f32.mrb[0].mxu0
        %v5326 = vadd.f32 0.0, %v5325
        %v5327 = vpop.f32.mrb[0].mxu0
        %v5328 = vpop.f32.mrb[0].mxu0
        %v5329 = vadd.f32 0.0, %v5328
        %v5330 = vpop.f32.mrb[0].mxu0
        %5331 = vmatprep.mubr.bf16.mxu0 0
        %5332 = vmatmul.mubr.bf16.gmra.mrb[0].mxu0 %v5242
        %v5333 = vpop.f32.mrb[0].mxu0
        %v5334 = vadd.f32 0.0, %v5333
        %v5335 = vpop.f32.mrb[0].mxu0
        %v5336 = vpop.f32.mrb[0].mxu0
        %v5337 = vadd.f32 0.0, %v5336
        %v5338 = vpop.f32.mrb[0].mxu0
        %5339 = vmatprep.mubr.bf16.mxu0 0
        %5340 = vmatmul.mubr.bf16.gmra.mrb[0].mxu0 %v5245
        %v5341 = vpop.f32.mrb[0].mxu0
        %v5342 = vadd.f32 0.0, %v5341
        %v5343 = vpop.f32.mrb[0].mxu0
        %v5344 = vpop.f32.mrb[0].mxu0
        %v5345 = vadd.f32 0.0, %v5344
        %v5346 = vpop.f32.mrb[0].mxu0
        %5347 = vmatprep.mubr.bf16.mxu0 0
        %5348 = vmatmul.mubr.bf16.gmra.mrb[0].mxu0 %v5248
        %v5349 = vpop.f32.mrb[0].mxu0
        %v5350 = vadd.f32 0.0, %v5349
        %v5351 = vpop.f32.mrb[0].mxu0
        %v5352 = vpop.f32.mrb[0].mxu0
        %v5353 = vadd.f32 0.0, %v5352
        %v5354 = vpop.f32.mrb[0].mxu0
        %5355 = vmatprep.mubr.bf16.mxu0 0
        %5356 = vmatmul.mubr.bf16.gmra.mrb[0].mxu0 %v5251
        %v5357 = vpop.f32.mrb[0].mxu0
        %v5358 = vadd.f32 0.0, %v5357
        %v5359 = vpop.f32.mrb[0].mxu0
        %v5360 = vpop.f32.mrb[0].mxu0
        %v5361 = vadd.f32 0.0, %v5360
        %v5362 = vpop.f32.mrb[0].mxu0
        %5363 = vmatprep.mubr.bf16.mxu0 0
        %5364 = vmatmul.mubr.bf16.gmra.mrb[0].mxu0 %v5254
        %v5365 = vpop.f32.mrb[0].mxu0
        %v5366 = vadd.f32 0.0, %v5365
        %v5367 = vpop.f32.mrb[0].mxu0
        %v5368 = vpop.f32.mrb[0].mxu0
        %v5369 = vadd.f32 0.0, %v5368
        %v5370 = vpop.f32.mrb[0].mxu0
        %5371 = vmatprep.mubr.bf16.mxu0 0
        %5372 = vmatmul.mubr.bf16.gmra.mrb[0].mxu0 %v5257
        %v5373 = vpop.f32.mrb[0].mxu0
        %v5374 = vadd.f32 0.0, %v5373
        %v5375 = vpop.f32.mrb[0].mxu0
        %v5376 = vpop.f32.mrb[0].mxu0
        %v5377 = vadd.f32 0.0, %v5376
        %v5378 = vpop.f32.mrb[0].mxu0
        %5379 = vmatprep.mubr.bf16.mxu0 0
        %5380 = vmatmul.mubr.bf16.gmra.mrb[0].mxu0 %v5260
        %v5381 = vpop.f32.mrb[0].mxu0
        %v5382 = vadd.f32 0.0, %v5381
        %v5383 = vpop.f32.mrb[0].mxu0
        %v5384 = vpop.f32.mrb[0].mxu0
        %v5385 = vadd.f32 0.0, %v5384
        %v5386 = vpop.f32.mrb[0].mxu0
        %5387 = vmatprep.mubr.bf16.mxu0 0
        %5388 = vmatmul.mubr.bf16.gmra.mrb[0].mxu0 %v5263
        %v5389 = vpop.f32.mrb[0].mxu0
        %v5390 = vadd.f32 0.0, %v5389
        %v5391 = vpop.f32.mrb[0].mxu0
        %v5392 = vpop.f32.mrb[0].mxu0
        %v5393 = vadd.f32 0.0, %v5392
        %v5394 = vpop.f32.mrb[0].mxu0
        %5395 = vmatprep.mubr.bf16.mxu0 0
        %5396 = vmatmul.mubr.bf16.gmra.mrb[0].mxu0 %v5266
        %v5397 = vpop.f32.mrb[0].mxu0
        %v5398 = vadd.f32 0.0, %v5397
        %v5399 = vpop.f32.mrb[0].mxu0
        %v5400 = vpop.f32.mrb[0].mxu0
        %v5401 = vadd.f32 0.0, %v5400
        %v5402 = vpop.f32.mrb[0].mxu0
        %5403 = vmatprep.mubr.bf16.mxu0 0
        %5404 = vmatmul.mubr.bf16.gmra.mrb[0].mxu0 %v5269
        %v5405 = vpop.f32.mrb[0].mxu0
        %v5406 = vadd.f32 0.0, %v5405
        %v5407 = vpop.f32.mrb[0].mxu0
        %v5408 = vpop.f32.mrb[0].mxu0
        %v5409 = vadd.f32 0.0, %v5408
        %v5410 = vpop.f32.mrb[0].mxu0
        %5411 = vmatprep.mubr.bf16.mxu0 0
        %5412 = vmatmul.mubr.bf16.gmra.mrb[0].mxu0 %v5272
        %v5413 = vpop.f32.mrb[0].mxu0
        %v5414 = vadd.f32 0.0, %v5413
        %v5415 = vpop.f32.mrb[0].mxu0
        %v5416 = vpop.f32.mrb[0].mxu0
        %v5417 = vadd.f32 0.0, %v5416
        %v5418 = vpop.f32.mrb[0].mxu0
        %5419 = vmatprep.mubr.bf16.mxu0 0
        %5420 = vmatmul.mubr.bf16.gmra.mrb[0].mxu0 %v5275
        %v5421 = vpop.f32.mrb[0].mxu0
        %v5422 = vadd.f32 0.0, %v5421
        %v5423 = vpop.f32.mrb[0].mxu0
        %v5424 = vpop.f32.mrb[0].mxu0
        %v5425 = vadd.f32 0.0, %v5424
        %v5426 = vpop.f32.mrb[0].mxu0
        %5427 = vmatprep.mubr.bf16.mxu0 0
        %5428 = vmatmul.mubr.bf16.gmra.mrb[0].mxu0 %v5278
        %v5429 = vpop.f32.mrb[0].mxu0
        %v5430 = vadd.f32 0.0, %v5429
        %v5431 = vpop.f32.mrb[0].mxu0
        %v5432 = vpop.f32.mrb[0].mxu0
        %v5433 = vadd.f32 0.0, %v5432
        %v5434 = vpop.f32.mrb[0].mxu0
        %5435 = vmatprep.mubr.bf16.mxu0 0
        %5436 = vmatmul.mubr.bf16.gmra.mrb[0].mxu0 %v5281
        %v5437 = vpop.f32.mrb[0].mxu0
        %v5438 = vadd.f32 0.0, %v5437
        %v5439 = vpop.f32.mrb[0].mxu0
        %v5440 = vpop.f32.mrb[0].mxu0
        %v5441 = vadd.f32 0.0, %v5440
        %v5442 = vpop.f32.mrb[0].mxu0
        %5443 = vdwg.mxu0
        %v5444 = vadd.f32 %v5138, %v5318
        %v5445 = vadd.f32 %v5139, %v5321
        %v5446 = vadd.f32 %v5140, %v5326
        %v5447 = vadd.f32 %v5141, %v5329
        %v5448 = vadd.f32 %v5142, %v5334
        %v5449 = vadd.f32 %v5143, %v5337
        %v5450 = vadd.f32 %v5144, %v5342
        %v5451 = vadd.f32 %v5145, %v5345
        %v5452 = vadd.f32 %v5146, %v5350
        %v5453 = vadd.f32 %v5147, %v5353
        %v5454 = vadd.f32 %v5148, %v5358
        %v5455 = vadd.f32 %v5149, %v5361
        %v5456 = vadd.f32 %v5150, %v5366
        %v5457 = vadd.f32 %v5151, %v5369
        %v5458 = vadd.f32 %v5152, %v5374
        %v5459 = vadd.f32 %v5153, %v5377
        %v5460 = vadd.f32 %v5154, %v5382
        %v5461 = vadd.f32 %v5155, %v5385
        %v5462 = vadd.f32 %v5156, %v5390
        %v5463 = vadd.f32 %v5157, %v5393
        %v5464 = vadd.f32 %v5158, %v5398
        %v5465 = vadd.f32 %v5159, %v5401
        %v5466 = vadd.f32 %v5160, %v5406
        %v5467 = vadd.f32 %v5161, %v5409
        %v5468 = vadd.f32 %v5162, %v5414
        %v5469 = vadd.f32 %v5163, %v5417
        %v5470 = vadd.f32 %v5164, %v5422
        %v5471 = vadd.f32 %v5165, %v5425
        %v5472 = vadd.f32 %v5166, %v5430
        %v5473 = vadd.f32 %v5167, %v5433
        %v5474 = vadd.f32 %v5168, %v5438
        %v5475 = vadd.f32 %v5169, %v5441
        %v5476 = vld [vmem:[%s4863 + $0x9] sm:$0xff]
        %v5477 = vld [vmem:[%s4863 + $0x11] sm:$0xff]
        %v5478 = vld [vmem:[%s4863 + $0x29] sm:$0xff]
        %v5479 = vld [vmem:[%s4863 + $0x31] sm:$0xff]
        %v5480 = vld [vmem:[%s4863 + $0x49] sm:$0xff]
        %v5481 = vld [vmem:[%s4863 + $0x51] sm:$0xff]
        %v5482 = vld [vmem:[%s4863 + $0x69] sm:$0xff]
        %v5483 = vld [vmem:[%s4863 + $0x71] sm:$0xff]
        %v5484 = vld [vmem:[%s4863 + $0x89] sm:$0xff]
        %v5485 = vld [vmem:[%s4863 + $0x91] sm:$0xff]
        %v5486 = vld [vmem:[%s4863 + $0xa9] sm:$0xff]
        %v5487 = vld [vmem:[%s4863 + $0xb1] sm:$0xff]
        %v5488 = vld [vmem:[%s4863 + $0xc9] sm:$0xff]
        %v5489 = vld [vmem:[%s4863 + $0xd1] sm:$0xff]
        %v5490 = vld [vmem:[%s4863 + $0xe9] sm:$0xff]
        %v5491 = vld [vmem:[%s4863 + $0xf1] sm:$0xff]
        %v5492 = vld [vmem:[%s4863 + $0x109] sm:$0xff]
        %v5493 = vld [vmem:[%s4863 + $0x111] sm:$0xff]
        %v5494 = vld [vmem:[%s4863 + $0x129] sm:$0xff]
        %v5495 = vld [vmem:[%s4863 + $0x131] sm:$0xff]
        %v5496 = vld [vmem:[%s4863 + $0x149] sm:$0xff]
        %v5497 = vld [vmem:[%s4863 + $0x151] sm:$0xff]
        %v5498 = vld [vmem:[%s4863 + $0x169] sm:$0xff]
        %v5499 = vld [vmem:[%s4863 + $0x171] sm:$0xff]
        %v5500 = vld [vmem:[%s4863 + $0x189] sm:$0xff]
        %v5501 = vld [vmem:[%s4863 + $0x191] sm:$0xff]
        %v5502 = vld [vmem:[%s4863 + $0x1a9] sm:$0xff]
        %v5503 = vld [vmem:[%s4863 + $0x1b1] sm:$0xff]
        %v5504 = vld [vmem:[%s4863 + $0x1c9] sm:$0xff]
        %v5505 = vld [vmem:[%s4863 + $0x1d1] sm:$0xff]
        %v5506 = vld [vmem:[%s4863 + $0x1e9] sm:$0xff]
        %v5507 = vld [vmem:[%s4863 + $0x1f1] sm:$0xff]
        %v5508 = vpack.c.bf16 %v5477, %v5476
        %v5509 = vpack.c.bf16 %v5479, %v5478
        %v5510 = vpack.c.bf16 %v5481, %v5480
        %v5511 = vpack.c.bf16 %v5483, %v5482
        %v5512 = vpack.c.bf16 %v5485, %v5484
        %v5513 = vpack.c.bf16 %v5487, %v5486
        %v5514 = vpack.c.bf16 %v5489, %v5488
        %v5515 = vpack.c.bf16 %v5491, %v5490
        %v5516 = vpack.c.bf16 %v5493, %v5492
        %v5517 = vpack.c.bf16 %v5495, %v5494
        %v5518 = vpack.c.bf16 %v5497, %v5496
        %v5519 = vpack.c.bf16 %v5499, %v5498
        %v5520 = vpack.c.bf16 %v5501, %v5500
        %v5521 = vpack.c.bf16 %v5503, %v5502
        %v5522 = vpack.c.bf16 %v5505, %v5504
        %v5523 = vpack.c.bf16 %v5507, %v5506
        %s5524 = scalar_lea.vmem %s3, 128
        %v5525 = vld [vmem:[%s5524] sm:$0xf]
        %v5526 = vld [vmem:[%s5524 + $0x4] sm:$0xf]
        %v5527 = vld [vmem:[%s5524 + $0x8] sm:$0xf]
        %v5528 = vld [vmem:[%s5524 + $0xc] sm:$0xf]
        %v5533 = vunpack.c.l.b16 %v5525
        %v5534 = vunpack.c.l.b16 %v5526
        %v5535 = vunpack.c.l.b16 %v5527
        %v5536 = vunpack.c.l.b16 %v5528
        %v5537 = vpack.c.b16 %v5534, %v5533
        %v5538 = vpack.c.b16 %v5536, %v5535
        %v5542 = vsel %vm341, %v5508, 0
        %v5545 = vsel %vm341, %v5509, 0
        %v5548 = vsel %vm341, %v5510, 0
        %v5551 = vsel %vm341, %v5511, 0
        %v5554 = vsel %vm341, %v5512, 0
        %v5557 = vsel %vm341, %v5513, 0
        %v5560 = vsel %vm341, %v5514, 0
        %v5563 = vsel %vm341, %v5515, 0
        %v5566 = vsel %vm341, %v5516, 0
        %v5569 = vsel %vm341, %v5517, 0
        %v5572 = vsel %vm341, %v5518, 0
        %v5575 = vsel %vm341, %v5519, 0
        %v5578 = vsel %vm341, %v5520, 0
        %v5581 = vsel %vm341, %v5521, 0
        %v5584 = vsel %vm341, %v5522, 0
        %v5587 = vsel %vm341, %v5523, 0
        %5589 = vmatprep.subr.bf16.mxu0 0
        %5590 = vmatpush1.bf16.msra.mxu0 %v5537
        %5591 = vmatprep.subr.bf16.mxu0 0
        %5592 = vmatpush1.bf16.msra.mxu0 %v5538
        %5593 = vmatprep.subr.bf16.mxu0 0
        %5594 = vmatpush1.bf16.msra.mxu0 0
        %5595 = vmatprep.subr.bf16.mxu0 0
        %5596 = vmatpush1.bf16.msra.mxu0 0
        %5597 = vmatprep.subr.bf16.mxu0 0
        %5598 = vmatpush1.bf16.msra.mxu0 0
        %5599 = vmatprep.subr.bf16.mxu0 0
        %5600 = vmatpush1.bf16.msra.mxu0 0
        %5601 = vmatprep.subr.bf16.mxu0 0
        %5602 = vmatpush1.bf16.msra.mxu0 0
        %5603 = vmatprep.subr.bf16.mxu0 0
        %5604 = vmatpush1.bf16.msra.mxu0 0
        %5605 = vmatprep.subr.bf16.mxu0 0
        %5606 = vmatpush1.bf16.msra.mxu0 0
        %5607 = vmatprep.subr.bf16.mxu0 0
        %5608 = vmatpush1.bf16.msra.mxu0 0
        %5609 = vmatprep.subr.bf16.mxu0 0
        %5610 = vmatpush1.bf16.msra.mxu0 0
        %5611 = vmatprep.subr.bf16.mxu0 0
        %5612 = vmatpush1.bf16.msra.mxu0 0
        %5613 = vmatprep.subr.bf16.mxu0 0
        %5614 = vmatpush1.bf16.msra.mxu0 0
        %5615 = vmatprep.subr.bf16.mxu0 0
        %5616 = vmatpush1.bf16.msra.mxu0 0
        %5617 = vmatprep.subr.bf16.mxu0 0
        %5618 = vmatpush1.bf16.msra.mxu0 0
        %5619 = vmatprep.subr.bf16.mxu0 0
        %5620 = vmatpush1.bf16.msra.mxu0 0
        %5621 = vmatprep.mubr.bf16.mxu0 0
        %5622 = vmatmul.mubr.bf16.gmra.mrb[0].mxu0 %v5542
        %v5623 = vpop.f32.mrb[0].mxu0
        %v5624 = vadd.f32 0.0, %v5623
        %v5625 = vpop.f32.mrb[0].mxu0
        %v5626 = vpop.f32.mrb[0].mxu0
        %v5627 = vadd.f32 0.0, %v5626
        %v5628 = vpop.f32.mrb[0].mxu0
        %5629 = vmatprep.mubr.bf16.mxu0 0
        %5630 = vmatmul.mubr.bf16.gmra.mrb[0].mxu0 %v5545
        %v5631 = vpop.f32.mrb[0].mxu0
        %v5632 = vadd.f32 0.0, %v5631
        %v5633 = vpop.f32.mrb[0].mxu0
        %v5634 = vpop.f32.mrb[0].mxu0
        %v5635 = vadd.f32 0.0, %v5634
        %v5636 = vpop.f32.mrb[0].mxu0
        %5637 = vmatprep.mubr.bf16.mxu0 0
        %5638 = vmatmul.mubr.bf16.gmra.mrb[0].mxu0 %v5548
        %v5639 = vpop.f32.mrb[0].mxu0
        %v5640 = vadd.f32 0.0, %v5639
        %v5641 = vpop.f32.mrb[0].mxu0
        %v5642 = vpop.f32.mrb[0].mxu0
        %v5643 = vadd.f32 0.0, %v5642
        %v5644 = vpop.f32.mrb[0].mxu0
        %5645 = vmatprep.mubr.bf16.mxu0 0
        %5646 = vmatmul.mubr.bf16.gmra.mrb[0].mxu0 %v5551
        %v5647 = vpop.f32.mrb[0].mxu0
        %v5648 = vadd.f32 0.0, %v5647
        %v5649 = vpop.f32.mrb[0].mxu0
        %v5650 = vpop.f32.mrb[0].mxu0
        %v5651 = vadd.f32 0.0, %v5650
        %v5652 = vpop.f32.mrb[0].mxu0
        %5653 = vmatprep.mubr.bf16.mxu0 0
        %5654 = vmatmul.mubr.bf16.gmra.mrb[0].mxu0 %v5554
        %v5655 = vpop.f32.mrb[0].mxu0
        %v5656 = vadd.f32 0.0, %v5655
        %v5657 = vpop.f32.mrb[0].mxu0
        %v5658 = vpop.f32.mrb[0].mxu0
        %v5659 = vadd.f32 0.0, %v5658
        %v5660 = vpop.f32.mrb[0].mxu0
        %5661 = vmatprep.mubr.bf16.mxu0 0
        %5662 = vmatmul.mubr.bf16.gmra.mrb[0].mxu0 %v5557
        %v5663 = vpop.f32.mrb[0].mxu0
        %v5664 = vadd.f32 0.0, %v5663
        %v5665 = vpop.f32.mrb[0].mxu0
        %v5666 = vpop.f32.mrb[0].mxu0
        %v5667 = vadd.f32 0.0, %v5666
        %v5668 = vpop.f32.mrb[0].mxu0
        %5669 = vmatprep.mubr.bf16.mxu0 0
        %5670 = vmatmul.mubr.bf16.gmra.mrb[0].mxu0 %v5560
        %v5671 = vpop.f32.mrb[0].mxu0
        %v5672 = vadd.f32 0.0, %v5671
        %v5673 = vpop.f32.mrb[0].mxu0
        %v5674 = vpop.f32.mrb[0].mxu0
        %v5675 = vadd.f32 0.0, %v5674
        %v5676 = vpop.f32.mrb[0].mxu0
        %5677 = vmatprep.mubr.bf16.mxu0 0
        %5678 = vmatmul.mubr.bf16.gmra.mrb[0].mxu0 %v5563
        %v5679 = vpop.f32.mrb[0].mxu0
        %v5680 = vadd.f32 0.0, %v5679
        %v5681 = vpop.f32.mrb[0].mxu0
        %v5682 = vpop.f32.mrb[0].mxu0
        %v5683 = vadd.f32 0.0, %v5682
        %v5684 = vpop.f32.mrb[0].mxu0
        %5685 = vmatprep.mubr.bf16.mxu0 0
        %5686 = vmatmul.mubr.bf16.gmra.mrb[0].mxu0 %v5566
        %v5687 = vpop.f32.mrb[0].mxu0
        %v5688 = vadd.f32 0.0, %v5687
        %v5689 = vpop.f32.mrb[0].mxu0
        %v5690 = vpop.f32.mrb[0].mxu0
        %v5691 = vadd.f32 0.0, %v5690
        %v5692 = vpop.f32.mrb[0].mxu0
        %5693 = vmatprep.mubr.bf16.mxu0 0
        %5694 = vmatmul.mubr.bf16.gmra.mrb[0].mxu0 %v5569
        %v5695 = vpop.f32.mrb[0].mxu0
        %v5696 = vadd.f32 0.0, %v5695
        %v5697 = vpop.f32.mrb[0].mxu0
        %v5698 = vpop.f32.mrb[0].mxu0
        %v5699 = vadd.f32 0.0, %v5698
        %v5700 = vpop.f32.mrb[0].mxu0
        %5701 = vmatprep.mubr.bf16.mxu0 0
        %5702 = vmatmul.mubr.bf16.gmra.mrb[0].mxu0 %v5572
        %v5703 = vpop.f32.mrb[0].mxu0
        %v5704 = vadd.f32 0.0, %v5703
        %v5705 = vpop.f32.mrb[0].mxu0
        %v5706 = vpop.f32.mrb[0].mxu0
        %v5707 = vadd.f32 0.0, %v5706
        %v5708 = vpop.f32.mrb[0].mxu0
        %5709 = vmatprep.mubr.bf16.mxu0 0
        %5710 = vmatmul.mubr.bf16.gmra.mrb[0].mxu0 %v5575
        %v5711 = vpop.f32.mrb[0].mxu0
        %v5712 = vadd.f32 0.0, %v5711
        %v5713 = vpop.f32.mrb[0].mxu0
        %v5714 = vpop.f32.mrb[0].mxu0
        %v5715 = vadd.f32 0.0, %v5714
        %v5716 = vpop.f32.mrb[0].mxu0
        %5717 = vmatprep.mubr.bf16.mxu0 0
        %5718 = vmatmul.mubr.bf16.gmra.mrb[0].mxu0 %v5578
        %v5719 = vpop.f32.mrb[0].mxu0
        %v5720 = vadd.f32 0.0, %v5719
        %v5721 = vpop.f32.mrb[0].mxu0
        %v5722 = vpop.f32.mrb[0].mxu0
        %v5723 = vadd.f32 0.0, %v5722
        %v5724 = vpop.f32.mrb[0].mxu0
        %5725 = vmatprep.mubr.bf16.mxu0 0
        %5726 = vmatmul.mubr.bf16.gmra.mrb[0].mxu0 %v5581
        %v5727 = vpop.f32.mrb[0].mxu0
        %v5728 = vadd.f32 0.0, %v5727
        %v5729 = vpop.f32.mrb[0].mxu0
        %v5730 = vpop.f32.mrb[0].mxu0
        %v5731 = vadd.f32 0.0, %v5730
        %v5732 = vpop.f32.mrb[0].mxu0
        %5733 = vmatprep.mubr.bf16.mxu0 0
        %5734 = vmatmul.mubr.bf16.gmra.mrb[0].mxu0 %v5584
        %v5735 = vpop.f32.mrb[0].mxu0
        %v5736 = vadd.f32 0.0, %v5735
        %v5737 = vpop.f32.mrb[0].mxu0
        %v5738 = vpop.f32.mrb[0].mxu0
        %v5739 = vadd.f32 0.0, %v5738
        %v5740 = vpop.f32.mrb[0].mxu0
        %5741 = vmatprep.mubr.bf16.mxu0 0
        %5742 = vmatmul.mubr.bf16.gmra.mrb[0].mxu0 %v5587
        %v5743 = vpop.f32.mrb[0].mxu0
        %v5744 = vadd.f32 0.0, %v5743
        %v5745 = vpop.f32.mrb[0].mxu0
        %v5746 = vpop.f32.mrb[0].mxu0
        %v5747 = vadd.f32 0.0, %v5746
        %v5748 = vpop.f32.mrb[0].mxu0
        %5749 = vdwg.mxu0
        %v5750 = vadd.f32 %v5444, %v5624
        %v5751 = vadd.f32 %v5445, %v5627
        %v5752 = vadd.f32 %v5446, %v5632
        %v5753 = vadd.f32 %v5447, %v5635
        %v5754 = vadd.f32 %v5448, %v5640
        %v5755 = vadd.f32 %v5449, %v5643
        %v5756 = vadd.f32 %v5450, %v5648
        %v5757 = vadd.f32 %v5451, %v5651
        %v5758 = vadd.f32 %v5452, %v5656
        %v5759 = vadd.f32 %v5453, %v5659
        %v5760 = vadd.f32 %v5454, %v5664
        %v5761 = vadd.f32 %v5455, %v5667
        %v5762 = vadd.f32 %v5456, %v5672
        %v5763 = vadd.f32 %v5457, %v5675
        %v5764 = vadd.f32 %v5458, %v5680
        %v5765 = vadd.f32 %v5459, %v5683
        %v5766 = vadd.f32 %v5460, %v5688
        %v5767 = vadd.f32 %v5461, %v5691
        %v5768 = vadd.f32 %v5462, %v5696
        %v5769 = vadd.f32 %v5463, %v5699
        %v5770 = vadd.f32 %v5464, %v5704
        %v5771 = vadd.f32 %v5465, %v5707
        %v5772 = vadd.f32 %v5466, %v5712
        %v5773 = vadd.f32 %v5467, %v5715
        %v5774 = vadd.f32 %v5468, %v5720
        %v5775 = vadd.f32 %v5469, %v5723
        %v5776 = vadd.f32 %v5470, %v5728
        %v5777 = vadd.f32 %v5471, %v5731
        %v5778 = vadd.f32 %v5472, %v5736
        %v5779 = vadd.f32 %v5473, %v5739
        %v5780 = vadd.f32 %v5474, %v5744
        %v5781 = vadd.f32 %v5475, %v5747
        %v5782 = vld [vmem:[%s1078 + $0x1] sm:$0xff]
        %v5783 = vld [vmem:[%s1078 + $0x9] sm:$0xff]
        %v5784 = vld [vmem:[%s1078 + $0x19] sm:$0xff]
        %v5785 = vld [vmem:[%s1078 + $0x21] sm:$0xff]
        %v5786 = vld [vmem:[%s1078 + $0x31] sm:$0xff]
        %v5787 = vld [vmem:[%s1078 + $0x39] sm:$0xff]
        %v5788 = vld [vmem:[%s1078 + $0x49] sm:$0xff]
        %v5789 = vld [vmem:[%s1078 + $0x51] sm:$0xff]
        %v5790 = vld [vmem:[%s1078 + $0x61] sm:$0xff]
        %v5791 = vld [vmem:[%s1078 + $0x69] sm:$0xff]
        %v5792 = vld [vmem:[%s1078 + $0x79] sm:$0xff]
        %v5793 = vld [vmem:[%s1078 + $0x81] sm:$0xff]
        %v5794 = vld [vmem:[%s1078 + $0x91] sm:$0xff]
        %v5795 = vld [vmem:[%s1078 + $0x99] sm:$0xff]
        %v5796 = vld [vmem:[%s1078 + $0xa9] sm:$0xff]
        %v5797 = vld [vmem:[%s1078 + $0xb1] sm:$0xff]
        %v5798 = vld [vmem:[%s1078 + $0xc1] sm:$0xff]
        %v5799 = vld [vmem:[%s1078 + $0xc9] sm:$0xff]
        %v5800 = vld [vmem:[%s1078 + $0xd9] sm:$0xff]
        %v5801 = vld [vmem:[%s1078 + $0xe1] sm:$0xff]
        %v5802 = vld [vmem:[%s1078 + $0xf1] sm:$0xff]
        %v5803 = vld [vmem:[%s1078 + $0xf9] sm:$0xff]
        %v5804 = vld [vmem:[%s1078 + $0x109] sm:$0xff]
        %v5805 = vld [vmem:[%s1078 + $0x111] sm:$0xff]
        %v5806 = vld [vmem:[%s1078 + $0x121] sm:$0xff]
        %v5807 = vld [vmem:[%s1078 + $0x129] sm:$0xff]
        %v5808 = vld [vmem:[%s1078 + $0x139] sm:$0xff]
        %v5809 = vld [vmem:[%s1078 + $0x141] sm:$0xff]
        %v5810 = vld [vmem:[%s1078 + $0x151] sm:$0xff]
        %v5811 = vld [vmem:[%s1078 + $0x159] sm:$0xff]
        %v5812 = vld [vmem:[%s1078 + $0x169] sm:$0xff]
        %v5813 = vld [vmem:[%s1078 + $0x171] sm:$0xff]
        %v5814 = vld [vmem:[%s4] sm:$0x1]
        %v5816 = vlaneseq
        %v5817 = vshrl.u32 %v5816, 7
        %v5818 = vsub.s32 0, %v5817
        %v5819 = vrot.slane %v5814, %v5818
        %v5821 = vadd.f32 %v5750, %v5819
        %v5822 = vadd.f32 %v5751, %v5819
        %v5823 = vadd.f32 %v5752, %v5819
        %v5824 = vadd.f32 %v5753, %v5819
        %v5825 = vadd.f32 %v5754, %v5819
        %v5826 = vadd.f32 %v5755, %v5819
        %v5827 = vadd.f32 %v5756, %v5819
        %v5828 = vadd.f32 %v5757, %v5819
        %v5829 = vadd.f32 %v5758, %v5819
        %v5830 = vadd.f32 %v5759, %v5819
        %v5831 = vadd.f32 %v5760, %v5819
        %v5832 = vadd.f32 %v5761, %v5819
        %v5833 = vadd.f32 %v5762, %v5819
        %v5834 = vadd.f32 %v5763, %v5819
        %v5835 = vadd.f32 %v5764, %v5819
        %v5836 = vadd.f32 %v5765, %v5819
        %v5837 = vadd.f32 %v5766, %v5819
        %v5838 = vadd.f32 %v5767, %v5819
        %v5839 = vadd.f32 %v5768, %v5819
        %v5840 = vadd.f32 %v5769, %v5819
        %v5841 = vadd.f32 %v5770, %v5819
        %v5842 = vadd.f32 %v5771, %v5819
        %v5843 = vadd.f32 %v5772, %v5819
        %v5844 = vadd.f32 %v5773, %v5819
        %v5845 = vadd.f32 %v5774, %v5819
        %v5846 = vadd.f32 %v5775, %v5819
        %v5847 = vadd.f32 %v5776, %v5819
        %v5848 = vadd.f32 %v5777, %v5819
        %v5849 = vadd.f32 %v5778, %v5819
        %v5850 = vadd.f32 %v5779, %v5819
        %v5851 = vadd.f32 %v5780, %v5819
        %v5852 = vadd.f32 %v5781, %v5819
        %v5853 = vadd.f32 %v5821, %v5782
        %v5854 = vadd.f32 %v5822, %v5783
        %v5855 = vadd.f32 %v5823, %v5784
        %v5856 = vadd.f32 %v5824, %v5785
        %v5857 = vadd.f32 %v5825, %v5786
        %v5858 = vadd.f32 %v5826, %v5787
        %v5859 = vadd.f32 %v5827, %v5788
        %v5860 = vadd.f32 %v5828, %v5789
        %v5861 = vadd.f32 %v5829, %v5790
        %v5862 = vadd.f32 %v5830, %v5791
        %v5863 = vadd.f32 %v5831, %v5792
        %v5864 = vadd.f32 %v5832, %v5793
        %v5865 = vadd.f32 %v5833, %v5794
        %v5866 = vadd.f32 %v5834, %v5795
        %v5867 = vadd.f32 %v5835, %v5796
        %v5868 = vadd.f32 %v5836, %v5797
        %v5869 = vadd.f32 %v5837, %v5798
        %v5870 = vadd.f32 %v5838, %v5799
        %v5871 = vadd.f32 %v5839, %v5800
        %v5872 = vadd.f32 %v5840, %v5801
        %v5873 = vadd.f32 %v5841, %v5802
        %v5874 = vadd.f32 %v5842, %v5803
        %v5875 = vadd.f32 %v5843, %v5804
        %v5876 = vadd.f32 %v5844, %v5805
        %v5877 = vadd.f32 %v5845, %v5806
        %v5878 = vadd.f32 %v5846, %v5807
        %v5879 = vadd.f32 %v5847, %v5808
        %v5880 = vadd.f32 %v5848, %v5809
        %v5881 = vadd.f32 %v5849, %v5810
        %v5882 = vadd.f32 %v5850, %v5811
        %v5883 = vadd.f32 %v5851, %v5812
        %v5884 = vadd.f32 %v5852, %v5813
        %v5885 = vmax.f32 %v5853, 0.0
        %v5886 = vmax.f32 %v5854, 0.0
        %v5887 = vmax.f32 %v5855, 0.0
        %v5888 = vmax.f32 %v5856, 0.0
        %v5889 = vmax.f32 %v5857, 0.0
        %v5890 = vmax.f32 %v5858, 0.0
        %v5891 = vmax.f32 %v5859, 0.0
        %v5892 = vmax.f32 %v5860, 0.0
        %v5893 = vmax.f32 %v5861, 0.0
        %v5894 = vmax.f32 %v5862, 0.0
        %v5895 = vmax.f32 %v5863, 0.0
        %v5896 = vmax.f32 %v5864, 0.0
        %v5897 = vmax.f32 %v5865, 0.0
        %v5898 = vmax.f32 %v5866, 0.0
        %v5899 = vmax.f32 %v5867, 0.0
        %v5900 = vmax.f32 %v5868, 0.0
        %v5901 = vmax.f32 %v5869, 0.0
        %v5902 = vmax.f32 %v5870, 0.0
        %v5903 = vmax.f32 %v5871, 0.0
        %v5904 = vmax.f32 %v5872, 0.0
        %v5905 = vmax.f32 %v5873, 0.0
        %v5906 = vmax.f32 %v5874, 0.0
        %v5907 = vmax.f32 %v5875, 0.0
        %v5908 = vmax.f32 %v5876, 0.0
        %v5909 = vmax.f32 %v5877, 0.0
        %v5910 = vmax.f32 %v5878, 0.0
        %v5911 = vmax.f32 %v5879, 0.0
        %v5912 = vmax.f32 %v5880, 0.0
        %v5913 = vmax.f32 %v5881, 0.0
        %v5914 = vmax.f32 %v5882, 0.0
        %v5915 = vmax.f32 %v5883, 0.0
        %v5916 = vmax.f32 %v5884, 0.0
        %5917 = vst.msk [vmem:[%s217] sm:$0xff] %vm341, %v5885
        %5918 = vst.msk [vmem:[%s217 + $0x8] sm:$0xff] %vm341, %v5886
        %5919 = vst.msk [vmem:[%s217 + $0x10] sm:$0xff] %vm341, %v5887
        %5920 = vst.msk [vmem:[%s217 + $0x18] sm:$0xff] %vm341, %v5888
        %5921 = vst.msk [vmem:[%s217 + $0x20] sm:$0xff] %vm341, %v5889
        %5922 = vst.msk [vmem:[%s217 + $0x28] sm:$0xff] %vm341, %v5890
        %5923 = vst.msk [vmem:[%s217 + $0x30] sm:$0xff] %vm341, %v5891
        %5924 = vst.msk [vmem:[%s217 + $0x38] sm:$0xff] %vm341, %v5892
        %5925 = vst.msk [vmem:[%s217 + $0x40] sm:$0xff] %vm341, %v5893
        %5926 = vst.msk [vmem:[%s217 + $0x48] sm:$0xff] %vm341, %v5894
        %5927 = vst.msk [vmem:[%s217 + $0x50] sm:$0xff] %vm341, %v5895
        %5928 = vst.msk [vmem:[%s217 + $0x58] sm:$0xff] %vm341, %v5896
        %5929 = vst.msk [vmem:[%s217 + $0x60] sm:$0xff] %vm341, %v5897
        %5930 = vst.msk [vmem:[%s217 + $0x68] sm:$0xff] %vm341, %v5898
        %5931 = vst.msk [vmem:[%s217 + $0x70] sm:$0xff] %vm341, %v5899
        %5932 = vst.msk [vmem:[%s217 + $0x78] sm:$0xff] %vm341, %v5900
        %5933 = vst.msk [vmem:[%s217 + $0x80] sm:$0xff] %vm341, %v5901
        %5934 = vst.msk [vmem:[%s217 + $0x88] sm:$0xff] %vm341, %v5902
        %5935 = vst.msk [vmem:[%s217 + $0x90] sm:$0xff] %vm341, %v5903
        %5936 = vst.msk [vmem:[%s217 + $0x98] sm:$0xff] %vm341, %v5904
        %5937 = vst.msk [vmem:[%s217 + $0xa0] sm:$0xff] %vm341, %v5905
        %5938 = vst.msk [vmem:[%s217 + $0xa8] sm:$0xff] %vm341, %v5906
        %5939 = vst.msk [vmem:[%s217 + $0xb0] sm:$0xff] %vm341, %v5907
        %5940 = vst.msk [vmem:[%s217 + $0xb8] sm:$0xff] %vm341, %v5908
        %5941 = vst.msk [vmem:[%s217 + $0xc0] sm:$0xff] %vm341, %v5909
        %5942 = vst.msk [vmem:[%s217 + $0xc8] sm:$0xff] %vm341, %v5910
        %5943 = vst.msk [vmem:[%s217 + $0xd0] sm:$0xff] %vm341, %v5911
        %5944 = vst.msk [vmem:[%s217 + $0xd8] sm:$0xff] %vm341, %v5912
        %5945 = vst.msk [vmem:[%s217 + $0xe0] sm:$0xff] %vm341, %v5913
        %5946 = vst.msk [vmem:[%s217 + $0xe8] sm:$0xff] %vm341, %v5914
        %5947 = vst.msk [vmem:[%s217 + $0xf0] sm:$0xff] %vm341, %v5915
        %5948 = vst.msk [vmem:[%s217 + $0xf8] sm:$0xff] %vm341, %v5916
        %s5949 = sand.u32 %s137, 1
        %s5950 = scalar_lea.sflag [#allocation4], %s5949
        %s5951 = sand.u32 %s137, 1
        %s5952 = smul.addr %s5951, 256
        %s5953 = scalar_lea.vmem [#allocation3], %s5952
        // Predicated region
        $region41: #{basic_block_double_shared_forward.1} parent=39 // pred_check
          %p5954 = pneg %p147
        $region42: #{basic_block_double_shared_forward.1} parent=39 // pred_check_branch
          %5956 = sbr.rel (%p5954) target = $region44
        $region43: #{basic_block_double_shared_forward.1} parent=39 // pred_region
          %s5958 = ssub.s32 4096, 4096
          %5959 = vsyncadd %s5950, %s5958
          %s5960 = smul.addr %s19, 32
          %s5961 = smul.addr %s5960, 128
          %s5962 = scalar_lea.hbm %s5, %s5961
          %s5963 = sshll.u32 %s5953, 4
          %s5964 = int_to_ptr.vmem [resolvable:$true] %s5963
          %5969 = dma.vmem_to_hbm [thread:$0]  %s5964, 4096, %s5962, %s5950, 128, 128, 8
        $region44: #{basic_block_double_shared_forward.1} parent=39 // pred_fallthru
          _
      $region40: #{basic_block_double_shared_forward.1} parent=5 // pred_fallthru
        _
      %p5970 = scmp.le.s32.totalorder 2, %s14
      // Predicated region
      $region45: #{basic_block_double_shared_forward.1} parent=5 // pred_check
        %p5971 = pneg %p5970
      $region46: #{basic_block_double_shared_forward.1} parent=5 // pred_check_branch
        %5973 = sbr.rel (%p5971) target = $region48
      $region47: #{basic_block_double_shared_forward.1} parent=5 // pred_region
        %s5974 = ssub.s32 %s14, 2
        // Predicated region
        $region49: #{basic_block_double_shared_forward.1} parent=47 // pred_check
          %p5975 = pneg %p153
        $region50: #{basic_block_double_shared_forward.1} parent=47 // pred_check_branch
          %5977 = sbr.rel (%p5975) target = $region52
        $region51: #{basic_block_double_shared_forward.1} parent=47 // pred_region
          %s5978 = sand.u32 %s138, 1
          %s5979 = scalar_lea.sflag [#allocation4], %s5978
          %s5980 = sand.u32 %s138, 1
          %s5981 = smul.addr %s5980, 256
          %s5982 = scalar_lea.vmem [#allocation3], %s5981
          %5983 = dma.done %s5979, 4096
        $region52: #{basic_block_double_shared_forward.1} parent=47 // pred_fallthru
          _
      $region48: #{basic_block_double_shared_forward.1} parent=5 // pred_fallthru
        _
    $region6: #{basic_block_double_shared_forward.1} parent=1 // loop_footer
      %s18 = sadd.s32 1, %s14
    $region7: #{basic_block_double_shared_forward.1} parent=1 // loop_footer_branch
      %13 = sbr.rel target = $region3
    $region8: #{basic_block_double_shared_forward.1} parent=1 // loop_exit
      _
    %5984 = vsyncpa [#allocation4], 1
    %s5985 = scalar_lea.sflag [#allocation4], 1
    %5986 = vsyncpa %s5985, 1

</llo_original>
